<compile_context>
chip_gen: v7x
topology: tpu7x:2x2x1
jax: 0.10.0
libtpu: 0.0.40
codegen_flags: <defaults>
</compile_context>

<pallas_src>
import functools

import jax
import jax.numpy as jnp
from jax import lax
from jax.experimental import pallas as pl
from jax.experimental.pallas import tpu as pltpu

EPS = 1e-5          # nn.BatchNorm2d default eps
LANE = 128          # channel dims padded to a multiple of the TPU lane width
_ROW_TILE = 512     # rows per grid step for the 1x1 / elementwise passes


# ----------------------------------------------------------------------------
# small helpers
# ----------------------------------------------------------------------------
def _rup(n, m=LANE):
    return ((n + m - 1) // m) * m


def _row_tile(rows):
    """Largest row tile <= _ROW_TILE (multiple of 8) that divides `rows`."""
    if rows <= _ROW_TILE:
        return rows
    for t in range(_ROW_TILE, 7, -8):
        if rows % t == 0:
            return t
    # TODO(synk): mask a ragged row tail instead of one big un-pipelined block.
    return rows


def _vmem_cap_bytes():
    try:
        return int(pltpu.get_tpu_info().vmem_capacity_bytes)
    except Exception:
        return 64 << 20        # conservative default (v7x per-core VMEM)


_VMEM_CAP = _vmem_cap_bytes()


def _compiler_params(num_axes, block_bytes, scratch_bytes=0):
    # Scoped VMEM sized for the double-buffered pipeline of this call's blocks,
    # clamped below the chip's physical VMEM with headroom for internal scratch
    # (56 MiB on v7x, ~120 MiB on v5e/v6e).
    need = 2 * int(block_bytes) + int(scratch_bytes) + (4 << 20)
    cap = max(_VMEM_CAP - (8 << 20), 32 << 20)
    return pltpu.CompilerParams(
        dimension_semantics=("parallel",) * num_axes,
        vmem_limit_bytes=int(min(max(need, 32 << 20), cap)))


def _bn_affine(s, q, count, gamma_p, beta_p):
    """Fold batch statistics (sum, sum-of-squares over `count` rows) + gamma/beta
    into a per-channel affine y*a + b.  Padded channels have gamma=beta=0 -> a=b=0."""
    mean = s / count
    var = jnp.maximum(q / count - mean * mean, 0.0)
    a = gamma_p * lax.rsqrt(var + EPS)
    b = beta_p - mean * a
    return a.reshape(1, -1), b.reshape(1, -1)


# ----------------------------------------------------------------------------
# Kernels
# ----------------------------------------------------------------------------
def _mm_stats_kernel(*refs, affine):
    """y = [relu(x*a + b)] @ w on the MXU; also emits per-channel (sum, sum-sq)
    of y from the f32 accumulator so BN statistics stay exact under row tiling."""
    if affine:
        x_ref, w_ref, a_ref, b_ref, y_ref, st_ref = refs
        x = jnp.maximum(
            x_ref[...].astype(jnp.float32) * a_ref[...] + b_ref[...], 0.0)
    else:
        x_ref, w_ref, y_ref, st_ref = refs
        x = x_ref[...]
    y = jnp.dot(x.astype(w_ref.dtype), w_ref[...],
                preferred_element_type=jnp.float32)
    y_ref[...] = y.astype(y_ref.dtype)
    s = jnp.sum(y, axis=0, keepdims=True)
    q = jnp.sum(y * y, axis=0, keepdims=True)
    st_ref[0] = jnp.concatenate([s, q], axis=0)


def _conv3x3_stats_kernel(y_ref, a_ref, b_ref, w_ref, o_ref, st_ref,
                          xp_ref, col_ref, hb_ref, *, H, W, Ho, Wo, stride):
    """One image per grid step: fused BN-affine+ReLU of the previous conv's raw
    output, written (W de-interleaved by `stride`) into a zero-bordered VMEM
    scratch, gathered into an im2col slab (Ho*Wo, 9*C), then a single K=9*C
    MXU matmul.  No HBM im2col, no per-tap accumulator adds."""
    C = y_ref.shape[-1]
    S = stride
    Hp2, _, Wd, _ = xp_ref.shape
    dt = xp_ref.dtype

    # Previous conv's BN + ReLU fused into this kernel's prologue.
    h = jnp.maximum(y_ref[0].astype(jnp.float32) * a_ref[...] + b_ref[...], 0.0)
    h = h.astype(dt).reshape(H, W, C)

    # Zero only the 1-pixel border (done every step so megacore-sharding the
    # image axis stays correct; the interior is overwritten every step anyway).
    zr = jnp.zeros((1, S, Wd, C), dt)
    xp_ref[pl.ds(0, 1), :, :, :] = zr
    xp_ref[pl.ds(H + 1, 1), :, :, :] = zr
    for r in range(S):
        w0 = (r - 1) % S                              # first image col of parity r
        cnt = (W - 1 - w0) // S + 1 if w0 < W else 0
        half0 = (w0 + 1) // S if w0 < W else 0
        if half0 > 0:                                  # left column border
            xp_ref[:, pl.ds(r, 1), pl.ds(0, half0), :] = jnp.zeros(
                (Hp2, 1, half0, C), dt)
        tail = Wd - (half0 + cnt)
        if tail > 0:                                   # right column border
            xp_ref[:, pl.ds(r, 1), pl.ds(half0 + cnt, tail), :] = jnp.zeros(
                (Hp2, 1, tail, C), dt)

    # Write the interior.  For stride>1 the W axis is de-interleaved by parity
    # (two strided ref reads) so every tap read below is a contiguous slice;
    # only the major H axis keeps a stride.
    if S == 1:
        xp_ref[pl.ds(1, H), pl.ds(0, 1), pl.ds(1, W), :] = h.reshape(H, 1, W, C)
    else:
        hb_ref[...] = h
        for r in range(S):
            w0 = (r - 1) % S
            if w0 >= W:
                continue
            cnt = (W - 1 - w0) // S + 1
            half0 = (w0 + 1) // S
            cols = hb_ref[pl.ds(0, H), pl.ds(w0, cnt, S), :]
            xp_ref[pl.ds(1, H), pl.ds(r, 1), pl.ds(half0, cnt), :] = (
                cols.reshape(H, 1, cnt, C))

    # Gather the nine taps into one (Ho, Wo, 9*C) im2col slab (plain vlds).
    for ky in range(3):
        for kx in range(3):
            t = ky * 3 + kx
            rows = pl.ds(ky, Ho, S) if S > 1 else pl.ds(ky, Ho)
            win = xp_ref[rows, pl.ds(kx % S, 1), pl.ds(kx // S, Wo), :]
            col_ref[:, :, pl.ds(t * C, C)] = win.reshape(Ho, Wo, C)

    # Single big-K matmul: (Ho*Wo, 9C) x (9C, Co) with f32 accumulation.
    acc = jnp.dot(col_ref[...].reshape(Ho * Wo, 9 * C), w_ref[...],
                  preferred_element_type=jnp.float32)
    o_ref[0] = acc.astype(o_ref.dtype)
    s = jnp.sum(acc, axis=0, keepdims=True)
    q = jnp.sum(acc * acc, axis=0, keepdims=True)
    st_ref[0] = jnp.concatenate([s, q], axis=0)


def _finalize_kernel(*refs, affine_shortcut):
    """out = relu(bn3(y3) + shortcut); shortcut is either bn_s(ys) (projection)
    or the identity input.  Pure VPU elementwise pass, lane-dense stores."""
    if affine_shortcut:
        y3_ref, a3_ref, b3_ref, s_ref, as_ref, bs_ref, o_ref = refs
        sc = s_ref[...].astype(jnp.float32) * as_ref[...] + bs_ref[...]
    else:
        y3_ref, a3_ref, b3_ref, s_ref, o_ref = refs
        sc = s_ref[...].astype(jnp.float32)
    main = y3_ref[...].astype(jnp.float32) * a3_ref[...] + b3_ref[...]
    o_ref[...] = jnp.maximum(main + sc, 0.0)


# ----------------------------------------------------------------------------
# pallas_call wrappers
# ----------------------------------------------------------------------------
def conv1x1_stats(x, w, a=None, b=None, *, out_dtype):
    """Row-tiled 1x1 conv (matmul), optionally fusing the previous layer's
    BN+ReLU (relu(x*a+b)) into its prologue.  Returns (y, sum, sumsq)."""
    R, Ci = x.shape
    Co = w.shape[1]
    TR = _row_tile(R)
    T = R // TR
    affine = a is not None

    in_specs = [pl.BlockSpec((TR, Ci), lambda i: (i, 0)),
                # constant-index weight / affine blocks are DMA'd once, not per step
                pl.BlockSpec((Ci, Co), lambda i: (0, 0))]
    args = [x, w]
    if affine:
        in_specs += [pl.BlockSpec((1, Ci), lambda i: (0, 0)),
                     pl.BlockSpec((1, Ci), lambda i: (0, 0))]
        args += [a, b]

    isz = jnp.dtype(x.dtype).itemsize
    wsz = jnp.dtype(w.dtype).itemsize
    osz = jnp.dtype(out_dtype).itemsize
    blocks = TR * Ci * isz + Ci * Co * wsz + TR * Co * osz + 2 * Co * 4

    y, st = pl.pallas_call(
        functools.partial(_mm_stats_kernel, affine=affine),
        grid=(T,),
        in_specs=in_specs,
        out_specs=[pl.BlockSpec((TR, Co), lambda i: (i, 0)),
                   pl.BlockSpec((1, 2, Co), lambda i: (i, 0, 0))],
        out_shape=[jax.ShapeDtypeStruct((R, Co), out_dtype),
                   jax.ShapeDtypeStruct((T, 2, Co), jnp.float32)],
        compiler_params=_compiler_params(1, blocks),
    )(*args)
    return y, st[:, 0, :].sum(axis=0), st[:, 1, :].sum(axis=0)


def conv3x3_stats(y_img, a, b, w2, *, H, W, Ho, Wo, stride, out_dtype):
    """3x3 conv (pad=1, given stride), one image per grid step.
    TODO(synk): grid over output-row bands with a 1-row halo for large images
    (bounds per-step VMEM on v7x and exposes more megacore steps)."""
    N, _, C = y_img.shape
    Co = w2.shape[-1]
    Wd = (W + 2 + stride - 1) // stride
    isz = jnp.dtype(y_img.dtype).itemsize
    wsz = jnp.dtype(w2.dtype).itemsize
    osz = jnp.dtype(out_dtype).itemsize
    blocks = H * W * C * isz + 9 * C * Co * wsz + Ho * Wo * Co * osz + 2 * Co * 4
    scratch = ((H + 2) * stride * Wd * C + Ho * Wo * 9 * C + H * W * C) * wsz

    y2, st = pl.pallas_call(
        functools.partial(_conv3x3_stats_kernel,
                          H=H, W=W, Ho=Ho, Wo=Wo, stride=stride),
        grid=(N,),
        in_specs=[pl.BlockSpec((1, H * W, C), lambda n: (n, 0, 0)),
                  pl.BlockSpec((1, C), lambda n: (0, 0)),
                  pl.BlockSpec((1, C), lambda n: (0, 0)),
                  pl.BlockSpec((9 * C, Co), lambda n: (0, 0))],
        out_specs=[pl.BlockSpec((1, Ho * Wo, Co), lambda n: (n, 0, 0)),
                   pl.BlockSpec((1, 2, Co), lambda n: (n, 0, 0))],
        out_shape=[jax.ShapeDtypeStruct((N, Ho * Wo, Co), out_dtype),
                   jax.ShapeDtypeStruct((N, 2, Co), jnp.float32)],
        scratch_shapes=[pltpu.VMEM((H + 2, stride, Wd, C), w2.dtype),
                        pltpu.VMEM((Ho, Wo, 9 * C), w2.dtype),
                        pltpu.VMEM((H, W, C), w2.dtype)],
        compiler_params=_compiler_params(1, blocks, scratch),
    )(y_img, a, b, w2)
    return y2, st[:, 0, :].sum(axis=0), st[:, 1, :].sum(axis=0)


def finalize(y3, a3, b3, shortcut, a_s=None, b_s=None):
    """out = relu(bn3(y3) + shortcut) over row tiles (f32 output)."""
    R, C = y3.shape
    TR = _row_tile(R)
    T = R // TR
    affine_shortcut = a_s is not None

    in_specs = [pl.BlockSpec((TR, C), lambda i: (i, 0)),
                pl.BlockSpec((1, C), lambda i: (0, 0)),
                pl.BlockSpec((1, C), lambda i: (0, 0)),
                pl.BlockSpec((TR, C), lambda i: (i, 0))]
    args = [y3, a3, b3, shortcut]
    if affine_shortcut:
        in_specs += [pl.BlockSpec((1, C), lambda i: (0, 0)),
                     pl.BlockSpec((1, C), lambda i: (0, 0))]
        args += [a_s, b_s]

    blocks = TR * C * (jnp.dtype(y3.dtype).itemsize
                       + jnp.dtype(shortcut.dtype).itemsize + 4)
    # TODO(synk): emit bf16 / keep NHWC when the downstream block is channels-last.
    return pl.pallas_call(
        functools.partial(_finalize_kernel, affine_shortcut=affine_shortcut),
        grid=(T,),
        in_specs=in_specs,
        out_specs=pl.BlockSpec((TR, C), lambda i: (i, 0)),
        out_shape=jax.ShapeDtypeStruct((R, C), jnp.float32),
        compiler_params=_compiler_params(1, blocks),
    )(*args)


# ----------------------------------------------------------------------------
# Full Bottleneck forward (jitted: the tiny stats reductions / BN affines /
# pads / transposes between the pallas_calls fuse instead of dispatching
# one-by-one -- this is the latency-bound-small-R fix from the review).
# ----------------------------------------------------------------------------
@functools.partial(jax.jit, static_argnames=("stride", "cin", "e"))
def bottleneck_forward(x_nchw, kp, *, stride, cin, e):
    cd = kp["w1"].dtype
    Cin_p, Pp = kp["w1"].shape
    Ep = kp["w3"].shape[1]
    N, Cx, H, W = x_nchw.shape
    assert Cx == cin

    Ho = (H + 2 - 3) // stride + 1
    Wo = (W + 2 - 3) // stride + 1
    R0, R1 = N * H * W, N * Ho * Wo

    # NCHW -> channels-last 2-D slab, channel-padded to a lane multiple, in the
    # compute dtype.  Built once and reused by conv1 and the shortcut branch.
    x_nhwc = jnp.transpose(x_nchw, (0, 2, 3, 1))
    x2d = jnp.pad(x_nhwc.reshape(R0, cin),
                  ((0, 0), (0, Cin_p - cin))).astype(cd)

    # conv1 (1x1) -> raw y1 + BN1 statistics
    y1, s1, q1 = conv1x1_stats(x2d, kp["w1"], out_dtype=cd)
    a1, b1 = _bn_affine(s1, q1, R0, kp["g1"], kp["b1"])

    # conv2 (3x3, stride, pad=1); BN1+ReLU fused into its prologue
    y2, s2, q2 = conv3x3_stats(y1.reshape(N, H * W, Pp), a1, b1, kp["w2"],
                               H=H, W=W, Ho=Ho, Wo=Wo, stride=stride,
                               out_dtype=cd)
    a2, b2 = _bn_affine(s2, q2, R1, kp["g2"], kp["b2"])
    y2 = y2.reshape(R1, Pp)

    # conv3 (1x1); BN2+ReLU fused into its prologue
    y3, s3, q3 = conv1x1_stats(y2, kp["w3"], a=a2, b=b2, out_dtype=cd)
    a3, b3 = _bn_affine(s3, q3, R1, kp["g3"], kp["b3"])

    # shortcut branch
    if stride != 1 or cin != e:
        # strided spatial subsample of the already padded/cast slab
        # (single fused XLA slice; the separate pad + cast passes are gone).
        xs = x2d.reshape(N, H, W, Cin_p)[:, ::stride, ::stride, :]
        xs = xs[:, :Ho, :Wo, :].reshape(R1, Cin_p)
        ys, ss, qs = conv1x1_stats(xs, kp["ws"], out_dtype=cd)
        a_s, b_s = _bn_affine(ss, qs, R1, kp["gs"], kp["bs"])
        out2d = finalize(y3, a3, b3, ys, a_s, b_s)
    else:
        out2d = finalize(y3, a3, b3, x2d)   # identity shortcut: reuse x2d

    out = out2d.reshape(N, Ho, Wo, Ep)[..., :e]
    # TODO(synk): keep NHWC if the downstream block is also channels-last.
    return jnp.transpose(out, (0, 3, 1, 2))


# ----------------------------------------------------------------------------
# Pure-JAX reference (mirrors the PyTorch forward, train-mode BN)
# ----------------------------------------------------------------------------
def ref_forward(x, pt, stride):
    def conv(inp, w, s=1, pad=0):
        return lax.conv_general_dilated(
            inp, w, (s, s), [(pad, pad), (pad, pad)],
            dimension_numbers=("NCHW", "OIHW", "NCHW"),
            precision=lax.Precision.HIGHEST)

    def bn(y, g, b):
        m = jnp.mean(y, axis=(0, 2, 3), keepdims=True)
        v = jnp.mean((y - m) ** 2, axis=(0, 2, 3), keepdims=True)
        return (y - m) * lax.rsqrt(v + EPS) * g.reshape(1, -1, 1, 1) + b.reshape(1, -1, 1, 1)

    E = pt["w3"].shape[0]
    out = jax.nn.relu(bn(conv(x, pt["w1"]), pt["g1"], pt["b1"]))
    out = jax.nn.relu(bn(conv(out, pt["w2"], stride, 1), pt["g2"], pt["b2"]))
    out = bn(conv(out, pt["w3"]), pt["g3"], pt["b3"])
    if stride != 1 or x.shape[1] != E:
        sc = bn(conv(x, pt["ws"], stride, 0), pt["gs"], pt["bs"])
    else:
        sc = x
    return jax.nn.relu(out + sc)


# ----------------------------------------------------------------------------
# Parameter construction
# ----------------------------------------------------------------------------
def make_params(key, in_planes, planes, expansion=4):
    ks = jax.random.split(key, 12)

    def conv_w(k, cout, cin, kh, kw):
        fan_in = cin * kh * kw
        return jax.random.normal(k, (cout, cin, kh, kw), jnp.float32) * (2.0 / fan_in) ** 0.5

    def bn_params(kg, kb, c):
        g = 1.0 + 0.1 * jax.random.normal(kg, (c,), jnp.float32)
        b = 0.1 * jax.random.normal(kb, (c,), jnp.float32)
        return g, b

    E = expansion * planes
    pt = {"w1": conv_w(ks[0], planes, in_planes, 1, 1),
          "w2": conv_w(ks[1], planes, planes, 3, 3),
          "w3": conv_w(ks[2], E, planes, 1, 1),
          "ws": conv_w(ks[3], E, in_planes, 1, 1)}
    pt["g1"], pt["b1"] = bn_params(ks[4], ks[5], planes)
    pt["g2"], pt["b2"] = bn_params(ks[6], ks[7], planes)
    pt["g3"], pt["b3"] = bn_params(ks[8], ks[9], E)
    pt["gs"], pt["bs"] = bn_params(ks[10], ks[11], E)
    return pt


def prep_kernel_params(pt, compute_dtype=jnp.bfloat16):
    """PyTorch layout -> kernel layout.  Channel dims padded to a lane multiple
    (gamma/beta pad with zeros so padded channels stay exactly zero end-to-end)
    and weights pre-cast to the compute dtype once (no per-forward cast passes)."""
    P, Cin = pt["w1"].shape[0], pt["w1"].shape[1]
    E = pt["w3"].shape[0]
    cin_p, p_p, e_p = _rup(Cin), _rup(P), _rup(E)
    cd = compute_dtype

    def pad2(w, r, c):
        return jnp.pad(w, ((0, r - w.shape[0]), (0, c - w.shape[1]))).astype(cd)

    def pad1(v, c):
        return jnp.pad(v, (0, c - v.shape[0]))          # BN params stay f32

    # 3x3 weight: OIHW -> (tap, Cin, Cout), padded, flattened tap-major to
    # (9*Cin_p, Cout_p) so it matches the in-kernel im2col column order and
    # feeds a single K=9*Cin_p matmul.
    w2 = jnp.transpose(pt["w2"], (2, 3, 1, 0)).reshape(9, P, P)
    w2 = jnp.pad(w2, ((0, 0), (0, p_p - P), (0, p_p - P))).astype(cd)

    kp = {
        "w1": pad2(pt["w1"][:, :, 0, 0].T, cin_p, p_p),
        "w2": w2.reshape(9 * p_p, p_p),
        "w3": pad2(pt["w3"][:, :, 0, 0].T, p_p, e_p),
        "ws": pad2(pt["ws"][:, :, 0, 0].T, cin_p, e_p),
        "g1": pad1(pt["g1"], p_p), "b1": pad1(pt["b1"], p_p),
        "g2": pad1(pt["g2"], p_p), "b2": pad1(pt["b2"], p_p),
        "g3": pad1(pt["g3"], e_p), "b3": pad1(pt["b3"], e_p),
        "gs": pad1(pt["gs"], e_p), "bs": pad1(pt["bs"], e_p),
    }
    meta = {"cin": Cin, "p": P, "e": E,
            "cin_p": cin_p, "p_p": p_p, "e_p": e_p}
    return kp, meta


# ----------------------------------------------------------------------------
if __name__ == "__main__":
    root = jax.random.PRNGKey(0)
    configs = [
        # (N, in_planes, H, W, planes, stride)
        (2, 4, 16, 16, 4, 2),     # projection shortcut (1x1 stride-2 conv + BN)
        (2, 16, 16, 16, 4, 1),    # identity shortcut
    ]
    for idx, (N, Cin, H, W, planes, stride) in enumerate(configs):
        kx, kw = jax.random.split(jax.random.fold_in(root, idx))
        x = jax.random.normal(kx, (N, Cin, H, W), jnp.float32)
        pt = make_params(kw, Cin, planes)
        ref = ref_forward(x, pt, stride)
        E = 4 * planes

        # f32 path: tight correctness check of the algorithm against the reference.
        kp32, _ = prep_kernel_params(pt, jnp.float32)
        out32 = jax.block_until_ready(
            bottleneck_forward(x, kp32, stride=stride, cin=Cin, e=E))
        assert out32.shape == ref.shape, (out32.shape, ref.shape)
        err32 = float(jnp.max(jnp.abs(out32 - ref)))
        assert err32 < 2e-3, f"f32 path max abs err {err32}"

        # bf16 fast path (MXU-friendly staging; accumulation stays f32).
        kp16, _ = prep_kernel_params(pt, jnp.bfloat16)
        out16 = jax.block_until_ready(
            bottleneck_forward(x, kp16, stride=stride, cin=Cin, e=E))
        err16 = float(jnp.max(jnp.abs(out16 - ref)))
        mean16 = float(jnp.mean(jnp.abs(out16 - ref)))
        assert err16 < 1e-1, f"bf16 path max abs err {err16}"
        assert mean16 < 2e-2, f"bf16 path mean abs err {mean16}"

    print("KERNEL_OK")
</pallas_src>

<mosaic_0001>
module attributes {stable_mosaic.version = 11 : i64} {
  func.func @_mm_stats_kernel(%arg0: i32, %arg1: memref<128x128xf32, #tpu.memory_space<vmem>>, %arg2: memref<128x128xf32, #tpu.memory_space<vmem>>, %arg3: memref<128x128xf32, #tpu.memory_space<vmem>>, %arg4: memref<1x2x128xf32, #tpu.memory_space<vmem>>) attributes {dimension_semantics = [#tpu.dimension_semantics<parallel>], iteration_bounds = array<i64: 1>, scalar_prefetch = 0 : i64, scratch_operands = 0 : i64, tpu.core_type = #tpu.core_type<tc>, window_params = [{transform_indices = @transform_0, window_bounds = array<i64: 128, 128>}, {pipeline_mode = #tpu.pipeline_mode<synchronous>, transform_indices = @transform_1, window_bounds = array<i64: 128, 128>}, {transform_indices = @transform_2, window_bounds = array<i64: 128, 128>}, {transform_indices = @transform_3, window_bounds = array<i64: 1, 2, 128>}]} {
    %c0 = arith.constant 0 : index
    %c0_0 = arith.constant 0 : index
    %0 = vector.load %arg1[%c0, %c0_0] : memref<128x128xf32, #tpu.memory_space<vmem>>, vector<128x128xf32>
    %c0_1 = arith.constant 0 : index
    %c0_2 = arith.constant 0 : index
    %1 = vector.load %arg2[%c0_1, %c0_2] : memref<128x128xf32, #tpu.memory_space<vmem>>, vector<128x128xf32>
    %cst = arith.constant dense<0.000000e+00> : vector<128x128xf32>
    %2 = tpu.matmul %0, %1, %cst {dimension_numbers = #tpu.dot_dimension_numbers<[1], [0], [0], [1], [0, 0, 1, 1], [], []>} : vector<128x128xf32>, vector<128x128xf32>, vector<128x128xf32> -> vector<128x128xf32>
    %c0_3 = arith.constant 0 : index
    %c0_4 = arith.constant 0 : index
    %3 = vector.load %arg3[%c0_3, %c0_4] : memref<128x128xf32, #tpu.memory_space<vmem>>, vector<128x128xf32>
    tpu.vector_store %arg3[%c0_3, %c0_4], %2 {strides = array<i32>} : memref<128x128xf32, #tpu.memory_space<vmem>>, vector<128x128xf32>,
    %cst_5 = arith.constant dense<0.000000e+00> : vector<128xf32>
    %4 = vector.multi_reduction <add>, %2, %cst_5 [0] : vector<128x128xf32> to vector<128xf32>
    %5 = vector.shape_cast %4 : vector<128xf32> to vector<1x128xf32>
    %6 = arith.mulf %2, %2 : vector<128x128xf32>
    %cst_6 = arith.constant dense<0.000000e+00> : vector<128xf32>
    %7 = vector.multi_reduction <add>, %6, %cst_6 [0] : vector<128x128xf32> to vector<128xf32>
    %8 = vector.shape_cast %7 : vector<128xf32> to vector<1x128xf32>
    %9 = tpu.concatenate %5, %8 in 0 : vector<1x128xf32>, vector<1x128xf32> -> vector<2x128xf32>
    %c0_7 = arith.constant 0 : index
    %c0_8 = arith.constant 0 : index
    %c0_9 = arith.constant 0 : index
    %10 = vector.load %arg4[%c0_7, %c0_8, %c0_9] : memref<1x2x128xf32, #tpu.memory_space<vmem>>, vector<1x2x128xf32>
    %11 = vector.shape_cast %10 : vector<1x2x128xf32> to vector<2x128xf32>
    %12 = vector.shape_cast %9 : vector<2x128xf32> to vector<1x2x128xf32>
    tpu.vector_store %arg4[%c0_7, %c0_8, %c0_9], %12 {strides = array<i32>} : memref<1x2x128xf32, #tpu.memory_space<vmem>>, vector<1x2x128xf32>,
    return
  }
  func.func @transform_0(%arg0: i32) -> (i32, i32) {
    %c0_i32 = arith.constant 0 : i32
    %c0_i32_0 = arith.constant 0 : i32
    return %arg0, %c0_i32 : i32, i32
  }
  func.func @transform_1(%arg0: i32) -> (i32, i32) {
    %c0_i32 = arith.constant 0 : i32
    %c0_i32_0 = arith.constant 0 : i32
    %c0_i32_1 = arith.constant 0 : i32
    return %c0_i32, %c0_i32_0 : i32, i32
  }
  func.func @transform_2(%arg0: i32) -> (i32, i32) {
    %c0_i32 = arith.constant 0 : i32
    %c0_i32_0 = arith.constant 0 : i32
    return %arg0, %c0_i32 : i32, i32
  }
  func.func @transform_3(%arg0: i32) -> (i32, i32, i32) {
    %c0_i32 = arith.constant 0 : i32
    %c0_i32_0 = arith.constant 0 : i32
    %c0_i32_1 = arith.constant 0 : i32
    return %arg0, %c0_i32, %c0_i32_0 : i32, i32, i32
  }
}

module attributes {stable_mosaic.version = 11 : i64} {
  func.func @_mm_stats_kernel(%arg0: i32, %arg1: memref<512x128xf32, #tpu.memory_space<vmem>>, %arg2: memref<128x128xf32, #tpu.memory_space<vmem>>, %arg3: memref<512x128xf32, #tpu.memory_space<vmem>>, %arg4: memref<1x2x128xf32, #tpu.memory_space<vmem>>) attributes {dimension_semantics = [#tpu.dimension_semantics<parallel>], iteration_bounds = array<i64: 1>, scalar_prefetch = 0 : i64, scratch_operands = 0 : i64, tpu.core_type = #tpu.core_type<tc>, window_params = [{transform_indices = @transform_0, window_bounds = array<i64: 512, 128>}, {pipeline_mode = #tpu.pipeline_mode<synchronous>, transform_indices = @transform_1, window_bounds = array<i64: 128, 128>}, {transform_indices = @transform_2, window_bounds = array<i64: 512, 128>}, {transform_indices = @transform_3, window_bounds = array<i64: 1, 2, 128>}]} {
    %c0 = arith.constant 0 : index
    %c0_0 = arith.constant 0 : index
    %0 = vector.load %arg1[%c0, %c0_0] : memref<512x128xf32, #tpu.memory_space<vmem>>, vector<512x128xf32>
    %c0_1 = arith.constant 0 : index
    %c0_2 = arith.constant 0 : index
    %1 = vector.load %arg2[%c0_1, %c0_2] : memref<128x128xf32, #tpu.memory_space<vmem>>, vector<128x128xf32>
    %cst = arith.constant dense<0.000000e+00> : vector<512x128xf32>
    %2 = tpu.matmul %0, %1, %cst {dimension_numbers = #tpu.dot_dimension_numbers<[1], [0], [0], [1], [0, 0, 1, 1], [], []>} : vector<512x128xf32>, vector<128x128xf32>, vector<512x128xf32> -> vector<512x128xf32>
    %c0_3 = arith.constant 0 : index
    %c0_4 = arith.constant 0 : index
    %3 = vector.load %arg3[%c0_3, %c0_4] : memref<512x128xf32, #tpu.memory_space<vmem>>, vector<512x128xf32>
    tpu.vector_store %arg3[%c0_3, %c0_4], %2 {strides = array<i32>} : memref<512x128xf32, #tpu.memory_space<vmem>>, vector<512x128xf32>,
    %cst_5 = arith.constant dense<0.000000e+00> : vector<128xf32>
    %4 = vector.multi_reduction <add>, %2, %cst_5 [0] : vector<512x128xf32> to vector<128xf32>
    %5 = vector.shape_cast %4 : vector<128xf32> to vector<1x128xf32>
    %6 = arith.mulf %2, %2 : vector<512x128xf32>
    %cst_6 = arith.constant dense<0.000000e+00> : vector<128xf32>
    %7 = vector.multi_reduction <add>, %6, %cst_6 [0] : vector<512x128xf32> to vector<128xf32>
    %8 = vector.shape_cast %7 : vector<128xf32> to vector<1x128xf32>
    %9 = tpu.concatenate %5, %8 in 0 : vector<1x128xf32>, vector<1x128xf32> -> vector<2x128xf32>
    %c0_7 = arith.constant 0 : index
    %c0_8 = arith.constant 0 : index
    %c0_9 = arith.constant 0 : index
    %10 = vector.load %arg4[%c0_7, %c0_8, %c0_9] : memref<1x2x128xf32, #tpu.memory_space<vmem>>, vector<1x2x128xf32>
    %11 = vector.shape_cast %10 : vector<1x2x128xf32> to vector<2x128xf32>
    %12 = vector.shape_cast %9 : vector<2x128xf32> to vector<1x2x128xf32>
    tpu.vector_store %arg4[%c0_7, %c0_8, %c0_9], %12 {strides = array<i32>} : memref<1x2x128xf32, #tpu.memory_space<vmem>>, vector<1x2x128xf32>,
    return
  }
  func.func @transform_0(%arg0: i32) -> (i32, i32) {
    %c0_i32 = arith.constant 0 : i32
    %c0_i32_0 = arith.constant 0 : i32
    return %arg0, %c0_i32 : i32, i32
  }
  func.func @transform_1(%arg0: i32) -> (i32, i32) {
    %c0_i32 = arith.constant 0 : i32
    %c0_i32_0 = arith.constant 0 : i32
    %c0_i32_1 = arith.constant 0 : i32
    return %c0_i32, %c0_i32_0 : i32, i32
  }
  func.func @transform_2(%arg0: i32) -> (i32, i32) {
    %c0_i32 = arith.constant 0 : i32
    %c0_i32_0 = arith.constant 0 : i32
    return %arg0, %c0_i32 : i32, i32
  }
  func.func @transform_3(%arg0: i32) -> (i32, i32, i32) {
    %c0_i32 = arith.constant 0 : i32
    %c0_i32_0 = arith.constant 0 : i32
    %c0_i32_1 = arith.constant 0 : i32
    return %arg0, %c0_i32, %c0_i32_0 : i32, i32, i32
  }
}

module attributes {stable_mosaic.version = 11 : i64} {
  func.func @_conv3x3_stats_kernel(%arg0: i32, %arg1: memref<1x256x128xf32, #tpu.memory_space<vmem>>, %arg2: memref<1x128xf32, #tpu.memory_space<vmem>>, %arg3: memref<1x128xf32, #tpu.memory_space<vmem>>, %arg4: memref<1152x128xf32, #tpu.memory_space<vmem>>, %arg5: memref<1x64x128xf32, #tpu.memory_space<vmem>>, %arg6: memref<1x2x128xf32, #tpu.memory_space<vmem>>, %arg7: memref<18x2x9x128xf32, #tpu.memory_space<vmem>>, %arg8: memref<8x8x1152xf32, #tpu.memory_space<vmem>>, %arg9: memref<16x16x128xf32, #tpu.memory_space<vmem>>) attributes {dimension_semantics = [#tpu.dimension_semantics<parallel>], iteration_bounds = array<i64: 2>, scalar_prefetch = 0 : i64, scratch_operands = 3 : i64, tpu.core_type = #tpu.core_type<tc>, window_params = [{transform_indices = @transform_0, window_bounds = array<i64: 1, 256, 128>}, {pipeline_mode = #tpu.pipeline_mode<synchronous>, transform_indices = @transform_1, window_bounds = array<i64: 1, 128>}, {pipeline_mode = #tpu.pipeline_mode<synchronous>, transform_indices = @transform_2, window_bounds = array<i64: 1, 128>}, {pipeline_mode = #tpu.pipeline_mode<synchronous>, transform_indices = @transform_3, window_bounds = array<i64: 1152, 128>}, {transform_indices = @transform_4, window_bounds = array<i64: 1, 64, 128>}, {transform_indices = @transform_5, window_bounds = array<i64: 1, 2, 128>}]} {
    %c0 = arith.constant 0 : index
    %c0_0 = arith.constant 0 : index
    %c0_1 = arith.constant 0 : index
    %0 = vector.load %arg1[%c0, %c0_0, %c0_1] : memref<1x256x128xf32, #tpu.memory_space<vmem>>, vector<1x256x128xf32>
    %1 = vector.shape_cast %0 : vector<1x256x128xf32> to vector<256x128xf32>
    %c0_2 = arith.constant 0 : index
    %c0_3 = arith.constant 0 : index
    %2 = vector.load %arg2[%c0_2, %c0_3] : memref<1x128xf32, #tpu.memory_space<vmem>>, vector<1x128xf32>
    %3 = vector.broadcast %2 : vector<1x128xf32> to vector<256x128xf32>
    %4 = arith.mulf %1, %3 : vector<256x128xf32>
    %c0_4 = arith.constant 0 : index
    %c0_5 = arith.constant 0 : index
    %5 = vector.load %arg3[%c0_4, %c0_5] : memref<1x128xf32, #tpu.memory_space<vmem>>, vector<1x128xf32>
    %6 = vector.broadcast %5 : vector<1x128xf32> to vector<256x128xf32>
    %7 = arith.addf %4, %6 : vector<256x128xf32>
    %cst = arith.constant 0.000000e+00 : f32
    %8 = vector.broadcast %cst : f32 to vector<256x128xf32>
    %9 = arith.maximumf %7, %8 : vector<256x128xf32>
    %10 = vector.shape_cast %9 : vector<256x128xf32> to vector<16x16x128xf32>
    %cst_6 = arith.constant 0.000000e+00 : f32
    %11 = vector.broadcast %cst_6 : f32 to vector<1x2x9x128xf32>
    %c0_7 = arith.constant 0 : index
    %c0_8 = arith.constant 0 : index
    %c0_9 = arith.constant 0 : index
    %c0_10 = arith.constant 0 : index
    %12 = vector.load %arg7[%c0_7, %c0_8, %c0_9, %c0_10] : memref<18x2x9x128xf32, #tpu.memory_space<vmem>>, vector<1x2x9x128xf32>
    tpu.vector_store %arg7[%c0_7, %c0_8, %c0_9, %c0_10], %11 {strides = array<i32>} : memref<18x2x9x128xf32, #tpu.memory_space<vmem>>, vector<1x2x9x128xf32>,
    %c17 = arith.constant 17 : index
    %c0_11 = arith.constant 0 : index
    %c0_12 = arith.constant 0 : index
    %c0_13 = arith.constant 0 : index
    %13 = vector.load %arg7[%c17, %c0_11, %c0_12, %c0_13] : memref<18x2x9x128xf32, #tpu.memory_space<vmem>>, vector<1x2x9x128xf32>
    tpu.vector_store %arg7[%c17, %c0_11, %c0_12, %c0_13], %11 {strides = array<i32>} : memref<18x2x9x128xf32, #tpu.memory_space<vmem>>, vector<1x2x9x128xf32>,
    %cst_14 = arith.constant 0.000000e+00 : f32
    %14 = vector.broadcast %cst_14 : f32 to vector<18x1x1x128xf32>
    %c0_15 = arith.constant 0 : index
    %c0_16 = arith.constant 0 : index
    %c0_17 = arith.constant 0 : index
    %c0_18 = arith.constant 0 : index
    %15 = vector.load %arg7[%c0_15, %c0_16, %c0_17, %c0_18] : memref<18x2x9x128xf32, #tpu.memory_space<vmem>>, vector<18x1x1x128xf32>
    tpu.vector_store %arg7[%c0_15, %c0_16, %c0_17, %c0_18], %14 {strides = array<i32>} : memref<18x2x9x128xf32, #tpu.memory_space<vmem>>, vector<18x1x1x128xf32>,
    %cst_19 = arith.constant 0.000000e+00 : f32
    %16 = vector.broadcast %cst_19 : f32 to vector<18x1x1x128xf32>
    %c0_20 = arith.constant 0 : index
    %c1 = arith.constant 1 : index
    %c8 = arith.constant 8 : index
    %c0_21 = arith.constant 0 : index
    %17 = vector.load %arg7[%c0_20, %c1, %c8, %c0_21] : memref<18x2x9x128xf32, #tpu.memory_space<vmem>>, vector<18x1x1x128xf32>
    tpu.vector_store %arg7[%c0_20, %c1, %c8, %c0_21], %16 {strides = array<i32>} : memref<18x2x9x128xf32, #tpu.memory_space<vmem>>, vector<18x1x1x128xf32>,
    %c0_22 = arith.constant 0 : index
    %c0_23 = arith.constant 0 : index
    %c0_24 = arith.constant 0 : index
    %18 = vector.load %arg9[%c0_22, %c0_23, %c0_24] : memref<16x16x128xf32, #tpu.memory_space<vmem>>, vector<16x16x128xf32>
    tpu.vector_store %arg9[%c0_22, %c0_23, %c0_24], %10 {strides = array<i32>} : memref<16x16x128xf32, #tpu.memory_space<vmem>>, vector<16x16x128xf32>,
    %c0_25 = arith.constant 0 : index
    %c1_26 = arith.constant 1 : index
    %c0_27 = arith.constant 0 : index
    %19 = tpu.strided_load %arg9[%c0_25, %c1_26, %c0_27] {strides = array<i32: 1, 2, 1>} : memref<16x16x128xf32, #tpu.memory_space<vmem>>, vector<16x8x128xf32>
    %20 = vector.shape_cast %19 : vector<16x8x128xf32> to vector<16x1x8x128xf32>
    %c1_28 = arith.constant 1 : index
    %c0_29 = arith.constant 0 : index
    %c1_30 = arith.constant 1 : index
    %c0_31 = arith.constant 0 : index
    %21 = vector.load %arg7[%c1_28, %c0_29, %c1_30, %c0_31] : memref<18x2x9x128xf32, #tpu.memory_space<vmem>>, vector<16x1x8x128xf32>
    tpu.vector_store %arg7[%c1_28, %c0_29, %c1_30, %c0_31], %20 {strides = array<i32>} : memref<18x2x9x128xf32, #tpu.memory_space<vmem>>, vector<16x1x8x128xf32>,
    %c0_32 = arith.constant 0 : index
    %c0_33 = arith.constant 0 : index
    %c0_34 = arith.constant 0 : index
    %22 = tpu.strided_load %arg9[%c0_32, %c0_33, %c0_34] {strides = array<i32: 1, 2, 1>} : memref<16x16x128xf32, #tpu.memory_space<vmem>>, vector<16x8x128xf32>
    %23 = vector.shape_cast %22 : vector<16x8x128xf32> to vector<16x1x8x128xf32>
    %c1_35 = arith.constant 1 : index
    %c1_36 = arith.constant 1 : index
    %c0_37 = arith.constant 0 : index
    %c0_38 = arith.constant 0 : index
    %24 = vector.load %arg7[%c1_35, %c1_36, %c0_37, %c0_38] : memref<18x2x9x128xf32, #tpu.memory_space<vmem>>, vector<16x1x8x128xf32>
    tpu.vector_store %arg7[%c1_35, %c1_36, %c0_37, %c0_38], %23 {strides = array<i32>} : memref<18x2x9x128xf32, #tpu.memory_space<vmem>>, vector<16x1x8x128xf32>,
    %c0_39 = arith.constant 0 : index
    %c0_40 = arith.constant 0 : index
    %c0_41 = arith.constant 0 : index
    %c0_42 = arith.constant 0 : index
    %25 = tpu.strided_load %arg7[%c0_39, %c0_40, %c0_41, %c0_42] {strides = array<i32: 2, 1, 1, 1>} : memref<18x2x9x128xf32, #tpu.memory_space<vmem>>, vector<8x1x8x128xf32>
    %26 = vector.shape_cast %25 : vector<8x1x8x128xf32> to vector<8x8x128xf32>
    %c0_43 = arith.constant 0 : index
    %c0_44 = arith.constant 0 : index
    %c0_45 = arith.constant 0 : index
    %27 = vector.load %arg8[%c0_43, %c0_44, %c0_45] : memref<8x8x1152xf32, #tpu.memory_space<vmem>>, vector<8x8x128xf32>
    tpu.vector_store %arg8[%c0_43, %c0_44, %c0_45], %26 {strides = array<i32>} : memref<8x8x1152xf32, #tpu.memory_space<vmem>>, vector<8x8x128xf32>,
    %c0_46 = arith.constant 0 : index
    %c1_47 = arith.constant 1 : index
    %c0_48 = arith.constant 0 : index
    %c0_49 = arith.constant 0 : index
    %28 = tpu.strided_load %arg7[%c0_46, %c1_47, %c0_48, %c0_49] {strides = array<i32: 2, 1, 1, 1>} : memref<18x2x9x128xf32, #tpu.memory_space<vmem>>, vector<8x1x8x128xf32>
    %29 = vector.shape_cast %28 : vector<8x1x8x128xf32> to vector<8x8x128xf32>
    %c0_50 = arith.constant 0 : index
    %c0_51 = arith.constant 0 : index
    %c128 = arith.constant 128 : index
    %30 = vector.load %arg8[%c0_50, %c0_51, %c128] : memref<8x8x1152xf32, #tpu.memory_space<vmem>>, vector<8x8x128xf32>
    tpu.vector_store %arg8[%c0_50, %c0_51, %c128], %29 {strides = array<i32>} : memref<8x8x1152xf32, #tpu.memory_space<vmem>>, vector<8x8x128xf32>,
    %c0_52 = arith.constant 0 : index
    %c0_53 = arith.constant 0 : index
    %c1_54 = arith.constant 1 : index
    %c0_55 = arith.constant 0 : index
    %31 = tpu.strided_load %arg7[%c0_52, %c0_53, %c1_54, %c0_55] {strides = array<i32: 2, 1, 1, 1>} : memref<18x2x9x128xf32, #tpu.memory_space<vmem>>, vector<8x1x8x128xf32>
    %32 = vector.shape_cast %31 : vector<8x1x8x128xf32> to vector<8x8x128xf32>
    %c0_56 = arith.constant 0 : index
    %c0_57 = arith.constant 0 : index
    %c256 = arith.constant 256 : index
    %33 = vector.load %arg8[%c0_56, %c0_57, %c256] : memref<8x8x1152xf32, #tpu.memory_space<vmem>>, vector<8x8x128xf32>
    tpu.vector_store %arg8[%c0_56, %c0_57, %c256], %32 {strides = array<i32>} : memref<8x8x1152xf32, #tpu.memory_space<vmem>>, vector<8x8x128xf32>,
    %c1_58 = arith.constant 1 : index
    %c0_59 = arith.constant 0 : index
    %c0_60 = arith.constant 0 : index
    %c0_61 = arith.constant 0 : index
    %34 = tpu.strided_load %arg7[%c1_58, %c0_59, %c0_60, %c0_61] {strides = array<i32: 2, 1, 1, 1>} : memref<18x2x9x128xf32, #tpu.memory_space<vmem>>, vector<8x1x8x128xf32>
    %35 = vector.shape_cast %34 : vector<8x1x8x128xf32> to vector<8x8x128xf32>
    %c0_62 = arith.constant 0 : index
    %c0_63 = arith.constant 0 : index
    %c384 = arith.constant 384 : index
    %36 = vector.load %arg8[%c0_62, %c0_63, %c384] : memref<8x8x1152xf32, #tpu.memory_space<vmem>>, vector<8x8x128xf32>
    tpu.vector_store %arg8[%c0_62, %c0_63, %c384], %35 {strides = array<i32>} : memref<8x8x1152xf32, #tpu.memory_space<vmem>>, vector<8x8x128xf32>,
    %c1_64 = arith.constant 1 : index
    %c1_65 = arith.constant 1 : index
    %c0_66 = arith.constant 0 : index
    %c0_67 = arith.constant 0 : index
    %37 = tpu.strided_load %arg7[%c1_64, %c1_65, %c0_66, %c0_67] {strides = array<i32: 2, 1, 1, 1>} : memref<18x2x9x128xf32, #tpu.memory_space<vmem>>, vector<8x1x8x128xf32>
    %38 = vector.shape_cast %37 : vector<8x1x8x128xf32> to vector<8x8x128xf32>
    %c0_68 = arith.constant 0 : index
    %c0_69 = arith.constant 0 : index
    %c512 = arith.constant 512 : index
    %39 = vector.load %arg8[%c0_68, %c0_69, %c512] : memref<8x8x1152xf32, #tpu.memory_space<vmem>>, vector<8x8x128xf32>
    tpu.vector_store %arg8[%c0_68, %c0_69, %c512], %38 {strides = array<i32>} : memref<8x8x1152xf32, #tpu.memory_space<vmem>>, vector<8x8x128xf32>,
    %c1_70 = arith.constant 1 : index
    %c0_71 = arith.constant 0 : index
    %c1_72 = arith.constant 1 : index
    %c0_73 = arith.constant 0 : index
    %40 = tpu.strided_load %arg7[%c1_70, %c0_71, %c1_72, %c0_73] {strides = array<i32: 2, 1, 1, 1>} : memref<18x2x9x128xf32, #tpu.memory_space<vmem>>, vector<8x1x8x128xf32>
    %41 = vector.shape_cast %40 : vector<8x1x8x128xf32> to vector<8x8x128xf32>
    %c0_74 = arith.constant 0 : index
    %c0_75 = arith.constant 0 : index
    %c640 = arith.constant 640 : index
    %42 = vector.load %arg8[%c0_74, %c0_75, %c640] : memref<8x8x1152xf32, #tpu.memory_space<vmem>>, vector<8x8x128xf32>
    tpu.vector_store %arg8[%c0_74, %c0_75, %c640], %41 {strides = array<i32>} : memref<8x8x1152xf32, #tpu.memory_space<vmem>>, vector<8x8x128xf32>,
    %c2 = arith.constant 2 : index
    %c0_76 = arith.constant 0 : index
    %c0_77 = arith.constant 0 : index
    %c0_78 = arith.constant 0 : index
    %43 = tpu.strided_load %arg7[%c2, %c0_76, %c0_77, %c0_78] {strides = array<i32: 2, 1, 1, 1>} : memref<18x2x9x128xf32, #tpu.memory_space<vmem>>, vector<8x1x8x128xf32>
    %44 = vector.shape_cast %43 : vector<8x1x8x128xf32> to vector<8x8x128xf32>
    %c0_79 = arith.constant 0 : index
    %c0_80 = arith.constant 0 : index
    %c768 = arith.constant 768 : index
    %45 = vector.load %arg8[%c0_79, %c0_80, %c768] : memref<8x8x1152xf32, #tpu.memory_space<vmem>>, vector<8x8x128xf32>
    tpu.vector_store %arg8[%c0_79, %c0_80, %c768], %44 {strides = array<i32>} : memref<8x8x1152xf32, #tpu.memory_space<vmem>>, vector<8x8x128xf32>,
    %c2_81 = arith.constant 2 : index
    %c1_82 = arith.constant 1 : index
    %c0_83 = arith.constant 0 : index
    %c0_84 = arith.constant 0 : index
    %46 = tpu.strided_load %arg7[%c2_81, %c1_82, %c0_83, %c0_84] {strides = array<i32: 2, 1, 1, 1>} : memref<18x2x9x128xf32, #tpu.memory_space<vmem>>, vector<8x1x8x128xf32>
    %47 = vector.shape_cast %46 : vector<8x1x8x128xf32> to vector<8x8x128xf32>
    %c0_85 = arith.constant 0 : index
    %c0_86 = arith.constant 0 : index
    %c896 = arith.constant 896 : index
    %48 = vector.load %arg8[%c0_85, %c0_86, %c896] : memref<8x8x1152xf32, #tpu.memory_space<vmem>>, vector<8x8x128xf32>
    tpu.vector_store %arg8[%c0_85, %c0_86, %c896], %47 {strides = array<i32>} : memref<8x8x1152xf32, #tpu.memory_space<vmem>>, vector<8x8x128xf32>,
    %c2_87 = arith.constant 2 : index
    %c0_88 = arith.constant 0 : index
    %c1_89 = arith.constant 1 : index
    %c0_90 = arith.constant 0 : index
    %49 = tpu.strided_load %arg7[%c2_87, %c0_88, %c1_89, %c0_90] {strides = array<i32: 2, 1, 1, 1>} : memref<18x2x9x128xf32, #tpu.memory_space<vmem>>, vector<8x1x8x128xf32>
    %50 = vector.shape_cast %49 : vector<8x1x8x128xf32> to vector<8x8x128xf32>
    %c0_91 = arith.constant 0 : index
    %c0_92 = arith.constant 0 : index
    %c1024 = arith.constant 1024 : index
    %51 = vector.load %arg8[%c0_91, %c0_92, %c1024] : memref<8x8x1152xf32, #tpu.memory_space<vmem>>, vector<8x8x128xf32>
    tpu.vector_store %arg8[%c0_91, %c0_92, %c1024], %50 {strides = array<i32>} : memref<8x8x1152xf32, #tpu.memory_space<vmem>>, vector<8x8x128xf32>,
    %c0_93 = arith.constant 0 : index
    %c0_94 = arith.constant 0 : index
    %c0_95 = arith.constant 0 : index
    %52 = vector.load %arg8[%c0_93, %c0_94, %c0_95] : memref<8x8x1152xf32, #tpu.memory_space<vmem>>, vector<8x8x1152xf32>
    %53 = vector.shape_cast %52 : vector<8x8x1152xf32> to vector<64x1152xf32>
    %c0_96 = arith.constant 0 : index
    %c0_97 = arith.constant 0 : index
    %54 = vector.load %arg4[%c0_96, %c0_97] : memref<1152x128xf32, #tpu.memory_space<vmem>>, vector<1152x128xf32>
    %cst_98 = arith.constant dense<0.000000e+00> : vector<64x128xf32>
    %55 = tpu.matmul %53, %54, %cst_98 {dimension_numbers = #tpu.dot_dimension_numbers<[1], [0], [0], [1], [0, 0, 1, 1], [], []>} : vector<64x1152xf32>, vector<1152x128xf32>, vector<64x128xf32> -> vector<64x128xf32>
    %c0_99 = arith.constant 0 : index
    %c0_100 = arith.constant 0 : index
    %c0_101 = arith.constant 0 : index
    %56 = vector.load %arg5[%c0_99, %c0_100, %c0_101] : memref<1x64x128xf32, #tpu.memory_space<vmem>>, vector<1x64x128xf32>
    %57 = vector.shape_cast %56 : vector<1x64x128xf32> to vector<64x128xf32>
    %58 = vector.shape_cast %55 : vector<64x128xf32> to vector<1x64x128xf32>
    tpu.vector_store %arg5[%c0_99, %c0_100, %c0_101], %58 {strides = array<i32>} : memref<1x64x128xf32, #tpu.memory_space<vmem>>, vector<1x64x128xf32>,
    %cst_102 = arith.constant dense<0.000000e+00> : vector<128xf32>
    %59 = vector.multi_reduction <add>, %55, %cst_102 [0] : vector<64x128xf32> to vector<128xf32>
    %60 = vector.shape_cast %59 : vector<128xf32> to vector<1x128xf32>
    %61 = arith.mulf %55, %55 : vector<64x128xf32>
    %cst_103 = arith.constant dense<0.000000e+00> : vector<128xf32>
    %62 = vector.multi_reduction <add>, %61, %cst_103 [0] : vector<64x128xf32> to vector<128xf32>
    %63 = vector.shape_cast %62 : vector<128xf32> to vector<1x128xf32>
    %64 = tpu.concatenate %60, %63 in 0 : vector<1x128xf32>, vector<1x128xf32> -> vector<2x128xf32>
    %c0_104 = arith.constant 0 : index
    %c0_105 = arith.constant 0 : index
    %c0_106 = arith.constant 0 : index
    %65 = vector.load %arg6[%c0_104, %c0_105, %c0_106] : memref<1x2x128xf32, #tpu.memory_space<vmem>>, vector<1x2x128xf32>
    %66 = vector.shape_cast %65 : vector<1x2x128xf32> to vector<2x128xf32>
    %67 = vector.shape_cast %64 : vector<2x128xf32> to vector<1x2x128xf32>
    tpu.vector_store %arg6[%c0_104, %c0_105, %c0_106], %67 {strides = array<i32>} : memref<1x2x128xf32, #tpu.memory_space<vmem>>, vector<1x2x128xf32>,
    return
  }
  func.func @transform_0(%arg0: i32) -> (i32, i32, i32) {
    %c0_i32 = arith.constant 0 : i32
    %c0_i32_0 = arith.constant 0 : i32
    %c0_i32_1 = arith.constant 0 : i32
    return %arg0, %c0_i32, %c0_i32_0 : i32, i32, i32
  }
  func.func @transform_1(%arg0: i32) -> (i32, i32) {
    %c0_i32 = arith.constant 0 : i32
    %c0_i32_0 = arith.constant 0 : i32
    %c0_i32_1 = arith.constant 0 : i32
    return %c0_i32, %c0_i32_0 : i32, i32
  }
  func.func @transform_2(%arg0: i32) -> (i32, i32) {
    %c0_i32 = arith.constant 0 : i32
    %c0_i32_0 = arith.constant 0 : i32
    %c0_i32_1 = arith.constant 0 : i32
    return %c0_i32, %c0_i32_0 : i32, i32
  }
  func.func @transform_3(%arg0: i32) -> (i32, i32) {
    %c0_i32 = arith.constant 0 : i32
    %c0_i32_0 = arith.constant 0 : i32
    %c0_i32_1 = arith.constant 0 : i32
    return %c0_i32, %c0_i32_0 : i32, i32
  }
  func.func @transform_4(%arg0: i32) -> (i32, i32, i32) {
    %c0_i32 = arith.constant 0 : i32
    %c0_i32_0 = arith.constant 0 : i32
    %c0_i32_1 = arith.constant 0 : i32
    return %arg0, %c0_i32, %c0_i32_0 : i32, i32, i32
  }
  func.func @transform_5(%arg0: i32) -> (i32, i32, i32) {
    %c0_i32 = arith.constant 0 : i32
    %c0_i32_0 = arith.constant 0 : i32
    %c0_i32_1 = arith.constant 0 : i32
    return %arg0, %c0_i32, %c0_i32_0 : i32, i32, i32
  }
}

module attributes {stable_mosaic.version = 11 : i64} {
  func.func @_mm_stats_kernel(%arg0: i32, %arg1: memref<128x128xf32, #tpu.memory_space<vmem>>, %arg2: memref<128x128xf32, #tpu.memory_space<vmem>>, %arg3: memref<1x128xf32, #tpu.memory_space<vmem>>, %arg4: memref<1x128xf32, #tpu.memory_space<vmem>>, %arg5: memref<128x128xf32, #tpu.memory_space<vmem>>, %arg6: memref<1x2x128xf32, #tpu.memory_space<vmem>>) attributes {dimension_semantics = [#tpu.dimension_semantics<parallel>], iteration_bounds = array<i64: 1>, scalar_prefetch = 0 : i64, scratch_operands = 0 : i64, tpu.core_type = #tpu.core_type<tc>, window_params = [{transform_indices = @transform_0, window_bounds = array<i64: 128, 128>}, {pipeline_mode = #tpu.pipeline_mode<synchronous>, transform_indices = @transform_1, window_bounds = array<i64: 128, 128>}, {pipeline_mode = #tpu.pipeline_mode<synchronous>, transform_indices = @transform_2, window_bounds = array<i64: 1, 128>}, {pipeline_mode = #tpu.pipeline_mode<synchronous>, transform_indices = @transform_3, window_bounds = array<i64: 1, 128>}, {transform_indices = @transform_4, window_bounds = array<i64: 128, 128>}, {transform_indices = @transform_5, window_bounds = array<i64: 1, 2, 128>}]} {
    %c0 = arith.constant 0 : index
    %c0_0 = arith.constant 0 : index
    %0 = vector.load %arg1[%c0, %c0_0] : memref<128x128xf32, #tpu.memory_space<vmem>>, vector<128x128xf32>
    %c0_1 = arith.constant 0 : index
    %c0_2 = arith.constant 0 : index
    %1 = vector.load %arg3[%c0_1, %c0_2] : memref<1x128xf32, #tpu.memory_space<vmem>>, vector<1x128xf32>
    %2 = vector.broadcast %1 : vector<1x128xf32> to vector<128x128xf32>
    %3 = arith.mulf %0, %2 : vector<128x128xf32>
    %c0_3 = arith.constant 0 : index
    %c0_4 = arith.constant 0 : index
    %4 = vector.load %arg4[%c0_3, %c0_4] : memref<1x128xf32, #tpu.memory_space<vmem>>, vector<1x128xf32>
    %5 = vector.broadcast %4 : vector<1x128xf32> to vector<128x128xf32>
    %6 = arith.addf %3, %5 : vector<128x128xf32>
    %cst = arith.constant 0.000000e+00 : f32
    %7 = vector.broadcast %cst : f32 to vector<128x128xf32>
    %8 = arith.maximumf %6, %7 : vector<128x128xf32>
    %c0_5 = arith.constant 0 : index
    %c0_6 = arith.constant 0 : index
    %9 = vector.load %arg2[%c0_5, %c0_6] : memref<128x128xf32, #tpu.memory_space<vmem>>, vector<128x128xf32>
    %cst_7 = arith.constant dense<0.000000e+00> : vector<128x128xf32>
    %10 = tpu.matmul %8, %9, %cst_7 {dimension_numbers = #tpu.dot_dimension_numbers<[1], [0], [0], [1], [0, 0, 1, 1], [], []>} : vector<128x128xf32>, vector<128x128xf32>, vector<128x128xf32> -> vector<128x128xf32>
    %c0_8 = arith.constant 0 : index
    %c0_9 = arith.constant 0 : index
    %11 = vector.load %arg5[%c0_8, %c0_9] : memref<128x128xf32, #tpu.memory_space<vmem>>, vector<128x128xf32>
    tpu.vector_store %arg5[%c0_8, %c0_9], %10 {strides = array<i32>} : memref<128x128xf32, #tpu.memory_space<vmem>>, vector<128x128xf32>,
    %cst_10 = arith.constant dense<0.000000e+00> : vector<128xf32>
    %12 = vector.multi_reduction <add>, %10, %cst_10 [0] : vector<128x128xf32> to vector<128xf32>
    %13 = vector.shape_cast %12 : vector<128xf32> to vector<1x128xf32>
    %14 = arith.mulf %10, %10 : vector<128x128xf32>
    %cst_11 = arith.constant dense<0.000000e+00> : vector<128xf32>
    %15 = vector.multi_reduction <add>, %14, %cst_11 [0] : vector<128x128xf32> to vector<128xf32>
    %16 = vector.shape_cast %15 : vector<128xf32> to vector<1x128xf32>
    %17 = tpu.concatenate %13, %16 in 0 : vector<1x128xf32>, vector<1x128xf32> -> vector<2x128xf32>
    %c0_12 = arith.constant 0 : index
    %c0_13 = arith.constant 0 : index
    %c0_14 = arith.constant 0 : index
    %18 = vector.load %arg6[%c0_12, %c0_13, %c0_14] : memref<1x2x128xf32, #tpu.memory_space<vmem>>, vector<1x2x128xf32>
    %19 = vector.shape_cast %18 : vector<1x2x128xf32> to vector<2x128xf32>
    %20 = vector.shape_cast %17 : vector<2x128xf32> to vector<1x2x128xf32>
    tpu.vector_store %arg6[%c0_12, %c0_13, %c0_14], %20 {strides = array<i32>} : memref<1x2x128xf32, #tpu.memory_space<vmem>>, vector<1x2x128xf32>,
    return
  }
  func.func @transform_0(%arg0: i32) -> (i32, i32) {
    %c0_i32 = arith.constant 0 : i32
    %c0_i32_0 = arith.constant 0 : i32
    return %arg0, %c0_i32 : i32, i32
  }
  func.func @transform_1(%arg0: i32) -> (i32, i32) {
    %c0_i32 = arith.constant 0 : i32
    %c0_i32_0 = arith.constant 0 : i32
    %c0_i32_1 = arith.constant 0 : i32
    return %c0_i32, %c0_i32_0 : i32, i32
  }
  func.func @transform_2(%arg0: i32) -> (i32, i32) {
    %c0_i32 = arith.constant 0 : i32
    %c0_i32_0 = arith.constant 0 : i32
    %c0_i32_1 = arith.constant 0 : i32
    return %c0_i32, %c0_i32_0 : i32, i32
  }
  func.func @transform_3(%arg0: i32) -> (i32, i32) {
    %c0_i32 = arith.constant 0 : i32
    %c0_i32_0 = arith.constant 0 : i32
    %c0_i32_1 = arith.constant 0 : i32
    return %c0_i32, %c0_i32_0 : i32, i32
  }
  func.func @transform_4(%arg0: i32) -> (i32, i32) {
    %c0_i32 = arith.constant 0 : i32
    %c0_i32_0 = arith.constant 0 : i32
    return %arg0, %c0_i32 : i32, i32
  }
  func.func @transform_5(%arg0: i32) -> (i32, i32, i32) {
    %c0_i32 = arith.constant 0 : i32
    %c0_i32_0 = arith.constant 0 : i32
    %c0_i32_1 = arith.constant 0 : i32
    return %arg0, %c0_i32, %c0_i32_0 : i32, i32, i32
  }
}

module attributes {stable_mosaic.version = 11 : i64} {
  func.func @_finalize_kernel(%arg0: i32, %arg1: memref<128x128xf32, #tpu.memory_space<vmem>>, %arg2: memref<1x128xf32, #tpu.memory_space<vmem>>, %arg3: memref<1x128xf32, #tpu.memory_space<vmem>>, %arg4: memref<128x128xf32, #tpu.memory_space<vmem>>, %arg5: memref<1x128xf32, #tpu.memory_space<vmem>>, %arg6: memref<1x128xf32, #tpu.memory_space<vmem>>, %arg7: memref<128x128xf32, #tpu.memory_space<vmem>>) attributes {dimension_semantics = [#tpu.dimension_semantics<parallel>], iteration_bounds = array<i64: 1>, scalar_prefetch = 0 : i64, scratch_operands = 0 : i64, tpu.core_type = #tpu.core_type<tc>, window_params = [{transform_indices = @transform_0, window_bounds = array<i64: 128, 128>}, {pipeline_mode = #tpu.pipeline_mode<synchronous>, transform_indices = @transform_1, window_bounds = array<i64: 1, 128>}, {pipeline_mode = #tpu.pipeline_mode<synchronous>, transform_indices = @transform_2, window_bounds = array<i64: 1, 128>}, {transform_indices = @transform_3, window_bounds = array<i64: 128, 128>}, {pipeline_mode = #tpu.pipeline_mode<synchronous>, transform_indices = @transform_4, window_bounds = array<i64: 1, 128>}, {pipeline_mode = #tpu.pipeline_mode<synchronous>, transform_indices = @transform_5, window_bounds = array<i64: 1, 128>}, {transform_indices = @transform_6, window_bounds = array<i64: 128, 128>}]} {
    %c0 = arith.constant 0 : index
    %c0_0 = arith.constant 0 : index
    %0 = vector.load %arg4[%c0, %c0_0] : memref<128x128xf32, #tpu.memory_space<vmem>>, vector<128x128xf32>
    %c0_1 = arith.constant 0 : index
    %c0_2 = arith.constant 0 : index
    %1 = vector.load %arg5[%c0_1, %c0_2] : memref<1x128xf32, #tpu.memory_space<vmem>>, vector<1x128xf32>
    %2 = vector.broadcast %1 : vector<1x128xf32> to vector<128x128xf32>
    %3 = arith.mulf %0, %2 : vector<128x128xf32>
    %c0_3 = arith.constant 0 : index
    %c0_4 = arith.constant 0 : index
    %4 = vector.load %arg6[%c0_3, %c0_4] : memref<1x128xf32, #tpu.memory_space<vmem>>, vector<1x128xf32>
    %5 = vector.broadcast %4 : vector<1x128xf32> to vector<128x128xf32>
    %6 = arith.addf %3, %5 : vector<128x128xf32>
    %c0_5 = arith.constant 0 : index
    %c0_6 = arith.constant 0 : index
    %7 = vector.load %arg1[%c0_5, %c0_6] : memref<128x128xf32, #tpu.memory_space<vmem>>, vector<128x128xf32>
    %c0_7 = arith.constant 0 : index
    %c0_8 = arith.constant 0 : index
    %8 = vector.load %arg2[%c0_7, %c0_8] : memref<1x128xf32, #tpu.memory_space<vmem>>, vector<1x128xf32>
    %9 = vector.broadcast %8 : vector<1x128xf32> to vector<128x128xf32>
    %10 = arith.mulf %7, %9 : vector<128x128xf32>
    %c0_9 = arith.constant 0 : index
    %c0_10 = arith.constant 0 : index
    %11 = vector.load %arg3[%c0_9, %c0_10] : memref<1x128xf32, #tpu.memory_space<vmem>>, vector<1x128xf32>
    %12 = vector.broadcast %11 : vector<1x128xf32> to vector<128x128xf32>
    %13 = arith.addf %10, %12 : vector<128x128xf32>
    %14 = arith.addf %13, %6 : vector<128x128xf32>
    %cst = arith.constant 0.000000e+00 : f32
    %15 = vector.broadcast %cst : f32 to vector<128x128xf32>
    %16 = arith.maximumf %14, %15 : vector<128x128xf32>
    %c0_11 = arith.constant 0 : index
    %c0_12 = arith.constant 0 : index
    %17 = vector.load %arg7[%c0_11, %c0_12] : memref<128x128xf32, #tpu.memory_space<vmem>>, vector<128x128xf32>
    tpu.vector_store %arg7[%c0_11, %c0_12], %16 {strides = array<i32>} : memref<128x128xf32, #tpu.memory_space<vmem>>, vector<128x128xf32>,
    return
  }
  func.func @transform_0(%arg0: i32) -> (i32, i32) {
    %c0_i32 = arith.constant 0 : i32
    %c0_i32_0 = arith.constant 0 : i32
    return %arg0, %c0_i32 : i32, i32
  }
  func.func @transform_1(%arg0: i32) -> (i32, i32) {
    %c0_i32 = arith.constant 0 : i32
    %c0_i32_0 = arith.constant 0 : i32
    %c0_i32_1 = arith.constant 0 : i32
    return %c0_i32, %c0_i32_0 : i32, i32
  }
  func.func @transform_2(%arg0: i32) -> (i32, i32) {
    %c0_i32 = arith.constant 0 : i32
    %c0_i32_0 = arith.constant 0 : i32
    %c0_i32_1 = arith.constant 0 : i32
    return %c0_i32, %c0_i32_0 : i32, i32
  }
  func.func @transform_3(%arg0: i32) -> (i32, i32) {
    %c0_i32 = arith.constant 0 : i32
    %c0_i32_0 = arith.constant 0 : i32
    return %arg0, %c0_i32 : i32, i32
  }
  func.func @transform_4(%arg0: i32) -> (i32, i32) {
    %c0_i32 = arith.constant 0 : i32
    %c0_i32_0 = arith.constant 0 : i32
    %c0_i32_1 = arith.constant 0 : i32
    return %c0_i32, %c0_i32_0 : i32, i32
  }
  func.func @transform_5(%arg0: i32) -> (i32, i32) {
    %c0_i32 = arith.constant 0 : i32
    %c0_i32_0 = arith.constant 0 : i32
    %c0_i32_1 = arith.constant 0 : i32
    return %c0_i32, %c0_i32_0 : i32, i32
  }
  func.func @transform_6(%arg0: i32) -> (i32, i32) {
    %c0_i32 = arith.constant 0 : i32
    %c0_i32_0 = arith.constant 0 : i32
    return %arg0, %c0_i32 : i32, i32
  }
}

</mosaic_0001>

<llo_original>
// kernel: bottleneck_forward.8
$region0: #{bottleneck_forward.8}
  #allocation0 [shape = 'u32[]', space=smem, size = 0x4, offset = 0x4, fixed_abs, tag = 'smem constant byte address 0x4 - core index']
  #allocation1 [shape = 'u32[144,128]{1,0:T(1,128)}', space=vmem, size = 0x12000, scoped, tag = 'internal scratch']
  %s0 = inlined_call_operand.vmem [shape: f32[128,128], index: 0, kind: input, shape index: {}]
  %s1 = inlined_call_operand.vmem [shape: f32[128,128], index: 1, kind: input, shape index: {}]
  %s2 = inlined_call_operand.vmem [shape: f32[128,128], index: 2, kind: output, shape index: {0}]
  %s3 = inlined_call_operand.vmem [shape: f32[1,2,128], index: 3, kind: output, shape index: {1}]
  %4 = xla_tuple %s2, %s3
  %s5 = sld [smem:[#allocation0]]
  $region26: #{bottleneck_forward.8} parent=0
    _
  %s7 = ssub.s32 1, %s5
  %s8 = scalar_select 0, %s7, %s5
  // Predicated region
  $region2: #{bottleneck_forward.8} parent=0 // pred_check
    _
  $region3: #{bottleneck_forward.8} parent=0 // pred_check_branch
    %10 = sbr.rel (0) target = $region5
  $region4: #{bottleneck_forward.8} parent=0 // pred_region
    _
  $region5: #{bottleneck_forward.8} parent=0 // pred_fallthru
    _
  // Predicated region
  $region6: #{bottleneck_forward.8} parent=0 // pred_check
    _
  $region7: #{bottleneck_forward.8} parent=0 // pred_check_branch
    %12 = sbr.rel (0) target = $region9
  $region8: #{bottleneck_forward.8} parent=0 // pred_region
    _
  $region9: #{bottleneck_forward.8} parent=0 // pred_fallthru
    _
  %v13 = vld [vmem:[%s0] sm:$0xff]
  %v14 = vld [vmem:[%s0 + $0x8] sm:$0xff]
  %v15 = vld [vmem:[%s0 + $0x10] sm:$0xff]
  %v16 = vld [vmem:[%s0 + $0x18] sm:$0xff]
  %v17 = vld [vmem:[%s0 + $0x20] sm:$0xff]
  %v18 = vld [vmem:[%s0 + $0x28] sm:$0xff]
  %v19 = vld [vmem:[%s0 + $0x30] sm:$0xff]
  %v20 = vld [vmem:[%s0 + $0x38] sm:$0xff]
  %v21 = vld [vmem:[%s0 + $0x40] sm:$0xff]
  %v22 = vld [vmem:[%s0 + $0x48] sm:$0xff]
  %v23 = vld [vmem:[%s0 + $0x50] sm:$0xff]
  %v24 = vld [vmem:[%s0 + $0x58] sm:$0xff]
  %v25 = vld [vmem:[%s0 + $0x60] sm:$0xff]
  %v26 = vld [vmem:[%s0 + $0x68] sm:$0xff]
  %v27 = vld [vmem:[%s0 + $0x70] sm:$0xff]
  %v28 = vld [vmem:[%s0 + $0x78] sm:$0xff]
  %v29 = vld [vmem:[%s1] sm:$0xff]
  %v30 = vld [vmem:[%s1 + $0x8] sm:$0xff]
  %v31 = vld [vmem:[%s1 + $0x10] sm:$0xff]
  %v32 = vld [vmem:[%s1 + $0x18] sm:$0xff]
  %v33 = vld [vmem:[%s1 + $0x20] sm:$0xff]
  %v34 = vld [vmem:[%s1 + $0x28] sm:$0xff]
  %v35 = vld [vmem:[%s1 + $0x30] sm:$0xff]
  %v36 = vld [vmem:[%s1 + $0x38] sm:$0xff]
  %v37 = vld [vmem:[%s1 + $0x40] sm:$0xff]
  %v38 = vld [vmem:[%s1 + $0x48] sm:$0xff]
  %v39 = vld [vmem:[%s1 + $0x50] sm:$0xff]
  %v40 = vld [vmem:[%s1 + $0x58] sm:$0xff]
  %v41 = vld [vmem:[%s1 + $0x60] sm:$0xff]
  %v42 = vld [vmem:[%s1 + $0x68] sm:$0xff]
  %v43 = vld [vmem:[%s1 + $0x70] sm:$0xff]
  %v44 = vld [vmem:[%s1 + $0x78] sm:$0xff]
  %45 = vmatprep.subr.mxu0 0.0
  %46 = vmatpush1.msra.mxu0 %v29
  %47 = vmatprep.subr.mxu0 0.0
  %48 = vmatpush1.msra.mxu0 %v30
  %49 = vmatprep.subr.mxu0 0.0
  %50 = vmatpush1.msra.mxu0 %v31
  %51 = vmatprep.subr.mxu0 0.0
  %52 = vmatpush1.msra.mxu0 %v32
  %53 = vmatprep.subr.mxu0 0.0
  %54 = vmatpush1.msra.mxu0 %v33
  %55 = vmatprep.subr.mxu0 0.0
  %56 = vmatpush1.msra.mxu0 %v34
  %57 = vmatprep.subr.mxu0 0.0
  %58 = vmatpush1.msra.mxu0 %v35
  %59 = vmatprep.subr.mxu0 0.0
  %60 = vmatpush1.msra.mxu0 %v36
  %61 = vmatprep.subr.mxu0 0.0
  %62 = vmatpush1.msra.mxu0 %v37
  %63 = vmatprep.subr.mxu0 0.0
  %64 = vmatpush1.msra.mxu0 %v38
  %65 = vmatprep.subr.mxu0 0.0
  %66 = vmatpush1.msra.mxu0 %v39
  %67 = vmatprep.subr.mxu0 0.0
  %68 = vmatpush1.msra.mxu0 %v40
  %69 = vmatprep.subr.mxu0 0.0
  %70 = vmatpush1.msra.mxu0 %v41
  %71 = vmatprep.subr.mxu0 0.0
  %72 = vmatpush1.msra.mxu0 %v42
  %73 = vmatprep.subr.mxu0 0.0
  %74 = vmatpush1.msra.mxu0 %v43
  %75 = vmatprep.subr.mxu0 0.0
  %76 = vmatpush1.msra.mxu0 %v44
  %77 = vmatprep.subr.mxu0 0.0
  %78 = vmatpush1.msra.mxu0 0.0
  %79 = vmatprep.subr.mxu0 0.0
  %80 = vmatpush1.msra.mxu0 0.0
  %81 = vmatprep.subr.mxu0 0.0
  %82 = vmatpush1.msra.mxu0 0.0
  %83 = vmatprep.subr.mxu0 0.0
  %84 = vmatpush1.msra.mxu0 0.0
  %85 = vmatprep.subr.mxu0 0.0
  %86 = vmatpush1.msra.mxu0 0.0
  %87 = vmatprep.subr.mxu0 0.0
  %88 = vmatpush1.msra.mxu0 0.0
  %89 = vmatprep.subr.mxu0 0.0
  %90 = vmatpush1.msra.mxu0 0.0
  %91 = vmatprep.subr.mxu0 0.0
  %92 = vmatpush1.msra.mxu0 0.0
  %93 = vmatprep.subr.mxu0 0.0
  %94 = vmatpush1.msra.mxu0 0.0
  %95 = vmatprep.subr.mxu0 0.0
  %96 = vmatpush1.msra.mxu0 0.0
  %97 = vmatprep.subr.mxu0 0.0
  %98 = vmatpush1.msra.mxu0 0.0
  %99 = vmatprep.subr.mxu0 0.0
  %100 = vmatpush1.msra.mxu0 0.0
  %101 = vmatprep.subr.mxu0 0.0
  %102 = vmatpush1.msra.mxu0 0.0
  %103 = vmatprep.subr.mxu0 0.0
  %104 = vmatpush1.msra.mxu0 0.0
  %105 = vmatprep.subr.mxu0 0.0
  %106 = vmatpush1.msra.mxu0 0.0
  %107 = vmatprep.subr.mxu0 0.0
  %108 = vmatpush1.msra.mxu0 0.0
  %109 = vmatprep.mubr.f32.mxu0 0.0
  %110 = vmatmul.mubr.f32.gmra.mrb[0].mxu0 %v13
  %v111 = vpop.f32.mrb[0].mxu0
  %v112 = vadd.f32 0.0, %v111
  %v113 = vpop.f32.mrb[0].mxu0
  %114 = vmatprep.mubr.f32.mxu0 0.0
  %115 = vmatmul.mubr.f32.gmra.mrb[0].mxu0 %v14
  %v116 = vpop.f32.mrb[0].mxu0
  %v117 = vadd.f32 0.0, %v116
  %v118 = vpop.f32.mrb[0].mxu0
  %119 = vmatprep.mubr.f32.mxu0 0.0
  %120 = vmatmul.mubr.f32.gmra.mrb[0].mxu0 %v15
  %v121 = vpop.f32.mrb[0].mxu0
  %v122 = vadd.f32 0.0, %v121
  %v123 = vpop.f32.mrb[0].mxu0
  %124 = vmatprep.mubr.f32.mxu0 0.0
  %125 = vmatmul.mubr.f32.gmra.mrb[0].mxu0 %v16
  %v126 = vpop.f32.mrb[0].mxu0
  %v127 = vadd.f32 0.0, %v126
  %v128 = vpop.f32.mrb[0].mxu0
  %129 = vmatprep.mubr.f32.mxu0 0.0
  %130 = vmatmul.mubr.f32.gmra.mrb[0].mxu0 %v17
  %v131 = vpop.f32.mrb[0].mxu0
  %v132 = vadd.f32 0.0, %v131
  %v133 = vpop.f32.mrb[0].mxu0
  %134 = vmatprep.mubr.f32.mxu0 0.0
  %135 = vmatmul.mubr.f32.gmra.mrb[0].mxu0 %v18
  %v136 = vpop.f32.mrb[0].mxu0
  %v137 = vadd.f32 0.0, %v136
  %v138 = vpop.f32.mrb[0].mxu0
  %139 = vmatprep.mubr.f32.mxu0 0.0
  %140 = vmatmul.mubr.f32.gmra.mrb[0].mxu0 %v19
  %v141 = vpop.f32.mrb[0].mxu0
  %v142 = vadd.f32 0.0, %v141
  %v143 = vpop.f32.mrb[0].mxu0
  %144 = vmatprep.mubr.f32.mxu0 0.0
  %145 = vmatmul.mubr.f32.gmra.mrb[0].mxu0 %v20
  %v146 = vpop.f32.mrb[0].mxu0
  %v147 = vadd.f32 0.0, %v146
  %v148 = vpop.f32.mrb[0].mxu0
  %149 = vmatprep.mubr.f32.mxu0 0.0
  %150 = vmatmul.mubr.f32.gmra.mrb[0].mxu0 %v21
  %v151 = vpop.f32.mrb[0].mxu0
  %v152 = vadd.f32 0.0, %v151
  %v153 = vpop.f32.mrb[0].mxu0
  %154 = vmatprep.mubr.f32.mxu0 0.0
  %155 = vmatmul.mubr.f32.gmra.mrb[0].mxu0 %v22
  %v156 = vpop.f32.mrb[0].mxu0
  %v157 = vadd.f32 0.0, %v156
  %v158 = vpop.f32.mrb[0].mxu0
  %159 = vmatprep.mubr.f32.mxu0 0.0
  %160 = vmatmul.mubr.f32.gmra.mrb[0].mxu0 %v23
  %v161 = vpop.f32.mrb[0].mxu0
  %v162 = vadd.f32 0.0, %v161
  %v163 = vpop.f32.mrb[0].mxu0
  %164 = vmatprep.mubr.f32.mxu0 0.0
  %165 = vmatmul.mubr.f32.gmra.mrb[0].mxu0 %v24
  %v166 = vpop.f32.mrb[0].mxu0
  %v167 = vadd.f32 0.0, %v166
  %v168 = vpop.f32.mrb[0].mxu0
  %169 = vmatprep.mubr.f32.mxu0 0.0
  %170 = vmatmul.mubr.f32.gmra.mrb[0].mxu0 %v25
  %v171 = vpop.f32.mrb[0].mxu0
  %v172 = vadd.f32 0.0, %v171
  %v173 = vpop.f32.mrb[0].mxu0
  %174 = vmatprep.mubr.f32.mxu0 0.0
  %175 = vmatmul.mubr.f32.gmra.mrb[0].mxu0 %v26
  %v176 = vpop.f32.mrb[0].mxu0
  %v177 = vadd.f32 0.0, %v176
  %v178 = vpop.f32.mrb[0].mxu0
  %179 = vmatprep.mubr.f32.mxu0 0.0
  %180 = vmatmul.mubr.f32.gmra.mrb[0].mxu0 %v27
  %v181 = vpop.f32.mrb[0].mxu0
  %v182 = vadd.f32 0.0, %v181
  %v183 = vpop.f32.mrb[0].mxu0
  %184 = vmatprep.mubr.f32.mxu0 0.0
  %185 = vmatmul.mubr.f32.gmra.mrb[0].mxu0 %v28
  %v186 = vpop.f32.mrb[0].mxu0
  %v187 = vadd.f32 0.0, %v186
  %v188 = vpop.f32.mrb[0].mxu0
  %189 = vdwg.mxu0
  %190 = vst [vmem:[%s2] sm:$0xff] %v112
  %191 = vst [vmem:[%s2 + $0x8] sm:$0xff] %v117
  %192 = vst [vmem:[%s2 + $0x10] sm:$0xff] %v122
  %193 = vst [vmem:[%s2 + $0x18] sm:$0xff] %v127
  %194 = vst [vmem:[%s2 + $0x20] sm:$0xff] %v132
  %195 = vst [vmem:[%s2 + $0x28] sm:$0xff] %v137
  %196 = vst [vmem:[%s2 + $0x30] sm:$0xff] %v142
  %197 = vst [vmem:[%s2 + $0x38] sm:$0xff] %v147
  %198 = vst [vmem:[%s2 + $0x40] sm:$0xff] %v152
  %199 = vst [vmem:[%s2 + $0x48] sm:$0xff] %v157
  %200 = vst [vmem:[%s2 + $0x50] sm:$0xff] %v162
  %201 = vst [vmem:[%s2 + $0x58] sm:$0xff] %v167
  %202 = vst [vmem:[%s2 + $0x60] sm:$0xff] %v172
  %203 = vst [vmem:[%s2 + $0x68] sm:$0xff] %v177
  %204 = vst [vmem:[%s2 + $0x70] sm:$0xff] %v182
  %205 = vst [vmem:[%s2 + $0x78] sm:$0xff] %v187
  %v206 = vadd.f32 %v112, %v117
  %v207 = vadd.f32 %v206, %v122
  %v208 = vadd.f32 %v207, %v127
  %v209 = vadd.f32 %v208, %v132
  %v210 = vadd.f32 %v209, %v137
  %v211 = vadd.f32 %v210, %v142
  %v212 = vadd.f32 %v211, %v147
  %v213 = vadd.f32 %v212, %v152
  %v214 = vadd.f32 %v213, %v157
  %v215 = vadd.f32 %v214, %v162
  %v216 = vadd.f32 %v215, %v167
  %v217 = vadd.f32 %v216, %v172
  %v218 = vadd.f32 %v217, %v177
  %v219 = vadd.f32 %v218, %v182
  %v220 = vadd.f32 %v219, %v187
  %v221 = vrot.slane %v220, 4
  %v222 = vadd.f32 %v220, %v221
  %v223 = vrot.slane %v222, 2
  %v224 = vadd.f32 %v222, %v223
  %v225 = vrot.slane %v224, 1
  %v226 = vadd.f32 %v224, %v225
  %v227 = vmul.f32 %v112, %v112
  %v228 = vmul.f32 %v117, %v117
  %v229 = vmul.f32 %v122, %v122
  %v230 = vmul.f32 %v127, %v127
  %v231 = vmul.f32 %v132, %v132
  %v232 = vmul.f32 %v137, %v137
  %v233 = vmul.f32 %v142, %v142
  %v234 = vmul.f32 %v147, %v147
  %v235 = vmul.f32 %v152, %v152
  %v236 = vmul.f32 %v157, %v157
  %v237 = vmul.f32 %v162, %v162
  %v238 = vmul.f32 %v167, %v167
  %v239 = vmul.f32 %v172, %v172
  %v240 = vmul.f32 %v177, %v177
  %v241 = vmul.f32 %v182, %v182
  %v242 = vmul.f32 %v187, %v187
  %v243 = vadd.f32 %v227, %v228
  %v244 = vadd.f32 %v243, %v229
  %v245 = vadd.f32 %v244, %v230
  %v246 = vadd.f32 %v245, %v231
  %v247 = vadd.f32 %v246, %v232
  %v248 = vadd.f32 %v247, %v233
  %v249 = vadd.f32 %v248, %v234
  %v250 = vadd.f32 %v249, %v235
  %v251 = vadd.f32 %v250, %v236
  %v252 = vadd.f32 %v251, %v237
  %v253 = vadd.f32 %v252, %v238
  %v254 = vadd.f32 %v253, %v239
  %v255 = vadd.f32 %v254, %v240
  %v256 = vadd.f32 %v255, %v241
  %v257 = vadd.f32 %v256, %v242
  %v258 = vrot.slane %v257, 4
  %v259 = vadd.f32 %v257, %v258
  %v260 = vrot.slane %v259, 2
  %v261 = vadd.f32 %v259, %v260
  %v262 = vrot.slane %v261, 1
  %v263 = vadd.f32 %v261, %v262
  %vm264 = vcmask 1040384
  %v265 = vsel %vm264, %v226, %v263
  %266 = vst [vmem:[%s3] sm:$0x3] %v265
  // Predicated region
  $region10: #{bottleneck_forward.8} parent=0 // pred_check
    _
  $region11: #{bottleneck_forward.8} parent=0 // pred_check_branch
    %268 = sbr.rel (0) target = $region13
  $region12: #{bottleneck_forward.8} parent=0 // pred_region
    _
  $region13: #{bottleneck_forward.8} parent=0 // pred_fallthru
    _
  // Predicated region
  $region14: #{bottleneck_forward.8} parent=0 // pred_check
    _
  $region15: #{bottleneck_forward.8} parent=0 // pred_check_branch
    %270 = sbr.rel (0) target = $region17
  $region16: #{bottleneck_forward.8} parent=0 // pred_region
    _
  $region17: #{bottleneck_forward.8} parent=0 // pred_fallthru
    _
  // Predicated region
  $region18: #{bottleneck_forward.8} parent=0 // pred_check
    _
  $region19: #{bottleneck_forward.8} parent=0 // pred_check_branch
    %272 = sbr.rel (0) target = $region21
  $region20: #{bottleneck_forward.8} parent=0 // pred_region
    _
  $region21: #{bottleneck_forward.8} parent=0 // pred_fallthru
    _
  // Predicated region
  $region22: #{bottleneck_forward.8} parent=0 // pred_check
    _
  $region23: #{bottleneck_forward.8} parent=0 // pred_check_branch
    %274 = sbr.rel (0) target = $region25
  $region24: #{bottleneck_forward.8} parent=0 // pred_region
    _
  $region25: #{bottleneck_forward.8} parent=0 // pred_fallthru
    _

// kernel: bottleneck_forward.5
$region0: #{bottleneck_forward.5}
  #allocation0 [shape = 'u32[]', space=smem, size = 0x4, offset = 0x4, fixed_abs, tag = 'smem constant byte address 0x4 - core index']
  #allocation1 [shape = 'u32[144,128]{1,0:T(1,128)}', space=vmem, size = 0x12000, scoped, tag = 'internal scratch']
  %s0 = inlined_call_operand.vmem [shape: f32[512,128], index: 0, kind: input, shape index: {}]
  %s1 = inlined_call_operand.vmem [shape: f32[128,128], index: 1, kind: input, shape index: {}]
  %s2 = inlined_call_operand.vmem [shape: f32[512,128], index: 2, kind: output, shape index: {0}]
  %s3 = inlined_call_operand.vmem [shape: f32[1,2,128], index: 3, kind: output, shape index: {1}]
  %4 = xla_tuple %s2, %s3
  %s5 = sld [smem:[#allocation0]]
  $region26: #{bottleneck_forward.5} parent=0
    _
  %s7 = ssub.s32 1, %s5
  %s8 = scalar_select 0, %s7, %s5
  // Predicated region
  $region2: #{bottleneck_forward.5} parent=0 // pred_check
    _
  $region3: #{bottleneck_forward.5} parent=0 // pred_check_branch
    %10 = sbr.rel (0) target = $region5
  $region4: #{bottleneck_forward.5} parent=0 // pred_region
    _
  $region5: #{bottleneck_forward.5} parent=0 // pred_fallthru
    _
  // Predicated region
  $region6: #{bottleneck_forward.5} parent=0 // pred_check
    _
  $region7: #{bottleneck_forward.5} parent=0 // pred_check_branch
    %12 = sbr.rel (0) target = $region9
  $region8: #{bottleneck_forward.5} parent=0 // pred_region
    _
  $region9: #{bottleneck_forward.5} parent=0 // pred_fallthru
    _
  %v13 = vld [vmem:[%s0] sm:$0xff]
  %v14 = vld [vmem:[%s0 + $0x8] sm:$0xff]
  %v15 = vld [vmem:[%s0 + $0x10] sm:$0xff]
  %v16 = vld [vmem:[%s0 + $0x18] sm:$0xff]
  %v17 = vld [vmem:[%s0 + $0x20] sm:$0xff]
  %v18 = vld [vmem:[%s0 + $0x28] sm:$0xff]
  %v19 = vld [vmem:[%s0 + $0x30] sm:$0xff]
  %v20 = vld [vmem:[%s0 + $0x38] sm:$0xff]
  %v21 = vld [vmem:[%s0 + $0x40] sm:$0xff]
  %v22 = vld [vmem:[%s0 + $0x48] sm:$0xff]
  %v23 = vld [vmem:[%s0 + $0x50] sm:$0xff]
  %v24 = vld [vmem:[%s0 + $0x58] sm:$0xff]
  %v25 = vld [vmem:[%s0 + $0x60] sm:$0xff]
  %v26 = vld [vmem:[%s0 + $0x68] sm:$0xff]
  %v27 = vld [vmem:[%s0 + $0x70] sm:$0xff]
  %v28 = vld [vmem:[%s0 + $0x78] sm:$0xff]
  %v29 = vld [vmem:[%s0 + $0x80] sm:$0xff]
  %v30 = vld [vmem:[%s0 + $0x88] sm:$0xff]
  %v31 = vld [vmem:[%s0 + $0x90] sm:$0xff]
  %v32 = vld [vmem:[%s0 + $0x98] sm:$0xff]
  %v33 = vld [vmem:[%s0 + $0xa0] sm:$0xff]
  %v34 = vld [vmem:[%s0 + $0xa8] sm:$0xff]
  %v35 = vld [vmem:[%s0 + $0xb0] sm:$0xff]
  %v36 = vld [vmem:[%s0 + $0xb8] sm:$0xff]
  %v37 = vld [vmem:[%s0 + $0xc0] sm:$0xff]
  %v38 = vld [vmem:[%s0 + $0xc8] sm:$0xff]
  %v39 = vld [vmem:[%s0 + $0xd0] sm:$0xff]
  %v40 = vld [vmem:[%s0 + $0xd8] sm:$0xff]
  %v41 = vld [vmem:[%s0 + $0xe0] sm:$0xff]
  %v42 = vld [vmem:[%s0 + $0xe8] sm:$0xff]
  %v43 = vld [vmem:[%s0 + $0xf0] sm:$0xff]
  %v44 = vld [vmem:[%s0 + $0xf8] sm:$0xff]
  %v45 = vld [vmem:[%s0 + $0x100] sm:$0xff]
  %v46 = vld [vmem:[%s0 + $0x108] sm:$0xff]
  %v47 = vld [vmem:[%s0 + $0x110] sm:$0xff]
  %v48 = vld [vmem:[%s0 + $0x118] sm:$0xff]
  %v49 = vld [vmem:[%s0 + $0x120] sm:$0xff]
  %v50 = vld [vmem:[%s0 + $0x128] sm:$0xff]
  %v51 = vld [vmem:[%s0 + $0x130] sm:$0xff]
  %v52 = vld [vmem:[%s0 + $0x138] sm:$0xff]
  %v53 = vld [vmem:[%s0 + $0x140] sm:$0xff]
  %v54 = vld [vmem:[%s0 + $0x148] sm:$0xff]
  %v55 = vld [vmem:[%s0 + $0x150] sm:$0xff]
  %v56 = vld [vmem:[%s0 + $0x158] sm:$0xff]
  %v57 = vld [vmem:[%s0 + $0x160] sm:$0xff]
  %v58 = vld [vmem:[%s0 + $0x168] sm:$0xff]
  %v59 = vld [vmem:[%s0 + $0x170] sm:$0xff]
  %v60 = vld [vmem:[%s0 + $0x178] sm:$0xff]
  %v61 = vld [vmem:[%s0 + $0x180] sm:$0xff]
  %v62 = vld [vmem:[%s0 + $0x188] sm:$0xff]
  %v63 = vld [vmem:[%s0 + $0x190] sm:$0xff]
  %v64 = vld [vmem:[%s0 + $0x198] sm:$0xff]
  %v65 = vld [vmem:[%s0 + $0x1a0] sm:$0xff]
  %v66 = vld [vmem:[%s0 + $0x1a8] sm:$0xff]
  %v67 = vld [vmem:[%s0 + $0x1b0] sm:$0xff]
  %v68 = vld [vmem:[%s0 + $0x1b8] sm:$0xff]
  %v69 = vld [vmem:[%s0 + $0x1c0] sm:$0xff]
  %v70 = vld [vmem:[%s0 + $0x1c8] sm:$0xff]
  %v71 = vld [vmem:[%s0 + $0x1d0] sm:$0xff]
  %v72 = vld [vmem:[%s0 + $0x1d8] sm:$0xff]
  %v73 = vld [vmem:[%s0 + $0x1e0] sm:$0xff]
  %v74 = vld [vmem:[%s0 + $0x1e8] sm:$0xff]
  %v75 = vld [vmem:[%s0 + $0x1f0] sm:$0xff]
  %v76 = vld [vmem:[%s0 + $0x1f8] sm:$0xff]
  %v77 = vld [vmem:[%s1] sm:$0xff]
  %v78 = vld [vmem:[%s1 + $0x8] sm:$0xff]
  %v79 = vld [vmem:[%s1 + $0x10] sm:$0xff]
  %v80 = vld [vmem:[%s1 + $0x18] sm:$0xff]
  %v81 = vld [vmem:[%s1 + $0x20] sm:$0xff]
  %v82 = vld [vmem:[%s1 + $0x28] sm:$0xff]
  %v83 = vld [vmem:[%s1 + $0x30] sm:$0xff]
  %v84 = vld [vmem:[%s1 + $0x38] sm:$0xff]
  %v85 = vld [vmem:[%s1 + $0x40] sm:$0xff]
  %v86 = vld [vmem:[%s1 + $0x48] sm:$0xff]
  %v87 = vld [vmem:[%s1 + $0x50] sm:$0xff]
  %v88 = vld [vmem:[%s1 + $0x58] sm:$0xff]
  %v89 = vld [vmem:[%s1 + $0x60] sm:$0xff]
  %v90 = vld [vmem:[%s1 + $0x68] sm:$0xff]
  %v91 = vld [vmem:[%s1 + $0x70] sm:$0xff]
  %v92 = vld [vmem:[%s1 + $0x78] sm:$0xff]
  %93 = vmatprep.subr.mxu0 0.0
  %94 = vmatpush1.msra.mxu0 %v77
  %95 = vmatprep.subr.mxu0 0.0
  %96 = vmatpush1.msra.mxu0 %v78
  %97 = vmatprep.subr.mxu0 0.0
  %98 = vmatpush1.msra.mxu0 %v79
  %99 = vmatprep.subr.mxu0 0.0
  %100 = vmatpush1.msra.mxu0 %v80
  %101 = vmatprep.subr.mxu0 0.0
  %102 = vmatpush1.msra.mxu0 %v81
  %103 = vmatprep.subr.mxu0 0.0
  %104 = vmatpush1.msra.mxu0 %v82
  %105 = vmatprep.subr.mxu0 0.0
  %106 = vmatpush1.msra.mxu0 %v83
  %107 = vmatprep.subr.mxu0 0.0
  %108 = vmatpush1.msra.mxu0 %v84
  %109 = vmatprep.subr.mxu0 0.0
  %110 = vmatpush1.msra.mxu0 %v85
  %111 = vmatprep.subr.mxu0 0.0
  %112 = vmatpush1.msra.mxu0 %v86
  %113 = vmatprep.subr.mxu0 0.0
  %114 = vmatpush1.msra.mxu0 %v87
  %115 = vmatprep.subr.mxu0 0.0
  %116 = vmatpush1.msra.mxu0 %v88
  %117 = vmatprep.subr.mxu0 0.0
  %118 = vmatpush1.msra.mxu0 %v89
  %119 = vmatprep.subr.mxu0 0.0
  %120 = vmatpush1.msra.mxu0 %v90
  %121 = vmatprep.subr.mxu0 0.0
  %122 = vmatpush1.msra.mxu0 %v91
  %123 = vmatprep.subr.mxu0 0.0
  %124 = vmatpush1.msra.mxu0 %v92
  %125 = vmatprep.subr.mxu0 0.0
  %126 = vmatpush1.msra.mxu0 0.0
  %127 = vmatprep.subr.mxu0 0.0
  %128 = vmatpush1.msra.mxu0 0.0
  %129 = vmatprep.subr.mxu0 0.0
  %130 = vmatpush1.msra.mxu0 0.0
  %131 = vmatprep.subr.mxu0 0.0
  %132 = vmatpush1.msra.mxu0 0.0
  %133 = vmatprep.subr.mxu0 0.0
  %134 = vmatpush1.msra.mxu0 0.0
  %135 = vmatprep.subr.mxu0 0.0
  %136 = vmatpush1.msra.mxu0 0.0
  %137 = vmatprep.subr.mxu0 0.0
  %138 = vmatpush1.msra.mxu0 0.0
  %139 = vmatprep.subr.mxu0 0.0
  %140 = vmatpush1.msra.mxu0 0.0
  %141 = vmatprep.subr.mxu0 0.0
  %142 = vmatpush1.msra.mxu0 0.0
  %143 = vmatprep.subr.mxu0 0.0
  %144 = vmatpush1.msra.mxu0 0.0
  %145 = vmatprep.subr.mxu0 0.0
  %146 = vmatpush1.msra.mxu0 0.0
  %147 = vmatprep.subr.mxu0 0.0
  %148 = vmatpush1.msra.mxu0 0.0
  %149 = vmatprep.subr.mxu0 0.0
  %150 = vmatpush1.msra.mxu0 0.0
  %151 = vmatprep.subr.mxu0 0.0
  %152 = vmatpush1.msra.mxu0 0.0
  %153 = vmatprep.subr.mxu0 0.0
  %154 = vmatpush1.msra.mxu0 0.0
  %155 = vmatprep.subr.mxu0 0.0
  %156 = vmatpush1.msra.mxu0 0.0
  %157 = vmatprep.mubr.f32.mxu0 0.0
  %158 = vmatmul.mubr.f32.gmra.mrb[0].mxu0 %v13
  %v159 = vpop.f32.mrb[0].mxu0
  %v160 = vadd.f32 0.0, %v159
  %v161 = vpop.f32.mrb[0].mxu0
  %162 = vmatprep.mubr.f32.mxu0 0.0
  %163 = vmatmul.mubr.f32.gmra.mrb[0].mxu0 %v14
  %v164 = vpop.f32.mrb[0].mxu0
  %v165 = vadd.f32 0.0, %v164
  %v166 = vpop.f32.mrb[0].mxu0
  %167 = vmatprep.mubr.f32.mxu0 0.0
  %168 = vmatmul.mubr.f32.gmra.mrb[0].mxu0 %v15
  %v169 = vpop.f32.mrb[0].mxu0
  %v170 = vadd.f32 0.0, %v169
  %v171 = vpop.f32.mrb[0].mxu0
  %172 = vmatprep.mubr.f32.mxu0 0.0
  %173 = vmatmul.mubr.f32.gmra.mrb[0].mxu0 %v16
  %v174 = vpop.f32.mrb[0].mxu0
  %v175 = vadd.f32 0.0, %v174
  %v176 = vpop.f32.mrb[0].mxu0
  %177 = vmatprep.mubr.f32.mxu0 0.0
  %178 = vmatmul.mubr.f32.gmra.mrb[0].mxu0 %v17
  %v179 = vpop.f32.mrb[0].mxu0
  %v180 = vadd.f32 0.0, %v179
  %v181 = vpop.f32.mrb[0].mxu0
  %182 = vmatprep.mubr.f32.mxu0 0.0
  %183 = vmatmul.mubr.f32.gmra.mrb[0].mxu0 %v18
  %v184 = vpop.f32.mrb[0].mxu0
  %v185 = vadd.f32 0.0, %v184
  %v186 = vpop.f32.mrb[0].mxu0
  %187 = vmatprep.mubr.f32.mxu0 0.0
  %188 = vmatmul.mubr.f32.gmra.mrb[0].mxu0 %v19
  %v189 = vpop.f32.mrb[0].mxu0
  %v190 = vadd.f32 0.0, %v189
  %v191 = vpop.f32.mrb[0].mxu0
  %192 = vmatprep.mubr.f32.mxu0 0.0
  %193 = vmatmul.mubr.f32.gmra.mrb[0].mxu0 %v20
  %v194 = vpop.f32.mrb[0].mxu0
  %v195 = vadd.f32 0.0, %v194
  %v196 = vpop.f32.mrb[0].mxu0
  %197 = vmatprep.mubr.f32.mxu0 0.0
  %198 = vmatmul.mubr.f32.gmra.mrb[0].mxu0 %v21
  %v199 = vpop.f32.mrb[0].mxu0
  %v200 = vadd.f32 0.0, %v199
  %v201 = vpop.f32.mrb[0].mxu0
  %202 = vmatprep.mubr.f32.mxu0 0.0
  %203 = vmatmul.mubr.f32.gmra.mrb[0].mxu0 %v22
  %v204 = vpop.f32.mrb[0].mxu0
  %v205 = vadd.f32 0.0, %v204
  %v206 = vpop.f32.mrb[0].mxu0
  %207 = vmatprep.mubr.f32.mxu0 0.0
  %208 = vmatmul.mubr.f32.gmra.mrb[0].mxu0 %v23
  %v209 = vpop.f32.mrb[0].mxu0
  %v210 = vadd.f32 0.0, %v209
  %v211 = vpop.f32.mrb[0].mxu0
  %212 = vmatprep.mubr.f32.mxu0 0.0
  %213 = vmatmul.mubr.f32.gmra.mrb[0].mxu0 %v24
  %v214 = vpop.f32.mrb[0].mxu0
  %v215 = vadd.f32 0.0, %v214
  %v216 = vpop.f32.mrb[0].mxu0
  %217 = vmatprep.mubr.f32.mxu0 0.0
  %218 = vmatmul.mubr.f32.gmra.mrb[0].mxu0 %v25
  %v219 = vpop.f32.mrb[0].mxu0
  %v220 = vadd.f32 0.0, %v219
  %v221 = vpop.f32.mrb[0].mxu0
  %222 = vmatprep.mubr.f32.mxu0 0.0
  %223 = vmatmul.mubr.f32.gmra.mrb[0].mxu0 %v26
  %v224 = vpop.f32.mrb[0].mxu0
  %v225 = vadd.f32 0.0, %v224
  %v226 = vpop.f32.mrb[0].mxu0
  %227 = vmatprep.mubr.f32.mxu0 0.0
  %228 = vmatmul.mubr.f32.gmra.mrb[0].mxu0 %v27
  %v229 = vpop.f32.mrb[0].mxu0
  %v230 = vadd.f32 0.0, %v229
  %v231 = vpop.f32.mrb[0].mxu0
  %232 = vmatprep.mubr.f32.mxu0 0.0
  %233 = vmatmul.mubr.f32.gmra.mrb[0].mxu0 %v28
  %v234 = vpop.f32.mrb[0].mxu0
  %v235 = vadd.f32 0.0, %v234
  %v236 = vpop.f32.mrb[0].mxu0
  %237 = vmatprep.mubr.f32.mxu0 0.0
  %238 = vmatmul.mubr.f32.gmra.mrb[0].mxu0 %v29
  %v239 = vpop.f32.mrb[0].mxu0
  %v240 = vadd.f32 0.0, %v239
  %v241 = vpop.f32.mrb[0].mxu0
  %242 = vmatprep.mubr.f32.mxu0 0.0
  %243 = vmatmul.mubr.f32.gmra.mrb[0].mxu0 %v30
  %v244 = vpop.f32.mrb[0].mxu0
  %v245 = vadd.f32 0.0, %v244
  %v246 = vpop.f32.mrb[0].mxu0
  %247 = vmatprep.mubr.f32.mxu0 0.0
  %248 = vmatmul.mubr.f32.gmra.mrb[0].mxu0 %v31
  %v249 = vpop.f32.mrb[0].mxu0
  %v250 = vadd.f32 0.0, %v249
  %v251 = vpop.f32.mrb[0].mxu0
  %252 = vmatprep.mubr.f32.mxu0 0.0
  %253 = vmatmul.mubr.f32.gmra.mrb[0].mxu0 %v32
  %v254 = vpop.f32.mrb[0].mxu0
  %v255 = vadd.f32 0.0, %v254
  %v256 = vpop.f32.mrb[0].mxu0
  %257 = vmatprep.mubr.f32.mxu0 0.0
  %258 = vmatmul.mubr.f32.gmra.mrb[0].mxu0 %v33
  %v259 = vpop.f32.mrb[0].mxu0
  %v260 = vadd.f32 0.0, %v259
  %v261 = vpop.f32.mrb[0].mxu0
  %262 = vmatprep.mubr.f32.mxu0 0.0
  %263 = vmatmul.mubr.f32.gmra.mrb[0].mxu0 %v34
  %v264 = vpop.f32.mrb[0].mxu0
  %v265 = vadd.f32 0.0, %v264
  %v266 = vpop.f32.mrb[0].mxu0
  %267 = vmatprep.mubr.f32.mxu0 0.0
  %268 = vmatmul.mubr.f32.gmra.mrb[0].mxu0 %v35
  %v269 = vpop.f32.mrb[0].mxu0
  %v270 = vadd.f32 0.0, %v269
  %v271 = vpop.f32.mrb[0].mxu0
  %272 = vmatprep.mubr.f32.mxu0 0.0
  %273 = vmatmul.mubr.f32.gmra.mrb[0].mxu0 %v36
  %v274 = vpop.f32.mrb[0].mxu0
  %v275 = vadd.f32 0.0, %v274
  %v276 = vpop.f32.mrb[0].mxu0
  %277 = vmatprep.mubr.f32.mxu0 0.0
  %278 = vmatmul.mubr.f32.gmra.mrb[0].mxu0 %v37
  %v279 = vpop.f32.mrb[0].mxu0
  %v280 = vadd.f32 0.0, %v279
  %v281 = vpop.f32.mrb[0].mxu0
  %282 = vmatprep.mubr.f32.mxu0 0.0
  %283 = vmatmul.mubr.f32.gmra.mrb[0].mxu0 %v38
  %v284 = vpop.f32.mrb[0].mxu0
  %v285 = vadd.f32 0.0, %v284
  %v286 = vpop.f32.mrb[0].mxu0
  %287 = vmatprep.mubr.f32.mxu0 0.0
  %288 = vmatmul.mubr.f32.gmra.mrb[0].mxu0 %v39
  %v289 = vpop.f32.mrb[0].mxu0
  %v290 = vadd.f32 0.0, %v289
  %v291 = vpop.f32.mrb[0].mxu0
  %292 = vmatprep.mubr.f32.mxu0 0.0
  %293 = vmatmul.mubr.f32.gmra.mrb[0].mxu0 %v40
  %v294 = vpop.f32.mrb[0].mxu0
  %v295 = vadd.f32 0.0, %v294
  %v296 = vpop.f32.mrb[0].mxu0
  %297 = vmatprep.mubr.f32.mxu0 0.0
  %298 = vmatmul.mubr.f32.gmra.mrb[0].mxu0 %v41
  %v299 = vpop.f32.mrb[0].mxu0
  %v300 = vadd.f32 0.0, %v299
  %v301 = vpop.f32.mrb[0].mxu0
  %302 = vmatprep.mubr.f32.mxu0 0.0
  %303 = vmatmul.mubr.f32.gmra.mrb[0].mxu0 %v42
  %v304 = vpop.f32.mrb[0].mxu0
  %v305 = vadd.f32 0.0, %v304
  %v306 = vpop.f32.mrb[0].mxu0
  %307 = vmatprep.mubr.f32.mxu0 0.0
  %308 = vmatmul.mubr.f32.gmra.mrb[0].mxu0 %v43
  %v309 = vpop.f32.mrb[0].mxu0
  %v310 = vadd.f32 0.0, %v309
  %v311 = vpop.f32.mrb[0].mxu0
  %312 = vmatprep.mubr.f32.mxu0 0.0
  %313 = vmatmul.mubr.f32.gmra.mrb[0].mxu0 %v44
  %v314 = vpop.f32.mrb[0].mxu0
  %v315 = vadd.f32 0.0, %v314
  %v316 = vpop.f32.mrb[0].mxu0
  %317 = vmatprep.mubr.f32.mxu0 0.0
  %318 = vmatmul.mubr.f32.gmra.mrb[0].mxu0 %v45
  %v319 = vpop.f32.mrb[0].mxu0
  %v320 = vadd.f32 0.0, %v319
  %v321 = vpop.f32.mrb[0].mxu0
  %322 = vmatprep.mubr.f32.mxu0 0.0
  %323 = vmatmul.mubr.f32.gmra.mrb[0].mxu0 %v46
  %v324 = vpop.f32.mrb[0].mxu0
  %v325 = vadd.f32 0.0, %v324
  %v326 = vpop.f32.mrb[0].mxu0
  %327 = vmatprep.mubr.f32.mxu0 0.0
  %328 = vmatmul.mubr.f32.gmra.mrb[0].mxu0 %v47
  %v329 = vpop.f32.mrb[0].mxu0
  %v330 = vadd.f32 0.0, %v329
  %v331 = vpop.f32.mrb[0].mxu0
  %332 = vmatprep.mubr.f32.mxu0 0.0
  %333 = vmatmul.mubr.f32.gmra.mrb[0].mxu0 %v48
  %v334 = vpop.f32.mrb[0].mxu0
  %v335 = vadd.f32 0.0, %v334
  %v336 = vpop.f32.mrb[0].mxu0
  %337 = vmatprep.mubr.f32.mxu0 0.0
  %338 = vmatmul.mubr.f32.gmra.mrb[0].mxu0 %v49
  %v339 = vpop.f32.mrb[0].mxu0
  %v340 = vadd.f32 0.0, %v339
  %v341 = vpop.f32.mrb[0].mxu0
  %342 = vmatprep.mubr.f32.mxu0 0.0
  %343 = vmatmul.mubr.f32.gmra.mrb[0].mxu0 %v50
  %v344 = vpop.f32.mrb[0].mxu0
  %v345 = vadd.f32 0.0, %v344
  %v346 = vpop.f32.mrb[0].mxu0
  %347 = vmatprep.mubr.f32.mxu0 0.0
  %348 = vmatmul.mubr.f32.gmra.mrb[0].mxu0 %v51
  %v349 = vpop.f32.mrb[0].mxu0
  %v350 = vadd.f32 0.0, %v349
  %v351 = vpop.f32.mrb[0].mxu0
  %352 = vmatprep.mubr.f32.mxu0 0.0
  %353 = vmatmul.mubr.f32.gmra.mrb[0].mxu0 %v52
  %v354 = vpop.f32.mrb[0].mxu0
  %v355 = vadd.f32 0.0, %v354
  %v356 = vpop.f32.mrb[0].mxu0
  %357 = vmatprep.mubr.f32.mxu0 0.0
  %358 = vmatmul.mubr.f32.gmra.mrb[0].mxu0 %v53
  %v359 = vpop.f32.mrb[0].mxu0
  %v360 = vadd.f32 0.0, %v359
  %v361 = vpop.f32.mrb[0].mxu0
  %362 = vmatprep.mubr.f32.mxu0 0.0
  %363 = vmatmul.mubr.f32.gmra.mrb[0].mxu0 %v54
  %v364 = vpop.f32.mrb[0].mxu0
  %v365 = vadd.f32 0.0, %v364
  %v366 = vpop.f32.mrb[0].mxu0
  %367 = vmatprep.mubr.f32.mxu0 0.0
  %368 = vmatmul.mubr.f32.gmra.mrb[0].mxu0 %v55
  %v369 = vpop.f32.mrb[0].mxu0
  %v370 = vadd.f32 0.0, %v369
  %v371 = vpop.f32.mrb[0].mxu0
  %372 = vmatprep.mubr.f32.mxu0 0.0
  %373 = vmatmul.mubr.f32.gmra.mrb[0].mxu0 %v56
  %v374 = vpop.f32.mrb[0].mxu0
  %v375 = vadd.f32 0.0, %v374
  %v376 = vpop.f32.mrb[0].mxu0
  %377 = vmatprep.mubr.f32.mxu0 0.0
  %378 = vmatmul.mubr.f32.gmra.mrb[0].mxu0 %v57
  %v379 = vpop.f32.mrb[0].mxu0
  %v380 = vadd.f32 0.0, %v379
  %v381 = vpop.f32.mrb[0].mxu0
  %382 = vmatprep.mubr.f32.mxu0 0.0
  %383 = vmatmul.mubr.f32.gmra.mrb[0].mxu0 %v58
  %v384 = vpop.f32.mrb[0].mxu0
  %v385 = vadd.f32 0.0, %v384
  %v386 = vpop.f32.mrb[0].mxu0
  %387 = vmatprep.mubr.f32.mxu0 0.0
  %388 = vmatmul.mubr.f32.gmra.mrb[0].mxu0 %v59
  %v389 = vpop.f32.mrb[0].mxu0
  %v390 = vadd.f32 0.0, %v389
  %v391 = vpop.f32.mrb[0].mxu0
  %392 = vmatprep.mubr.f32.mxu0 0.0
  %393 = vmatmul.mubr.f32.gmra.mrb[0].mxu0 %v60
  %v394 = vpop.f32.mrb[0].mxu0
  %v395 = vadd.f32 0.0, %v394
  %v396 = vpop.f32.mrb[0].mxu0
  %397 = vmatprep.mubr.f32.mxu0 0.0
  %398 = vmatmul.mubr.f32.gmra.mrb[0].mxu0 %v61
  %v399 = vpop.f32.mrb[0].mxu0
  %v400 = vadd.f32 0.0, %v399
  %v401 = vpop.f32.mrb[0].mxu0
  %402 = vmatprep.mubr.f32.mxu0 0.0
  %403 = vmatmul.mubr.f32.gmra.mrb[0].mxu0 %v62
  %v404 = vpop.f32.mrb[0].mxu0
  %v405 = vadd.f32 0.0, %v404
  %v406 = vpop.f32.mrb[0].mxu0
  %407 = vmatprep.mubr.f32.mxu0 0.0
  %408 = vmatmul.mubr.f32.gmra.mrb[0].mxu0 %v63
  %v409 = vpop.f32.mrb[0].mxu0
  %v410 = vadd.f32 0.0, %v409
  %v411 = vpop.f32.mrb[0].mxu0
  %412 = vmatprep.mubr.f32.mxu0 0.0
  %413 = vmatmul.mubr.f32.gmra.mrb[0].mxu0 %v64
  %v414 = vpop.f32.mrb[0].mxu0
  %v415 = vadd.f32 0.0, %v414
  %v416 = vpop.f32.mrb[0].mxu0
  %417 = vmatprep.mubr.f32.mxu0 0.0
  %418 = vmatmul.mubr.f32.gmra.mrb[0].mxu0 %v65
  %v419 = vpop.f32.mrb[0].mxu0
  %v420 = vadd.f32 0.0, %v419
  %v421 = vpop.f32.mrb[0].mxu0
  %422 = vmatprep.mubr.f32.mxu0 0.0
  %423 = vmatmul.mubr.f32.gmra.mrb[0].mxu0 %v66
  %v424 = vpop.f32.mrb[0].mxu0
  %v425 = vadd.f32 0.0, %v424
  %v426 = vpop.f32.mrb[0].mxu0
  %427 = vmatprep.mubr.f32.mxu0 0.0
  %428 = vmatmul.mubr.f32.gmra.mrb[0].mxu0 %v67
  %v429 = vpop.f32.mrb[0].mxu0
  %v430 = vadd.f32 0.0, %v429
  %v431 = vpop.f32.mrb[0].mxu0
  %432 = vmatprep.mubr.f32.mxu0 0.0
  %433 = vmatmul.mubr.f32.gmra.mrb[0].mxu0 %v68
  %v434 = vpop.f32.mrb[0].mxu0
  %v435 = vadd.f32 0.0, %v434
  %v436 = vpop.f32.mrb[0].mxu0
  %437 = vmatprep.mubr.f32.mxu0 0.0
  %438 = vmatmul.mubr.f32.gmra.mrb[0].mxu0 %v69
  %v439 = vpop.f32.mrb[0].mxu0
  %v440 = vadd.f32 0.0, %v439
  %v441 = vpop.f32.mrb[0].mxu0
  %442 = vmatprep.mubr.f32.mxu0 0.0
  %443 = vmatmul.mubr.f32.gmra.mrb[0].mxu0 %v70
  %v444 = vpop.f32.mrb[0].mxu0
  %v445 = vadd.f32 0.0, %v444
  %v446 = vpop.f32.mrb[0].mxu0
  %447 = vmatprep.mubr.f32.mxu0 0.0
  %448 = vmatmul.mubr.f32.gmra.mrb[0].mxu0 %v71
  %v449 = vpop.f32.mrb[0].mxu0
  %v450 = vadd.f32 0.0, %v449
  %v451 = vpop.f32.mrb[0].mxu0
  %452 = vmatprep.mubr.f32.mxu0 0.0
  %453 = vmatmul.mubr.f32.gmra.mrb[0].mxu0 %v72
  %v454 = vpop.f32.mrb[0].mxu0
  %v455 = vadd.f32 0.0, %v454
  %v456 = vpop.f32.mrb[0].mxu0
  %457 = vmatprep.mubr.f32.mxu0 0.0
  %458 = vmatmul.mubr.f32.gmra.mrb[0].mxu0 %v73
  %v459 = vpop.f32.mrb[0].mxu0
  %v460 = vadd.f32 0.0, %v459
  %v461 = vpop.f32.mrb[0].mxu0
  %462 = vmatprep.mubr.f32.mxu0 0.0
  %463 = vmatmul.mubr.f32.gmra.mrb[0].mxu0 %v74
  %v464 = vpop.f32.mrb[0].mxu0
  %v465 = vadd.f32 0.0, %v464
  %v466 = vpop.f32.mrb[0].mxu0
  %467 = vmatprep.mubr.f32.mxu0 0.0
  %468 = vmatmul.mubr.f32.gmra.mrb[0].mxu0 %v75
  %v469 = vpop.f32.mrb[0].mxu0
  %v470 = vadd.f32 0.0, %v469
  %v471 = vpop.f32.mrb[0].mxu0
  %472 = vmatprep.mubr.f32.mxu0 0.0
  %473 = vmatmul.mubr.f32.gmra.mrb[0].mxu0 %v76
  %v474 = vpop.f32.mrb[0].mxu0
  %v475 = vadd.f32 0.0, %v474
  %v476 = vpop.f32.mrb[0].mxu0
  %477 = vdwg.mxu0
  %478 = vst [vmem:[%s2] sm:$0xff] %v160
  %479 = vst [vmem:[%s2 + $0x8] sm:$0xff] %v165
  %480 = vst [vmem:[%s2 + $0x10] sm:$0xff] %v170
  %481 = vst [vmem:[%s2 + $0x18] sm:$0xff] %v175
  %482 = vst [vmem:[%s2 + $0x20] sm:$0xff] %v180
  %483 = vst [vmem:[%s2 + $0x28] sm:$0xff] %v185
  %484 = vst [vmem:[%s2 + $0x30] sm:$0xff] %v190
  %485 = vst [vmem:[%s2 + $0x38] sm:$0xff] %v195
  %486 = vst [vmem:[%s2 + $0x40] sm:$0xff] %v200
  %487 = vst [vmem:[%s2 + $0x48] sm:$0xff] %v205
  %488 = vst [vmem:[%s2 + $0x50] sm:$0xff] %v210
  %489 = vst [vmem:[%s2 + $0x58] sm:$0xff] %v215
  %490 = vst [vmem:[%s2 + $0x60] sm:$0xff] %v220
  %491 = vst [vmem:[%s2 + $0x68] sm:$0xff] %v225
  %492 = vst [vmem:[%s2 + $0x70] sm:$0xff] %v230
  %493 = vst [vmem:[%s2 + $0x78] sm:$0xff] %v235
  %494 = vst [vmem:[%s2 + $0x80] sm:$0xff] %v240
  %495 = vst [vmem:[%s2 + $0x88] sm:$0xff] %v245
  %496 = vst [vmem:[%s2 + $0x90] sm:$0xff] %v250
  %497 = vst [vmem:[%s2 + $0x98] sm:$0xff] %v255
  %498 = vst [vmem:[%s2 + $0xa0] sm:$0xff] %v260
  %499 = vst [vmem:[%s2 + $0xa8] sm:$0xff] %v265
  %500 = vst [vmem:[%s2 + $0xb0] sm:$0xff] %v270
  %501 = vst [vmem:[%s2 + $0xb8] sm:$0xff] %v275
  %502 = vst [vmem:[%s2 + $0xc0] sm:$0xff] %v280
  %503 = vst [vmem:[%s2 + $0xc8] sm:$0xff] %v285
  %504 = vst [vmem:[%s2 + $0xd0] sm:$0xff] %v290
  %505 = vst [vmem:[%s2 + $0xd8] sm:$0xff] %v295
  %506 = vst [vmem:[%s2 + $0xe0] sm:$0xff] %v300
  %507 = vst [vmem:[%s2 + $0xe8] sm:$0xff] %v305
  %508 = vst [vmem:[%s2 + $0xf0] sm:$0xff] %v310
  %509 = vst [vmem:[%s2 + $0xf8] sm:$0xff] %v315
  %510 = vst [vmem:[%s2 + $0x100] sm:$0xff] %v320
  %511 = vst [vmem:[%s2 + $0x108] sm:$0xff] %v325
  %512 = vst [vmem:[%s2 + $0x110] sm:$0xff] %v330
  %513 = vst [vmem:[%s2 + $0x118] sm:$0xff] %v335
  %514 = vst [vmem:[%s2 + $0x120] sm:$0xff] %v340
  %515 = vst [vmem:[%s2 + $0x128] sm:$0xff] %v345
  %516 = vst [vmem:[%s2 + $0x130] sm:$0xff] %v350
  %517 = vst [vmem:[%s2 + $0x138] sm:$0xff] %v355
  %518 = vst [vmem:[%s2 + $0x140] sm:$0xff] %v360
  %519 = vst [vmem:[%s2 + $0x148] sm:$0xff] %v365
  %520 = vst [vmem:[%s2 + $0x150] sm:$0xff] %v370
  %521 = vst [vmem:[%s2 + $0x158] sm:$0xff] %v375
  %522 = vst [vmem:[%s2 + $0x160] sm:$0xff] %v380
  %523 = vst [vmem:[%s2 + $0x168] sm:$0xff] %v385
  %524 = vst [vmem:[%s2 + $0x170] sm:$0xff] %v390
  %525 = vst [vmem:[%s2 + $0x178] sm:$0xff] %v395
  %526 = vst [vmem:[%s2 + $0x180] sm:$0xff] %v400
  %527 = vst [vmem:[%s2 + $0x188] sm:$0xff] %v405
  %528 = vst [vmem:[%s2 + $0x190] sm:$0xff] %v410
  %529 = vst [vmem:[%s2 + $0x198] sm:$0xff] %v415
  %530 = vst [vmem:[%s2 + $0x1a0] sm:$0xff] %v420
  %531 = vst [vmem:[%s2 + $0x1a8] sm:$0xff] %v425
  %532 = vst [vmem:[%s2 + $0x1b0] sm:$0xff] %v430
  %533 = vst [vmem:[%s2 + $0x1b8] sm:$0xff] %v435
  %534 = vst [vmem:[%s2 + $0x1c0] sm:$0xff] %v440
  %535 = vst [vmem:[%s2 + $0x1c8] sm:$0xff] %v445
  %536 = vst [vmem:[%s2 + $0x1d0] sm:$0xff] %v450
  %537 = vst [vmem:[%s2 + $0x1d8] sm:$0xff] %v455
  %538 = vst [vmem:[%s2 + $0x1e0] sm:$0xff] %v460
  %539 = vst [vmem:[%s2 + $0x1e8] sm:$0xff] %v465
  %540 = vst [vmem:[%s2 + $0x1f0] sm:$0xff] %v470
  %541 = vst [vmem:[%s2 + $0x1f8] sm:$0xff] %v475
  %v542 = vadd.f32 %v160, %v165
  %v543 = vadd.f32 %v542, %v170
  %v544 = vadd.f32 %v543, %v175
  %v545 = vadd.f32 %v544, %v180
  %v546 = vadd.f32 %v545, %v185
  %v547 = vadd.f32 %v546, %v190
  %v548 = vadd.f32 %v547, %v195
  %v549 = vadd.f32 %v548, %v200
  %v550 = vadd.f32 %v549, %v205
  %v551 = vadd.f32 %v550, %v210
  %v552 = vadd.f32 %v551, %v215
  %v553 = vadd.f32 %v552, %v220
  %v554 = vadd.f32 %v553, %v225
  %v555 = vadd.f32 %v554, %v230
  %v556 = vadd.f32 %v555, %v235
  %v557 = vadd.f32 %v556, %v240
  %v558 = vadd.f32 %v557, %v245
  %v559 = vadd.f32 %v558, %v250
  %v560 = vadd.f32 %v559, %v255
  %v561 = vadd.f32 %v560, %v260
  %v562 = vadd.f32 %v561, %v265
  %v563 = vadd.f32 %v562, %v270
  %v564 = vadd.f32 %v563, %v275
  %v565 = vadd.f32 %v564, %v280
  %v566 = vadd.f32 %v565, %v285
  %v567 = vadd.f32 %v566, %v290
  %v568 = vadd.f32 %v567, %v295
  %v569 = vadd.f32 %v568, %v300
  %v570 = vadd.f32 %v569, %v305
  %v571 = vadd.f32 %v570, %v310
  %v572 = vadd.f32 %v571, %v315
  %v573 = vadd.f32 %v572, %v320
  %v574 = vadd.f32 %v573, %v325
  %v575 = vadd.f32 %v574, %v330
  %v576 = vadd.f32 %v575, %v335
  %v577 = vadd.f32 %v576, %v340
  %v578 = vadd.f32 %v577, %v345
  %v579 = vadd.f32 %v578, %v350
  %v580 = vadd.f32 %v579, %v355
  %v581 = vadd.f32 %v580, %v360
  %v582 = vadd.f32 %v581, %v365
  %v583 = vadd.f32 %v582, %v370
  %v584 = vadd.f32 %v583, %v375
  %v585 = vadd.f32 %v584, %v380
  %v586 = vadd.f32 %v585, %v385
  %v587 = vadd.f32 %v586, %v390
  %v588 = vadd.f32 %v587, %v395
  %v589 = vadd.f32 %v588, %v400
  %v590 = vadd.f32 %v589, %v405
  %v591 = vadd.f32 %v590, %v410
  %v592 = vadd.f32 %v591, %v415
  %v593 = vadd.f32 %v592, %v420
  %v594 = vadd.f32 %v593, %v425
  %v595 = vadd.f32 %v594, %v430
  %v596 = vadd.f32 %v595, %v435
  %v597 = vadd.f32 %v596, %v440
  %v598 = vadd.f32 %v597, %v445
  %v599 = vadd.f32 %v598, %v450
  %v600 = vadd.f32 %v599, %v455
  %v601 = vadd.f32 %v600, %v460
  %v602 = vadd.f32 %v601, %v465
  %v603 = vadd.f32 %v602, %v470
  %v604 = vadd.f32 %v603, %v475
  %v605 = vrot.slane %v604, 4
  %v606 = vadd.f32 %v604, %v605
  %v607 = vrot.slane %v606, 2
  %v608 = vadd.f32 %v606, %v607
  %v609 = vrot.slane %v608, 1
  %v610 = vadd.f32 %v608, %v609
  %v611 = vmul.f32 %v160, %v160
  %v612 = vmul.f32 %v165, %v165
  %v613 = vmul.f32 %v170, %v170
  %v614 = vmul.f32 %v175, %v175
  %v615 = vmul.f32 %v180, %v180
  %v616 = vmul.f32 %v185, %v185
  %v617 = vmul.f32 %v190, %v190
  %v618 = vmul.f32 %v195, %v195
  %v619 = vmul.f32 %v200, %v200
  %v620 = vmul.f32 %v205, %v205
  %v621 = vmul.f32 %v210, %v210
  %v622 = vmul.f32 %v215, %v215
  %v623 = vmul.f32 %v220, %v220
  %v624 = vmul.f32 %v225, %v225
  %v625 = vmul.f32 %v230, %v230
  %v626 = vmul.f32 %v235, %v235
  %v627 = vmul.f32 %v240, %v240
  %v628 = vmul.f32 %v245, %v245
  %v629 = vmul.f32 %v250, %v250
  %v630 = vmul.f32 %v255, %v255
  %v631 = vmul.f32 %v260, %v260
  %v632 = vmul.f32 %v265, %v265
  %v633 = vmul.f32 %v270, %v270
  %v634 = vmul.f32 %v275, %v275
  %v635 = vmul.f32 %v280, %v280
  %v636 = vmul.f32 %v285, %v285
  %v637 = vmul.f32 %v290, %v290
  %v638 = vmul.f32 %v295, %v295
  %v639 = vmul.f32 %v300, %v300
  %v640 = vmul.f32 %v305, %v305
  %v641 = vmul.f32 %v310, %v310
  %v642 = vmul.f32 %v315, %v315
  %v643 = vmul.f32 %v320, %v320
  %v644 = vmul.f32 %v325, %v325
  %v645 = vmul.f32 %v330, %v330
  %v646 = vmul.f32 %v335, %v335
  %v647 = vmul.f32 %v340, %v340
  %v648 = vmul.f32 %v345, %v345
  %v649 = vmul.f32 %v350, %v350
  %v650 = vmul.f32 %v355, %v355
  %v651 = vmul.f32 %v360, %v360
  %v652 = vmul.f32 %v365, %v365
  %v653 = vmul.f32 %v370, %v370
  %v654 = vmul.f32 %v375, %v375
  %v655 = vmul.f32 %v380, %v380
  %v656 = vmul.f32 %v385, %v385
  %v657 = vmul.f32 %v390, %v390
  %v658 = vmul.f32 %v395, %v395
  %v659 = vmul.f32 %v400, %v400
  %v660 = vmul.f32 %v405, %v405
  %v661 = vmul.f32 %v410, %v410
  %v662 = vmul.f32 %v415, %v415
  %v663 = vmul.f32 %v420, %v420
  %v664 = vmul.f32 %v425, %v425
  %v665 = vmul.f32 %v430, %v430
  %v666 = vmul.f32 %v435, %v435
  %v667 = vmul.f32 %v440, %v440
  %v668 = vmul.f32 %v445, %v445
  %v669 = vmul.f32 %v450, %v450
  %v670 = vmul.f32 %v455, %v455
  %v671 = vmul.f32 %v460, %v460
  %v672 = vmul.f32 %v465, %v465
  %v673 = vmul.f32 %v470, %v470
  %v674 = vmul.f32 %v475, %v475
  %v675 = vadd.f32 %v611, %v612
  %v676 = vadd.f32 %v675, %v613
  %v677 = vadd.f32 %v676, %v614
  %v678 = vadd.f32 %v677, %v615
  %v679 = vadd.f32 %v678, %v616
  %v680 = vadd.f32 %v679, %v617
  %v681 = vadd.f32 %v680, %v618
  %v682 = vadd.f32 %v681, %v619
  %v683 = vadd.f32 %v682, %v620
  %v684 = vadd.f32 %v683, %v621
  %v685 = vadd.f32 %v684, %v622
  %v686 = vadd.f32 %v685, %v623
  %v687 = vadd.f32 %v686, %v624
  %v688 = vadd.f32 %v687, %v625
  %v689 = vadd.f32 %v688, %v626
  %v690 = vadd.f32 %v689, %v627
  %v691 = vadd.f32 %v690, %v628
  %v692 = vadd.f32 %v691, %v629
  %v693 = vadd.f32 %v692, %v630
  %v694 = vadd.f32 %v693, %v631
  %v695 = vadd.f32 %v694, %v632
  %v696 = vadd.f32 %v695, %v633
  %v697 = vadd.f32 %v696, %v634
  %v698 = vadd.f32 %v697, %v635
  %v699 = vadd.f32 %v698, %v636
  %v700 = vadd.f32 %v699, %v637
  %v701 = vadd.f32 %v700, %v638
  %v702 = vadd.f32 %v701, %v639
  %v703 = vadd.f32 %v702, %v640
  %v704 = vadd.f32 %v703, %v641
  %v705 = vadd.f32 %v704, %v642
  %v706 = vadd.f32 %v705, %v643
  %v707 = vadd.f32 %v706, %v644
  %v708 = vadd.f32 %v707, %v645
  %v709 = vadd.f32 %v708, %v646
  %v710 = vadd.f32 %v709, %v647
  %v711 = vadd.f32 %v710, %v648
  %v712 = vadd.f32 %v711, %v649
  %v713 = vadd.f32 %v712, %v650
  %v714 = vadd.f32 %v713, %v651
  %v715 = vadd.f32 %v714, %v652
  %v716 = vadd.f32 %v715, %v653
  %v717 = vadd.f32 %v716, %v654
  %v718 = vadd.f32 %v717, %v655
  %v719 = vadd.f32 %v718, %v656
  %v720 = vadd.f32 %v719, %v657
  %v721 = vadd.f32 %v720, %v658
  %v722 = vadd.f32 %v721, %v659
  %v723 = vadd.f32 %v722, %v660
  %v724 = vadd.f32 %v723, %v661
  %v725 = vadd.f32 %v724, %v662
  %v726 = vadd.f32 %v725, %v663
  %v727 = vadd.f32 %v726, %v664
  %v728 = vadd.f32 %v727, %v665
  %v729 = vadd.f32 %v728, %v666
  %v730 = vadd.f32 %v729, %v667
  %v731 = vadd.f32 %v730, %v668
  %v732 = vadd.f32 %v731, %v669
  %v733 = vadd.f32 %v732, %v670
  %v734 = vadd.f32 %v733, %v671
  %v735 = vadd.f32 %v734, %v672
  %v736 = vadd.f32 %v735, %v673
  %v737 = vadd.f32 %v736, %v674
  %v738 = vrot.slane %v737, 4
  %v739 = vadd.f32 %v737, %v738
  %v740 = vrot.slane %v739, 2
  %v741 = vadd.f32 %v739, %v740
  %v742 = vrot.slane %v741, 1
  %v743 = vadd.f32 %v741, %v742
  %vm744 = vcmask 1040384
  %v745 = vsel %vm744, %v610, %v743
  %746 = vst [vmem:[%s3] sm:$0x3] %v745
  // Predicated region
  $region10: #{bottleneck_forward.5} parent=0 // pred_check
    _
  $region11: #{bottleneck_forward.5} parent=0 // pred_check_branch
    %748 = sbr.rel (0) target = $region13
  $region12: #{bottleneck_forward.5} parent=0 // pred_region
    _
  $region13: #{bottleneck_forward.5} parent=0 // pred_fallthru
    _
  // Predicated region
  $region14: #{bottleneck_forward.5} parent=0 // pred_check
    _
  $region15: #{bottleneck_forward.5} parent=0 // pred_check_branch
    %750 = sbr.rel (0) target = $region17
  $region16: #{bottleneck_forward.5} parent=0 // pred_region
    _
  $region17: #{bottleneck_forward.5} parent=0 // pred_fallthru
    _
  // Predicated region
  $region18: #{bottleneck_forward.5} parent=0 // pred_check
    _
  $region19: #{bottleneck_forward.5} parent=0 // pred_check_branch
    %752 = sbr.rel (0) target = $region21
  $region20: #{bottleneck_forward.5} parent=0 // pred_region
    _
  $region21: #{bottleneck_forward.5} parent=0 // pred_fallthru
    _
  // Predicated region
  $region22: #{bottleneck_forward.5} parent=0 // pred_check
    _
  $region23: #{bottleneck_forward.5} parent=0 // pred_check_branch
    %754 = sbr.rel (0) target = $region25
  $region24: #{bottleneck_forward.5} parent=0 // pred_region
    _
  $region25: #{bottleneck_forward.5} parent=0 // pred_fallthru
    _

// kernel: bottleneck_forward.7
$region0: #{bottleneck_forward.7}
  #allocation0 [shape = 'u32[]', space=smem, size = 0x4, offset = 0x4, fixed_abs, tag = 'smem constant byte address 0x4 - core index']
  #allocation1 [shape = 'u32[144,128]{1,0:T(1,128)}', space=vmem, size = 0x12000, scoped, tag = 'internal scratch']
  %s0 = inlined_call_operand.vmem [shape: f32[128,128], index: 0, kind: input, shape index: {}]
  %s1 = inlined_call_operand.vmem [shape: f32[128,128], index: 1, kind: input, shape index: {}]
  %s2 = inlined_call_operand.vmem [shape: f32[1,128], index: 2, kind: input, shape index: {}]
  %s3 = inlined_call_operand.vmem [shape: f32[1,128], index: 3, kind: input, shape index: {}]
  %s4 = inlined_call_operand.vmem [shape: f32[128,128], index: 4, kind: output, shape index: {0}]
  %s5 = inlined_call_operand.vmem [shape: f32[1,2,128], index: 5, kind: output, shape index: {1}]
  %6 = xla_tuple %s4, %s5
  %s7 = sld [smem:[#allocation0]]
  $region34: #{bottleneck_forward.7} parent=0
    _
  %s9 = ssub.s32 1, %s7
  %s10 = scalar_select 0, %s9, %s7
  // Predicated region
  $region2: #{bottleneck_forward.7} parent=0 // pred_check
    _
  $region3: #{bottleneck_forward.7} parent=0 // pred_check_branch
    %12 = sbr.rel (0) target = $region5
  $region4: #{bottleneck_forward.7} parent=0 // pred_region
    _
  $region5: #{bottleneck_forward.7} parent=0 // pred_fallthru
    _
  // Predicated region
  $region6: #{bottleneck_forward.7} parent=0 // pred_check
    _
  $region7: #{bottleneck_forward.7} parent=0 // pred_check_branch
    %14 = sbr.rel (0) target = $region9
  $region8: #{bottleneck_forward.7} parent=0 // pred_region
    _
  $region9: #{bottleneck_forward.7} parent=0 // pred_fallthru
    _
  // Predicated region
  $region10: #{bottleneck_forward.7} parent=0 // pred_check
    _
  $region11: #{bottleneck_forward.7} parent=0 // pred_check_branch
    %16 = sbr.rel (0) target = $region13
  $region12: #{bottleneck_forward.7} parent=0 // pred_region
    _
  $region13: #{bottleneck_forward.7} parent=0 // pred_fallthru
    _
  // Predicated region
  $region14: #{bottleneck_forward.7} parent=0 // pred_check
    _
  $region15: #{bottleneck_forward.7} parent=0 // pred_check_branch
    %18 = sbr.rel (0) target = $region17
  $region16: #{bottleneck_forward.7} parent=0 // pred_region
    _
  $region17: #{bottleneck_forward.7} parent=0 // pred_fallthru
    _
  %v19 = vld [vmem:[%s0] sm:$0xff]
  %v20 = vld [vmem:[%s0 + $0x8] sm:$0xff]
  %v21 = vld [vmem:[%s0 + $0x10] sm:$0xff]
  %v22 = vld [vmem:[%s0 + $0x18] sm:$0xff]
  %v23 = vld [vmem:[%s0 + $0x20] sm:$0xff]
  %v24 = vld [vmem:[%s0 + $0x28] sm:$0xff]
  %v25 = vld [vmem:[%s0 + $0x30] sm:$0xff]
  %v26 = vld [vmem:[%s0 + $0x38] sm:$0xff]
  %v27 = vld [vmem:[%s0 + $0x40] sm:$0xff]
  %v28 = vld [vmem:[%s0 + $0x48] sm:$0xff]
  %v29 = vld [vmem:[%s0 + $0x50] sm:$0xff]
  %v30 = vld [vmem:[%s0 + $0x58] sm:$0xff]
  %v31 = vld [vmem:[%s0 + $0x60] sm:$0xff]
  %v32 = vld [vmem:[%s0 + $0x68] sm:$0xff]
  %v33 = vld [vmem:[%s0 + $0x70] sm:$0xff]
  %v34 = vld [vmem:[%s0 + $0x78] sm:$0xff]
  %v35 = vld [vmem:[%s2] sm:$0x1]
  %v37 = vlaneseq
  %v38 = vshrl.u32 %v37, 7
  %v39 = vsub.s32 0, %v38
  %v40 = vrot.slane %v35, %v39
  %v42 = vmul.f32 %v19, %v40
  %v43 = vmul.f32 %v20, %v40
  %v44 = vmul.f32 %v21, %v40
  %v45 = vmul.f32 %v22, %v40
  %v46 = vmul.f32 %v23, %v40
  %v47 = vmul.f32 %v24, %v40
  %v48 = vmul.f32 %v25, %v40
  %v49 = vmul.f32 %v26, %v40
  %v50 = vmul.f32 %v27, %v40
  %v51 = vmul.f32 %v28, %v40
  %v52 = vmul.f32 %v29, %v40
  %v53 = vmul.f32 %v30, %v40
  %v54 = vmul.f32 %v31, %v40
  %v55 = vmul.f32 %v32, %v40
  %v56 = vmul.f32 %v33, %v40
  %v57 = vmul.f32 %v34, %v40
  %v58 = vld [vmem:[%s3] sm:$0x1]
  %v60 = vlaneseq
  %v61 = vshrl.u32 %v60, 7
  %v62 = vsub.s32 0, %v61
  %v63 = vrot.slane %v58, %v62
  %v65 = vadd.f32 %v42, %v63
  %v66 = vadd.f32 %v43, %v63
  %v67 = vadd.f32 %v44, %v63
  %v68 = vadd.f32 %v45, %v63
  %v69 = vadd.f32 %v46, %v63
  %v70 = vadd.f32 %v47, %v63
  %v71 = vadd.f32 %v48, %v63
  %v72 = vadd.f32 %v49, %v63
  %v73 = vadd.f32 %v50, %v63
  %v74 = vadd.f32 %v51, %v63
  %v75 = vadd.f32 %v52, %v63
  %v76 = vadd.f32 %v53, %v63
  %v77 = vadd.f32 %v54, %v63
  %v78 = vadd.f32 %v55, %v63
  %v79 = vadd.f32 %v56, %v63
  %v80 = vadd.f32 %v57, %v63
  %v81 = vmax.f32 %v65, 0.0
  %v82 = vmax.f32 %v66, 0.0
  %v83 = vmax.f32 %v67, 0.0
  %v84 = vmax.f32 %v68, 0.0
  %v85 = vmax.f32 %v69, 0.0
  %v86 = vmax.f32 %v70, 0.0
  %v87 = vmax.f32 %v71, 0.0
  %v88 = vmax.f32 %v72, 0.0
  %v89 = vmax.f32 %v73, 0.0
  %v90 = vmax.f32 %v74, 0.0
  %v91 = vmax.f32 %v75, 0.0
  %v92 = vmax.f32 %v76, 0.0
  %v93 = vmax.f32 %v77, 0.0
  %v94 = vmax.f32 %v78, 0.0
  %v95 = vmax.f32 %v79, 0.0
  %v96 = vmax.f32 %v80, 0.0
  %v97 = vld [vmem:[%s1] sm:$0xff]
  %v98 = vld [vmem:[%s1 + $0x8] sm:$0xff]
  %v99 = vld [vmem:[%s1 + $0x10] sm:$0xff]
  %v100 = vld [vmem:[%s1 + $0x18] sm:$0xff]
  %v101 = vld [vmem:[%s1 + $0x20] sm:$0xff]
  %v102 = vld [vmem:[%s1 + $0x28] sm:$0xff]
  %v103 = vld [vmem:[%s1 + $0x30] sm:$0xff]
  %v104 = vld [vmem:[%s1 + $0x38] sm:$0xff]
  %v105 = vld [vmem:[%s1 + $0x40] sm:$0xff]
  %v106 = vld [vmem:[%s1 + $0x48] sm:$0xff]
  %v107 = vld [vmem:[%s1 + $0x50] sm:$0xff]
  %v108 = vld [vmem:[%s1 + $0x58] sm:$0xff]
  %v109 = vld [vmem:[%s1 + $0x60] sm:$0xff]
  %v110 = vld [vmem:[%s1 + $0x68] sm:$0xff]
  %v111 = vld [vmem:[%s1 + $0x70] sm:$0xff]
  %v112 = vld [vmem:[%s1 + $0x78] sm:$0xff]
  %113 = vmatprep.subr.mxu0 0.0
  %114 = vmatpush1.msra.mxu0 %v97
  %115 = vmatprep.subr.mxu0 0.0
  %116 = vmatpush1.msra.mxu0 %v98
  %117 = vmatprep.subr.mxu0 0.0
  %118 = vmatpush1.msra.mxu0 %v99
  %119 = vmatprep.subr.mxu0 0.0
  %120 = vmatpush1.msra.mxu0 %v100
  %121 = vmatprep.subr.mxu0 0.0
  %122 = vmatpush1.msra.mxu0 %v101
  %123 = vmatprep.subr.mxu0 0.0
  %124 = vmatpush1.msra.mxu0 %v102
  %125 = vmatprep.subr.mxu0 0.0
  %126 = vmatpush1.msra.mxu0 %v103
  %127 = vmatprep.subr.mxu0 0.0
  %128 = vmatpush1.msra.mxu0 %v104
  %129 = vmatprep.subr.mxu0 0.0
  %130 = vmatpush1.msra.mxu0 %v105
  %131 = vmatprep.subr.mxu0 0.0
  %132 = vmatpush1.msra.mxu0 %v106
  %133 = vmatprep.subr.mxu0 0.0
  %134 = vmatpush1.msra.mxu0 %v107
  %135 = vmatprep.subr.mxu0 0.0
  %136 = vmatpush1.msra.mxu0 %v108
  %137 = vmatprep.subr.mxu0 0.0
  %138 = vmatpush1.msra.mxu0 %v109
  %139 = vmatprep.subr.mxu0 0.0
  %140 = vmatpush1.msra.mxu0 %v110
  %141 = vmatprep.subr.mxu0 0.0
  %142 = vmatpush1.msra.mxu0 %v111
  %143 = vmatprep.subr.mxu0 0.0
  %144 = vmatpush1.msra.mxu0 %v112
  %145 = vmatprep.subr.mxu0 0.0
  %146 = vmatpush1.msra.mxu0 0.0
  %147 = vmatprep.subr.mxu0 0.0
  %148 = vmatpush1.msra.mxu0 0.0
  %149 = vmatprep.subr.mxu0 0.0
  %150 = vmatpush1.msra.mxu0 0.0
  %151 = vmatprep.subr.mxu0 0.0
  %152 = vmatpush1.msra.mxu0 0.0
  %153 = vmatprep.subr.mxu0 0.0
  %154 = vmatpush1.msra.mxu0 0.0
  %155 = vmatprep.subr.mxu0 0.0
  %156 = vmatpush1.msra.mxu0 0.0
  %157 = vmatprep.subr.mxu0 0.0
  %158 = vmatpush1.msra.mxu0 0.0
  %159 = vmatprep.subr.mxu0 0.0
  %160 = vmatpush1.msra.mxu0 0.0
  %161 = vmatprep.subr.mxu0 0.0
  %162 = vmatpush1.msra.mxu0 0.0
  %163 = vmatprep.subr.mxu0 0.0
  %164 = vmatpush1.msra.mxu0 0.0
  %165 = vmatprep.subr.mxu0 0.0
  %166 = vmatpush1.msra.mxu0 0.0
  %167 = vmatprep.subr.mxu0 0.0
  %168 = vmatpush1.msra.mxu0 0.0
  %169 = vmatprep.subr.mxu0 0.0
  %170 = vmatpush1.msra.mxu0 0.0
  %171 = vmatprep.subr.mxu0 0.0
  %172 = vmatpush1.msra.mxu0 0.0
  %173 = vmatprep.subr.mxu0 0.0
  %174 = vmatpush1.msra.mxu0 0.0
  %175 = vmatprep.subr.mxu0 0.0
  %176 = vmatpush1.msra.mxu0 0.0
  %177 = vmatprep.mubr.f32.mxu0 0.0
  %178 = vmatmul.mubr.f32.gmra.mrb[0].mxu0 %v81
  %v179 = vpop.f32.mrb[0].mxu0
  %v180 = vadd.f32 0.0, %v179
  %v181 = vpop.f32.mrb[0].mxu0
  %182 = vmatprep.mubr.f32.mxu0 0.0
  %183 = vmatmul.mubr.f32.gmra.mrb[0].mxu0 %v82
  %v184 = vpop.f32.mrb[0].mxu0
  %v185 = vadd.f32 0.0, %v184
  %v186 = vpop.f32.mrb[0].mxu0
  %187 = vmatprep.mubr.f32.mxu0 0.0
  %188 = vmatmul.mubr.f32.gmra.mrb[0].mxu0 %v83
  %v189 = vpop.f32.mrb[0].mxu0
  %v190 = vadd.f32 0.0, %v189
  %v191 = vpop.f32.mrb[0].mxu0
  %192 = vmatprep.mubr.f32.mxu0 0.0
  %193 = vmatmul.mubr.f32.gmra.mrb[0].mxu0 %v84
  %v194 = vpop.f32.mrb[0].mxu0
  %v195 = vadd.f32 0.0, %v194
  %v196 = vpop.f32.mrb[0].mxu0
  %197 = vmatprep.mubr.f32.mxu0 0.0
  %198 = vmatmul.mubr.f32.gmra.mrb[0].mxu0 %v85
  %v199 = vpop.f32.mrb[0].mxu0
  %v200 = vadd.f32 0.0, %v199
  %v201 = vpop.f32.mrb[0].mxu0
  %202 = vmatprep.mubr.f32.mxu0 0.0
  %203 = vmatmul.mubr.f32.gmra.mrb[0].mxu0 %v86
  %v204 = vpop.f32.mrb[0].mxu0
  %v205 = vadd.f32 0.0, %v204
  %v206 = vpop.f32.mrb[0].mxu0
  %207 = vmatprep.mubr.f32.mxu0 0.0
  %208 = vmatmul.mubr.f32.gmra.mrb[0].mxu0 %v87
  %v209 = vpop.f32.mrb[0].mxu0
  %v210 = vadd.f32 0.0, %v209
  %v211 = vpop.f32.mrb[0].mxu0
  %212 = vmatprep.mubr.f32.mxu0 0.0
  %213 = vmatmul.mubr.f32.gmra.mrb[0].mxu0 %v88
  %v214 = vpop.f32.mrb[0].mxu0
  %v215 = vadd.f32 0.0, %v214
  %v216 = vpop.f32.mrb[0].mxu0
  %217 = vmatprep.mubr.f32.mxu0 0.0
  %218 = vmatmul.mubr.f32.gmra.mrb[0].mxu0 %v89
  %v219 = vpop.f32.mrb[0].mxu0
  %v220 = vadd.f32 0.0, %v219
  %v221 = vpop.f32.mrb[0].mxu0
  %222 = vmatprep.mubr.f32.mxu0 0.0
  %223 = vmatmul.mubr.f32.gmra.mrb[0].mxu0 %v90
  %v224 = vpop.f32.mrb[0].mxu0
  %v225 = vadd.f32 0.0, %v224
  %v226 = vpop.f32.mrb[0].mxu0
  %227 = vmatprep.mubr.f32.mxu0 0.0
  %228 = vmatmul.mubr.f32.gmra.mrb[0].mxu0 %v91
  %v229 = vpop.f32.mrb[0].mxu0
  %v230 = vadd.f32 0.0, %v229
  %v231 = vpop.f32.mrb[0].mxu0
  %232 = vmatprep.mubr.f32.mxu0 0.0
  %233 = vmatmul.mubr.f32.gmra.mrb[0].mxu0 %v92
  %v234 = vpop.f32.mrb[0].mxu0
  %v235 = vadd.f32 0.0, %v234
  %v236 = vpop.f32.mrb[0].mxu0
  %237 = vmatprep.mubr.f32.mxu0 0.0
  %238 = vmatmul.mubr.f32.gmra.mrb[0].mxu0 %v93
  %v239 = vpop.f32.mrb[0].mxu0
  %v240 = vadd.f32 0.0, %v239
  %v241 = vpop.f32.mrb[0].mxu0
  %242 = vmatprep.mubr.f32.mxu0 0.0
  %243 = vmatmul.mubr.f32.gmra.mrb[0].mxu0 %v94
  %v244 = vpop.f32.mrb[0].mxu0
  %v245 = vadd.f32 0.0, %v244
  %v246 = vpop.f32.mrb[0].mxu0
  %247 = vmatprep.mubr.f32.mxu0 0.0
  %248 = vmatmul.mubr.f32.gmra.mrb[0].mxu0 %v95
  %v249 = vpop.f32.mrb[0].mxu0
  %v250 = vadd.f32 0.0, %v249
  %v251 = vpop.f32.mrb[0].mxu0
  %252 = vmatprep.mubr.f32.mxu0 0.0
  %253 = vmatmul.mubr.f32.gmra.mrb[0].mxu0 %v96
  %v254 = vpop.f32.mrb[0].mxu0
  %v255 = vadd.f32 0.0, %v254
  %v256 = vpop.f32.mrb[0].mxu0
  %257 = vdwg.mxu0
  %258 = vst [vmem:[%s4] sm:$0xff] %v180
  %259 = vst [vmem:[%s4 + $0x8] sm:$0xff] %v185
  %260 = vst [vmem:[%s4 + $0x10] sm:$0xff] %v190
  %261 = vst [vmem:[%s4 + $0x18] sm:$0xff] %v195
  %262 = vst [vmem:[%s4 + $0x20] sm:$0xff] %v200
  %263 = vst [vmem:[%s4 + $0x28] sm:$0xff] %v205
  %264 = vst [vmem:[%s4 + $0x30] sm:$0xff] %v210
  %265 = vst [vmem:[%s4 + $0x38] sm:$0xff] %v215
  %266 = vst [vmem:[%s4 + $0x40] sm:$0xff] %v220
  %267 = vst [vmem:[%s4 + $0x48] sm:$0xff] %v225
  %268 = vst [vmem:[%s4 + $0x50] sm:$0xff] %v230
  %269 = vst [vmem:[%s4 + $0x58] sm:$0xff] %v235
  %270 = vst [vmem:[%s4 + $0x60] sm:$0xff] %v240
  %271 = vst [vmem:[%s4 + $0x68] sm:$0xff] %v245
  %272 = vst [vmem:[%s4 + $0x70] sm:$0xff] %v250
  %273 = vst [vmem:[%s4 + $0x78] sm:$0xff] %v255
  %v274 = vadd.f32 %v180, %v185
  %v275 = vadd.f32 %v274, %v190
  %v276 = vadd.f32 %v275, %v195
  %v277 = vadd.f32 %v276, %v200
  %v278 = vadd.f32 %v277, %v205
  %v279 = vadd.f32 %v278, %v210
  %v280 = vadd.f32 %v279, %v215
  %v281 = vadd.f32 %v280, %v220
  %v282 = vadd.f32 %v281, %v225
  %v283 = vadd.f32 %v282, %v230
  %v284 = vadd.f32 %v283, %v235
  %v285 = vadd.f32 %v284, %v240
  %v286 = vadd.f32 %v285, %v245
  %v287 = vadd.f32 %v286, %v250
  %v288 = vadd.f32 %v287, %v255
  %v289 = vrot.slane %v288, 4
  %v290 = vadd.f32 %v288, %v289
  %v291 = vrot.slane %v290, 2
  %v292 = vadd.f32 %v290, %v291
  %v293 = vrot.slane %v292, 1
  %v294 = vadd.f32 %v292, %v293
  %v295 = vmul.f32 %v180, %v180
  %v296 = vmul.f32 %v185, %v185
  %v297 = vmul.f32 %v190, %v190
  %v298 = vmul.f32 %v195, %v195
  %v299 = vmul.f32 %v200, %v200
  %v300 = vmul.f32 %v205, %v205
  %v301 = vmul.f32 %v210, %v210
  %v302 = vmul.f32 %v215, %v215
  %v303 = vmul.f32 %v220, %v220
  %v304 = vmul.f32 %v225, %v225
  %v305 = vmul.f32 %v230, %v230
  %v306 = vmul.f32 %v235, %v235
  %v307 = vmul.f32 %v240, %v240
  %v308 = vmul.f32 %v245, %v245
  %v309 = vmul.f32 %v250, %v250
  %v310 = vmul.f32 %v255, %v255
  %v311 = vadd.f32 %v295, %v296
  %v312 = vadd.f32 %v311, %v297
  %v313 = vadd.f32 %v312, %v298
  %v314 = vadd.f32 %v313, %v299
  %v315 = vadd.f32 %v314, %v300
  %v316 = vadd.f32 %v315, %v301
  %v317 = vadd.f32 %v316, %v302
  %v318 = vadd.f32 %v317, %v303
  %v319 = vadd.f32 %v318, %v304
  %v320 = vadd.f32 %v319, %v305
  %v321 = vadd.f32 %v320, %v306
  %v322 = vadd.f32 %v321, %v307
  %v323 = vadd.f32 %v322, %v308
  %v324 = vadd.f32 %v323, %v309
  %v325 = vadd.f32 %v324, %v310
  %v326 = vrot.slane %v325, 4
  %v327 = vadd.f32 %v325, %v326
  %v328 = vrot.slane %v327, 2
  %v329 = vadd.f32 %v327, %v328
  %v330 = vrot.slane %v329, 1
  %v331 = vadd.f32 %v329, %v330
  %vm332 = vcmask 1040384
  %v333 = vsel %vm332, %v294, %v331
  %334 = vst [vmem:[%s5] sm:$0x3] %v333
  // Predicated region
  $region18: #{bottleneck_forward.7} parent=0 // pred_check
    _
  $region19: #{bottleneck_forward.7} parent=0 // pred_check_branch
    %336 = sbr.rel (0) target = $region21
  $region20: #{bottleneck_forward.7} parent=0 // pred_region
    _
  $region21: #{bottleneck_forward.7} parent=0 // pred_fallthru
    _
  // Predicated region
  $region22: #{bottleneck_forward.7} parent=0 // pred_check
    _
  $region23: #{bottleneck_forward.7} parent=0 // pred_check_branch
    %338 = sbr.rel (0) target = $region25
  $region24: #{bottleneck_forward.7} parent=0 // pred_region
    _
  $region25: #{bottleneck_forward.7} parent=0 // pred_fallthru
    _
  // Predicated region
  $region26: #{bottleneck_forward.7} parent=0 // pred_check
    _
  $region27: #{bottleneck_forward.7} parent=0 // pred_check_branch
    %340 = sbr.rel (0) target = $region29
  $region28: #{bottleneck_forward.7} parent=0 // pred_region
    _
  $region29: #{bottleneck_forward.7} parent=0 // pred_fallthru
    _
  // Predicated region
  $region30: #{bottleneck_forward.7} parent=0 // pred_check
    _
  $region31: #{bottleneck_forward.7} parent=0 // pred_check_branch
    %342 = sbr.rel (0) target = $region33
  $region32: #{bottleneck_forward.7} parent=0 // pred_region
    _
  $region33: #{bottleneck_forward.7} parent=0 // pred_fallthru
    _

// kernel: bottleneck_forward.9
$region0: #{bottleneck_forward.9}
  #allocation0 [shape = 'u32[]', space=smem, size = 0x4, offset = 0x4, fixed_abs, tag = 'smem constant byte address 0x4 - core index']
  #allocation1 [shape = 'u32[144,128]{1,0:T(1,128)}', space=vmem, size = 0x12000, scoped, tag = 'internal scratch']
  %s0 = inlined_call_operand.vmem [shape: f32[128,128], index: 0, kind: input, shape index: {}]
  %s1 = inlined_call_operand.vmem [shape: f32[1,128], index: 1, kind: input, shape index: {}]
  %s2 = inlined_call_operand.vmem [shape: f32[1,128], index: 2, kind: input, shape index: {}]
  %s3 = inlined_call_operand.vmem [shape: f32[128,128], index: 3, kind: input, shape index: {}]
  %s4 = inlined_call_operand.vmem [shape: f32[1,128], index: 4, kind: input, shape index: {}]
  %s5 = inlined_call_operand.vmem [shape: f32[1,128], index: 5, kind: input, shape index: {}]
  %s6 = inlined_call_operand.vmem [shape: f32[128,128], index: 6, kind: output, shape index: {}]
  %s7 = sld [smem:[#allocation0]]
  $region34: #{bottleneck_forward.9} parent=0
    _
  %s9 = ssub.s32 1, %s7
  %s10 = scalar_select 0, %s9, %s7
  // Predicated region
  $region2: #{bottleneck_forward.9} parent=0 // pred_check
    _
  $region3: #{bottleneck_forward.9} parent=0 // pred_check_branch
    %12 = sbr.rel (0) target = $region5
  $region4: #{bottleneck_forward.9} parent=0 // pred_region
    _
  $region5: #{bottleneck_forward.9} parent=0 // pred_fallthru
    _
  // Predicated region
  $region6: #{bottleneck_forward.9} parent=0 // pred_check
    _
  $region7: #{bottleneck_forward.9} parent=0 // pred_check_branch
    %14 = sbr.rel (0) target = $region9
  $region8: #{bottleneck_forward.9} parent=0 // pred_region
    _
  $region9: #{bottleneck_forward.9} parent=0 // pred_fallthru
    _
  // Predicated region
  $region10: #{bottleneck_forward.9} parent=0 // pred_check
    _
  $region11: #{bottleneck_forward.9} parent=0 // pred_check_branch
    %16 = sbr.rel (0) target = $region13
  $region12: #{bottleneck_forward.9} parent=0 // pred_region
    _
  $region13: #{bottleneck_forward.9} parent=0 // pred_fallthru
    _
  // Predicated region
  $region14: #{bottleneck_forward.9} parent=0 // pred_check
    _
  $region15: #{bottleneck_forward.9} parent=0 // pred_check_branch
    %18 = sbr.rel (0) target = $region17
  $region16: #{bottleneck_forward.9} parent=0 // pred_region
    _
  $region17: #{bottleneck_forward.9} parent=0 // pred_fallthru
    _
  // Predicated region
  $region18: #{bottleneck_forward.9} parent=0 // pred_check
    _
  $region19: #{bottleneck_forward.9} parent=0 // pred_check_branch
    %20 = sbr.rel (0) target = $region21
  $region20: #{bottleneck_forward.9} parent=0 // pred_region
    _
  $region21: #{bottleneck_forward.9} parent=0 // pred_fallthru
    _
  // Predicated region
  $region22: #{bottleneck_forward.9} parent=0 // pred_check
    _
  $region23: #{bottleneck_forward.9} parent=0 // pred_check_branch
    %22 = sbr.rel (0) target = $region25
  $region24: #{bottleneck_forward.9} parent=0 // pred_region
    _
  $region25: #{bottleneck_forward.9} parent=0 // pred_fallthru
    _
  %v23 = vld [vmem:[%s3] sm:$0xff]
  %v24 = vld [vmem:[%s3 + $0x8] sm:$0xff]
  %v25 = vld [vmem:[%s3 + $0x10] sm:$0xff]
  %v26 = vld [vmem:[%s3 + $0x18] sm:$0xff]
  %v27 = vld [vmem:[%s3 + $0x20] sm:$0xff]
  %v28 = vld [vmem:[%s3 + $0x28] sm:$0xff]
  %v29 = vld [vmem:[%s3 + $0x30] sm:$0xff]
  %v30 = vld [vmem:[%s3 + $0x38] sm:$0xff]
  %v31 = vld [vmem:[%s3 + $0x40] sm:$0xff]
  %v32 = vld [vmem:[%s3 + $0x48] sm:$0xff]
  %v33 = vld [vmem:[%s3 + $0x50] sm:$0xff]
  %v34 = vld [vmem:[%s3 + $0x58] sm:$0xff]
  %v35 = vld [vmem:[%s3 + $0x60] sm:$0xff]
  %v36 = vld [vmem:[%s3 + $0x68] sm:$0xff]
  %v37 = vld [vmem:[%s3 + $0x70] sm:$0xff]
  %v38 = vld [vmem:[%s3 + $0x78] sm:$0xff]
  %v39 = vld [vmem:[%s4] sm:$0x1]
  %v41 = vlaneseq
  %v42 = vshrl.u32 %v41, 7
  %v43 = vsub.s32 0, %v42
  %v44 = vrot.slane %v39, %v43
  %v46 = vmul.f32 %v23, %v44
  %v47 = vmul.f32 %v24, %v44
  %v48 = vmul.f32 %v25, %v44
  %v49 = vmul.f32 %v26, %v44
  %v50 = vmul.f32 %v27, %v44
  %v51 = vmul.f32 %v28, %v44
  %v52 = vmul.f32 %v29, %v44
  %v53 = vmul.f32 %v30, %v44
  %v54 = vmul.f32 %v31, %v44
  %v55 = vmul.f32 %v32, %v44
  %v56 = vmul.f32 %v33, %v44
  %v57 = vmul.f32 %v34, %v44
  %v58 = vmul.f32 %v35, %v44
  %v59 = vmul.f32 %v36, %v44
  %v60 = vmul.f32 %v37, %v44
  %v61 = vmul.f32 %v38, %v44
  %v62 = vld [vmem:[%s5] sm:$0x1]
  %v64 = vlaneseq
  %v65 = vshrl.u32 %v64, 7
  %v66 = vsub.s32 0, %v65
  %v67 = vrot.slane %v62, %v66
  %v69 = vadd.f32 %v46, %v67
  %v70 = vadd.f32 %v47, %v67
  %v71 = vadd.f32 %v48, %v67
  %v72 = vadd.f32 %v49, %v67
  %v73 = vadd.f32 %v50, %v67
  %v74 = vadd.f32 %v51, %v67
  %v75 = vadd.f32 %v52, %v67
  %v76 = vadd.f32 %v53, %v67
  %v77 = vadd.f32 %v54, %v67
  %v78 = vadd.f32 %v55, %v67
  %v79 = vadd.f32 %v56, %v67
  %v80 = vadd.f32 %v57, %v67
  %v81 = vadd.f32 %v58, %v67
  %v82 = vadd.f32 %v59, %v67
  %v83 = vadd.f32 %v60, %v67
  %v84 = vadd.f32 %v61, %v67
  %v85 = vld [vmem:[%s0] sm:$0xff]
  %v86 = vld [vmem:[%s0 + $0x8] sm:$0xff]
  %v87 = vld [vmem:[%s0 + $0x10] sm:$0xff]
  %v88 = vld [vmem:[%s0 + $0x18] sm:$0xff]
  %v89 = vld [vmem:[%s0 + $0x20] sm:$0xff]
  %v90 = vld [vmem:[%s0 + $0x28] sm:$0xff]
  %v91 = vld [vmem:[%s0 + $0x30] sm:$0xff]
  %v92 = vld [vmem:[%s0 + $0x38] sm:$0xff]
  %v93 = vld [vmem:[%s0 + $0x40] sm:$0xff]
  %v94 = vld [vmem:[%s0 + $0x48] sm:$0xff]
  %v95 = vld [vmem:[%s0 + $0x50] sm:$0xff]
  %v96 = vld [vmem:[%s0 + $0x58] sm:$0xff]
  %v97 = vld [vmem:[%s0 + $0x60] sm:$0xff]
  %v98 = vld [vmem:[%s0 + $0x68] sm:$0xff]
  %v99 = vld [vmem:[%s0 + $0x70] sm:$0xff]
  %v100 = vld [vmem:[%s0 + $0x78] sm:$0xff]
  %v101 = vld [vmem:[%s1] sm:$0x1]
  %v103 = vlaneseq
  %v104 = vshrl.u32 %v103, 7
  %v105 = vsub.s32 0, %v104
  %v106 = vrot.slane %v101, %v105
  %v108 = vmul.f32 %v85, %v106
  %v109 = vmul.f32 %v86, %v106
  %v110 = vmul.f32 %v87, %v106
  %v111 = vmul.f32 %v88, %v106
  %v112 = vmul.f32 %v89, %v106
  %v113 = vmul.f32 %v90, %v106
  %v114 = vmul.f32 %v91, %v106
  %v115 = vmul.f32 %v92, %v106
  %v116 = vmul.f32 %v93, %v106
  %v117 = vmul.f32 %v94, %v106
  %v118 = vmul.f32 %v95, %v106
  %v119 = vmul.f32 %v96, %v106
  %v120 = vmul.f32 %v97, %v106
  %v121 = vmul.f32 %v98, %v106
  %v122 = vmul.f32 %v99, %v106
  %v123 = vmul.f32 %v100, %v106
  %v124 = vld [vmem:[%s2] sm:$0x1]
  %v126 = vlaneseq
  %v127 = vshrl.u32 %v126, 7
  %v128 = vsub.s32 0, %v127
  %v129 = vrot.slane %v124, %v128
  %v131 = vadd.f32 %v108, %v129
  %v132 = vadd.f32 %v109, %v129
  %v133 = vadd.f32 %v110, %v129
  %v134 = vadd.f32 %v111, %v129
  %v135 = vadd.f32 %v112, %v129
  %v136 = vadd.f32 %v113, %v129
  %v137 = vadd.f32 %v114, %v129
  %v138 = vadd.f32 %v115, %v129
  %v139 = vadd.f32 %v116, %v129
  %v140 = vadd.f32 %v117, %v129
  %v141 = vadd.f32 %v118, %v129
  %v142 = vadd.f32 %v119, %v129
  %v143 = vadd.f32 %v120, %v129
  %v144 = vadd.f32 %v121, %v129
  %v145 = vadd.f32 %v122, %v129
  %v146 = vadd.f32 %v123, %v129
  %v147 = vadd.f32 %v131, %v69
  %v148 = vadd.f32 %v132, %v70
  %v149 = vadd.f32 %v133, %v71
  %v150 = vadd.f32 %v134, %v72
  %v151 = vadd.f32 %v135, %v73
  %v152 = vadd.f32 %v136, %v74
  %v153 = vadd.f32 %v137, %v75
  %v154 = vadd.f32 %v138, %v76
  %v155 = vadd.f32 %v139, %v77
  %v156 = vadd.f32 %v140, %v78
  %v157 = vadd.f32 %v141, %v79
  %v158 = vadd.f32 %v142, %v80
  %v159 = vadd.f32 %v143, %v81
  %v160 = vadd.f32 %v144, %v82
  %v161 = vadd.f32 %v145, %v83
  %v162 = vadd.f32 %v146, %v84
  %v163 = vmax.f32 %v147, 0.0
  %v164 = vmax.f32 %v148, 0.0
  %v165 = vmax.f32 %v149, 0.0
  %v166 = vmax.f32 %v150, 0.0
  %v167 = vmax.f32 %v151, 0.0
  %v168 = vmax.f32 %v152, 0.0
  %v169 = vmax.f32 %v153, 0.0
  %v170 = vmax.f32 %v154, 0.0
  %v171 = vmax.f32 %v155, 0.0
  %v172 = vmax.f32 %v156, 0.0
  %v173 = vmax.f32 %v157, 0.0
  %v174 = vmax.f32 %v158, 0.0
  %v175 = vmax.f32 %v159, 0.0
  %v176 = vmax.f32 %v160, 0.0
  %v177 = vmax.f32 %v161, 0.0
  %v178 = vmax.f32 %v162, 0.0
  %179 = vst [vmem:[%s6] sm:$0xff] %v163
  %180 = vst [vmem:[%s6 + $0x8] sm:$0xff] %v164
  %181 = vst [vmem:[%s6 + $0x10] sm:$0xff] %v165
  %182 = vst [vmem:[%s6 + $0x18] sm:$0xff] %v166
  %183 = vst [vmem:[%s6 + $0x20] sm:$0xff] %v167
  %184 = vst [vmem:[%s6 + $0x28] sm:$0xff] %v168
  %185 = vst [vmem:[%s6 + $0x30] sm:$0xff] %v169
  %186 = vst [vmem:[%s6 + $0x38] sm:$0xff] %v170
  %187 = vst [vmem:[%s6 + $0x40] sm:$0xff] %v171
  %188 = vst [vmem:[%s6 + $0x48] sm:$0xff] %v172
  %189 = vst [vmem:[%s6 + $0x50] sm:$0xff] %v173
  %190 = vst [vmem:[%s6 + $0x58] sm:$0xff] %v174
  %191 = vst [vmem:[%s6 + $0x60] sm:$0xff] %v175
  %192 = vst [vmem:[%s6 + $0x68] sm:$0xff] %v176
  %193 = vst [vmem:[%s6 + $0x70] sm:$0xff] %v177
  %194 = vst [vmem:[%s6 + $0x78] sm:$0xff] %v178
  // Predicated region
  $region26: #{bottleneck_forward.9} parent=0 // pred_check
    _
  $region27: #{bottleneck_forward.9} parent=0 // pred_check_branch
    %196 = sbr.rel (0) target = $region29
  $region28: #{bottleneck_forward.9} parent=0 // pred_region
    _
  $region29: #{bottleneck_forward.9} parent=0 // pred_fallthru
    _
  // Predicated region
  $region30: #{bottleneck_forward.9} parent=0 // pred_check
    _
  $region31: #{bottleneck_forward.9} parent=0 // pred_check_branch
    %198 = sbr.rel (0) target = $region33
  $region32: #{bottleneck_forward.9} parent=0 // pred_region
    _
  $region33: #{bottleneck_forward.9} parent=0 // pred_fallthru
    _

// kernel: bottleneck_forward.6
$region0: #{bottleneck_forward.6}
  #allocation0 [shape = 'u32[]', space=smem, size = 0x4, offset = 0x4, fixed_abs, tag = 'smem constant byte address 0x4 - core index']
  #allocation1 [shape = 'u32[144,128]{1,0:T(1,128)}', space=vmem, size = 0x12000, scoped, tag = 'internal scratch']
  #allocation2 [shape = 'f32[18,2,9,128]{3,2,1,0:T(8,128)}', space=vmem, size = 0x48000, scoped, tag = 'scratch operand']
  #allocation3 [shape = 'f32[8,8,1152]{2,1,0:T(8,128)}', space=vmem, size = 0x48000, scoped, tag = 'scratch operand']
  #allocation4 [shape = 'f32[16,16,128]{2,1,0:T(8,128)}', space=vmem, size = 0x20000, scoped, tag = 'scratch operand']
  %s0 = inlined_call_operand.vmem [shape: f32[2,256,128], index: 0, kind: input, shape index: {}]
  %s1 = inlined_call_operand.vmem [shape: f32[1,128], index: 1, kind: input, shape index: {}]
  %s2 = inlined_call_operand.vmem [shape: f32[1,128], index: 2, kind: input, shape index: {}]
  %s3 = inlined_call_operand.vmem [shape: f32[1152,128], index: 3, kind: input, shape index: {}]
  %s4 = inlined_call_operand.vmem [shape: f32[2,64,128], index: 4, kind: output, shape index: {0}]
  %s5 = inlined_call_operand.vmem [shape: f32[2,2,128], index: 5, kind: output, shape index: {1}]
  %6 = xla_tuple %s4, %s5
  %s7 = sld [smem:[#allocation0]]
  $region57: #{bottleneck_forward.6} parent=0
    _
  %s9 = ssub.s32 1, %s7
  %s10 = scalar_select 0, %s9, %s7
  loop: start=0, step=1, limit=4
  $region2: #{bottleneck_forward.6} parent=0 // loop_pre_header
    _
  $region3: #{bottleneck_forward.6} parent=0 // loop_header
    %s12 = sphi 0, %s16
    %p13 = scmp.ge.s32.totalorder %s12, 4
    %s22 = sphi 0, %s24
    %s25 = sphi 0, %s22
    %s26 = sphi 0, %s25
    %s42 = sphi 0, %s26
    %s46 = sphi 0, %s46
    %s48 = sphi 0, %s46
    %s49 = sphi 0, %s48
    %s63 = sphi 0, %s49
    %s67 = sphi 0, %s67
    %s69 = sphi 0, %s67
    %s70 = sphi 0, %s69
    %s84 = sphi 0, %s70
    %s88 = sphi 0, %s88
    %s90 = sphi 0, %s88
    %s91 = sphi 0, %s90
    %s105 = sphi 0, %s91
    %s111 = sphi 0, %s113
    %s114 = sphi 0, %s111
    %s115 = sphi 0, %s114
    %s131 = sphi 0, %s115
    %s137 = sphi 0, %s139
    %s140 = sphi 0, %s137
    %s141 = sphi 0, %s140
    %s157 = sphi 0, %s141
  $region4: #{bottleneck_forward.6} parent=0 // loop_header_branch
    %15 = sbr.rel (%p13) target = $region8
  $region5: #{bottleneck_forward.6} parent=0 // loop_body
    %s17 = ssub.s32 %s12, 1
    %s18 = ssub.s32 %s12, 2
    %s19 = sadd.s32 %s12, 1
    %s20 = ssub.s32 %s12, %s19
    %p21 = scmp.eq.s32.totalorder %s20, 0
    %s23 = sadd.s32 %s22, 1
    %s24 = scalar_select %p21, %s22, %s23
    %p27 = pneg %p21
    %p28 = scmp.eq.s32.totalorder %s12, 1
    %p29 = por %p27, %p28
    %p30 = scmp.ne.s32.totalorder %s22, %s25
    %p31 = scmp.eq.s32.totalorder %s12, 0
    %p32 = por %p30, %p31
    %p33 = scmp.ne.s32.totalorder %s22, %s25
    %p34 = scmp.eq.s32.totalorder %s17, 1
    %p35 = por %p33, %p34
    %p36 = scmp.ne.s32.totalorder %s25, %s26
    %p37 = scmp.eq.s32.totalorder %s17, 0
    %p38 = por %p36, %p37
    %p39 = scmp.ne.s32.totalorder %s25, %s26
    %p40 = scmp.eq.s32.totalorder %s18, 1
    %p41 = por %p39, %p40
    %p43 = scmp.ne.s32.totalorder %s26, %s42
    %p44 = scmp.eq.s32.totalorder %s18, 0
    %p45 = por %p43, %p44
    %s47 = sadd.s32 %s46, 1
    %p50 = scmp.eq.s32.totalorder %s12, 1
    %p51 = scmp.ne.s32.totalorder %s46, %s48
    %p52 = scmp.eq.s32.totalorder %s12, 0
    %p53 = por %p51, %p52
    %p54 = scmp.ne.s32.totalorder %s46, %s48
    %p55 = scmp.eq.s32.totalorder %s17, 1
    %p56 = por %p54, %p55
    %p57 = scmp.ne.s32.totalorder %s48, %s49
    %p58 = scmp.eq.s32.totalorder %s17, 0
    %p59 = por %p57, %p58
    %p60 = scmp.ne.s32.totalorder %s48, %s49
    %p61 = scmp.eq.s32.totalorder %s18, 1
    %p62 = por %p60, %p61
    %p64 = scmp.ne.s32.totalorder %s49, %s63
    %p65 = scmp.eq.s32.totalorder %s18, 0
    %p66 = por %p64, %p65
    %s68 = sadd.s32 %s67, 1
    %p71 = scmp.eq.s32.totalorder %s12, 1
    %p72 = scmp.ne.s32.totalorder %s67, %s69
    %p73 = scmp.eq.s32.totalorder %s12, 0
    %p74 = por %p72, %p73
    %p75 = scmp.ne.s32.totalorder %s67, %s69
    %p76 = scmp.eq.s32.totalorder %s17, 1
    %p77 = por %p75, %p76
    %p78 = scmp.ne.s32.totalorder %s69, %s70
    %p79 = scmp.eq.s32.totalorder %s17, 0
    %p80 = por %p78, %p79
    %p81 = scmp.ne.s32.totalorder %s69, %s70
    %p82 = scmp.eq.s32.totalorder %s18, 1
    %p83 = por %p81, %p82
    %p85 = scmp.ne.s32.totalorder %s70, %s84
    %p86 = scmp.eq.s32.totalorder %s18, 0
    %p87 = por %p85, %p86
    %s89 = sadd.s32 %s88, 1
    %p92 = scmp.eq.s32.totalorder %s12, 1
    %p93 = scmp.ne.s32.totalorder %s88, %s90
    %p94 = scmp.eq.s32.totalorder %s12, 0
    %p95 = por %p93, %p94
    %p96 = scmp.ne.s32.totalorder %s88, %s90
    %p97 = scmp.eq.s32.totalorder %s17, 1
    %p98 = por %p96, %p97
    %p99 = scmp.ne.s32.totalorder %s90, %s91
    %p100 = scmp.eq.s32.totalorder %s17, 0
    %p101 = por %p99, %p100
    %p102 = scmp.ne.s32.totalorder %s90, %s91
    %p103 = scmp.eq.s32.totalorder %s18, 1
    %p104 = por %p102, %p103
    %p106 = scmp.ne.s32.totalorder %s91, %s105
    %p107 = scmp.eq.s32.totalorder %s18, 0
    %p108 = por %p106, %p107
    %s109 = ssub.s32 %s12, %s19
    %p110 = scmp.eq.s32.totalorder %s109, 0
    %s112 = sadd.s32 %s111, 1
    %s113 = scalar_select %p110, %s111, %s112
    %p116 = pneg %p110
    %p117 = scmp.eq.s32.totalorder %s12, 1
    %p118 = por %p116, %p117
    %p119 = scmp.ne.s32.totalorder %s111, %s114
    %p120 = scmp.eq.s32.totalorder %s12, 0
    %p121 = por %p119, %p120
    %p122 = scmp.ne.s32.totalorder %s111, %s114
    %p123 = scmp.eq.s32.totalorder %s17, 1
    %p124 = por %p122, %p123
    %p125 = scmp.ne.s32.totalorder %s114, %s115
    %p126 = scmp.eq.s32.totalorder %s17, 0
    %p127 = por %p125, %p126
    %p128 = scmp.ne.s32.totalorder %s114, %s115
    %p129 = scmp.eq.s32.totalorder %s18, 1
    %p130 = por %p128, %p129
    %p132 = scmp.ne.s32.totalorder %s115, %s131
    %p133 = scmp.eq.s32.totalorder %s18, 0
    %p134 = por %p132, %p133
    %s135 = ssub.s32 %s12, %s19
    %p136 = scmp.eq.s32.totalorder %s135, 0
    %s138 = sadd.s32 %s137, 1
    %s139 = scalar_select %p136, %s137, %s138
    %p142 = pneg %p136
    %p143 = scmp.eq.s32.totalorder %s12, 1
    %p144 = por %p142, %p143
    %p145 = scmp.ne.s32.totalorder %s137, %s140
    %p146 = scmp.eq.s32.totalorder %s12, 0
    %p147 = por %p145, %p146
    %p148 = scmp.ne.s32.totalorder %s137, %s140
    %p149 = scmp.eq.s32.totalorder %s17, 1
    %p150 = por %p148, %p149
    %p151 = scmp.ne.s32.totalorder %s140, %s141
    %p152 = scmp.eq.s32.totalorder %s17, 0
    %p153 = por %p151, %p152
    %p154 = scmp.ne.s32.totalorder %s140, %s141
    %p155 = scmp.eq.s32.totalorder %s18, 1
    %p156 = por %p154, %p155
    %p158 = scmp.ne.s32.totalorder %s141, %s157
    %p159 = scmp.eq.s32.totalorder %s18, 0
    %p160 = por %p158, %p159
    %p161 = scmp.le.s32.totalorder 1, %s12
    %p162 = scmp.lt.s32.totalorder %s12, 3
    %p163 = pnand %p161, %p162
    %p164 = pneg %p163
    // Predicated region
    $region9: #{bottleneck_forward.6} parent=5 // pred_check
      _
    $region10: #{bottleneck_forward.6} parent=5 // pred_check_branch
      %166 = sbr.rel (%p163) target = $region12
    $region11: #{bottleneck_forward.6} parent=5 // pred_region
      %s167 = ssub.s32 %s12, 1
      // Predicated region
      $region13: #{bottleneck_forward.6} parent=11 // pred_check
        %p168 = pneg %p59
      $region14: #{bottleneck_forward.6} parent=11 // pred_check_branch
        %170 = sbr.rel (%p168) target = $region16
      $region15: #{bottleneck_forward.6} parent=11 // pred_region
        _
      $region16: #{bottleneck_forward.6} parent=11 // pred_fallthru
        _
      // Predicated region
      $region17: #{bottleneck_forward.6} parent=11 // pred_check
        %p171 = pneg %p80
      $region18: #{bottleneck_forward.6} parent=11 // pred_check_branch
        %173 = sbr.rel (%p171) target = $region20
      $region19: #{bottleneck_forward.6} parent=11 // pred_region
        _
      $region20: #{bottleneck_forward.6} parent=11 // pred_fallthru
        _
      // Predicated region
      $region21: #{bottleneck_forward.6} parent=11 // pred_check
        %p174 = pneg %p101
      $region22: #{bottleneck_forward.6} parent=11 // pred_check_branch
        %176 = sbr.rel (%p174) target = $region24
      $region23: #{bottleneck_forward.6} parent=11 // pred_region
        _
      $region24: #{bottleneck_forward.6} parent=11 // pred_fallthru
        _
    $region12: #{bottleneck_forward.6} parent=5 // pred_fallthru
      _
    %p177 = scmp.lt.s32.totalorder %s12, 2
    // Predicated region
    $region25: #{bottleneck_forward.6} parent=5 // pred_check
      %p178 = pneg %p177
    $region26: #{bottleneck_forward.6} parent=5 // pred_check_branch
      %180 = sbr.rel (%p178) target = $region28
    $region27: #{bottleneck_forward.6} parent=5 // pred_region
      // Predicated region
      $region29: #{bottleneck_forward.6} parent=27 // pred_check
        %p181 = pneg %p32
      $region30: #{bottleneck_forward.6} parent=27 // pred_check_branch
        %183 = sbr.rel (%p181) target = $region32
      $region31: #{bottleneck_forward.6} parent=27 // pred_region
        %p184 = scmp.lt.s32.totalorder %s12, 1
        %s185 = scalar_select %p184, %s12, 1
        %s186 = smul.addr %s185, 32
        %s187 = smul.addr %s186, 8
        %s188 = scalar_lea.vmem %s0, %s187
      $region32: #{bottleneck_forward.6} parent=27 // pred_fallthru
        _
    $region28: #{bottleneck_forward.6} parent=5 // pred_fallthru
      _
    %p189 = scmp.le.s32.totalorder 1, %s12
    %p190 = scmp.lt.s32.totalorder %s12, 3
    %p191 = pnand %p189, %p190
    %p192 = pneg %p191
    // Predicated region
    $region33: #{bottleneck_forward.6} parent=5 // pred_check
      _
    $region34: #{bottleneck_forward.6} parent=5 // pred_check_branch
      %194 = sbr.rel (%p191) target = $region36
    $region35: #{bottleneck_forward.6} parent=5 // pred_region
      %s195 = ssub.s32 %s12, 1
      %p196 = scmp.lt.s32.totalorder %s17, 1
      %s197 = scalar_select %p196, %s17, 1
      %s198 = smul.addr %s197, 32
      %s199 = smul.addr %s198, 8
      %s200 = scalar_lea.vmem %s0, %s199
      %p201 = pneg %p38
      %p202 = pneg %p35
      %p203 = pneg %p59
      %p204 = pneg %p56
      %p205 = pneg %p80
      %p206 = pneg %p77
      %p207 = pneg %p101
      %p208 = pneg %p98
      %p209 = pneg %p127
      %p210 = pneg %p124
      %p211 = scmp.lt.s32.totalorder %s17, 1
      %s212 = scalar_select %p211, %s17, 1
      %s213 = smul.addr %s212, 8
      %s214 = smul.addr %s213, 8
      %s215 = scalar_lea.vmem %s4, %s214
      %p216 = pneg %p153
      %p217 = pneg %p150
      %p218 = scmp.lt.s32.totalorder %s17, 1
      %s219 = scalar_select %p218, %s17, 1
      %s220 = smul.addr %s219, 2
      %s221 = scalar_lea.vmem %s5, %s220
      %p222 = scmp.lt.s32.totalorder %s17, 1
      %s223 = scalar_select %p222, %s17, 1
      %s224 = smul.addr %s223, 32
      %s225 = smul.addr %s224, 8
      %s226 = scalar_lea.vmem %s0, %s225
      %p227 = scmp.lt.s32.totalorder %s17, 1
      %s228 = scalar_select %p227, %s17, 1
      %s229 = smul.addr %s228, 8
      %s230 = smul.addr %s229, 8
      %s231 = scalar_lea.vmem %s4, %s230
      %p232 = scmp.lt.s32.totalorder %s17, 1
      %s233 = scalar_select %p232, %s17, 1
      %s234 = smul.addr %s233, 2
      %s235 = scalar_lea.vmem %s5, %s234
      %v236 = vld [vmem:[%s226] sm:$0xff]
      %v237 = vld [vmem:[%s226 + $0x8] sm:$0xff]
      %v238 = vld [vmem:[%s226 + $0x10] sm:$0xff]
      %v239 = vld [vmem:[%s226 + $0x18] sm:$0xff]
      %v240 = vld [vmem:[%s226 + $0x20] sm:$0xff]
      %v241 = vld [vmem:[%s226 + $0x28] sm:$0xff]
      %v242 = vld [vmem:[%s226 + $0x30] sm:$0xff]
      %v243 = vld [vmem:[%s226 + $0x38] sm:$0xff]
      %v244 = vld [vmem:[%s226 + $0x40] sm:$0xff]
      %v245 = vld [vmem:[%s226 + $0x48] sm:$0xff]
      %v246 = vld [vmem:[%s226 + $0x50] sm:$0xff]
      %v247 = vld [vmem:[%s226 + $0x58] sm:$0xff]
      %v248 = vld [vmem:[%s226 + $0x60] sm:$0xff]
      %v249 = vld [vmem:[%s226 + $0x68] sm:$0xff]
      %v250 = vld [vmem:[%s226 + $0x70] sm:$0xff]
      %v251 = vld [vmem:[%s226 + $0x78] sm:$0xff]
      %v252 = vld [vmem:[%s226 + $0x80] sm:$0xff]
      %v253 = vld [vmem:[%s226 + $0x88] sm:$0xff]
      %v254 = vld [vmem:[%s226 + $0x90] sm:$0xff]
      %v255 = vld [vmem:[%s226 + $0x98] sm:$0xff]
      %v256 = vld [vmem:[%s226 + $0xa0] sm:$0xff]
      %v257 = vld [vmem:[%s226 + $0xa8] sm:$0xff]
      %v258 = vld [vmem:[%s226 + $0xb0] sm:$0xff]
      %v259 = vld [vmem:[%s226 + $0xb8] sm:$0xff]
      %v260 = vld [vmem:[%s226 + $0xc0] sm:$0xff]
      %v261 = vld [vmem:[%s226 + $0xc8] sm:$0xff]
      %v262 = vld [vmem:[%s226 + $0xd0] sm:$0xff]
      %v263 = vld [vmem:[%s226 + $0xd8] sm:$0xff]
      %v264 = vld [vmem:[%s226 + $0xe0] sm:$0xff]
      %v265 = vld [vmem:[%s226 + $0xe8] sm:$0xff]
      %v266 = vld [vmem:[%s226 + $0xf0] sm:$0xff]
      %v267 = vld [vmem:[%s226 + $0xf8] sm:$0xff]
      %v268 = vld [vmem:[%s1] sm:$0x1]
      %v270 = vlaneseq
      %v271 = vshrl.u32 %v270, 7
      %v272 = vsub.s32 0, %v271
      %v273 = vrot.slane %v268, %v272
      %v275 = vmul.f32 %v236, %v273
      %v276 = vmul.f32 %v237, %v273
      %v277 = vmul.f32 %v238, %v273
      %v278 = vmul.f32 %v239, %v273
      %v279 = vmul.f32 %v240, %v273
      %v280 = vmul.f32 %v241, %v273
      %v281 = vmul.f32 %v242, %v273
      %v282 = vmul.f32 %v243, %v273
      %v283 = vmul.f32 %v244, %v273
      %v284 = vmul.f32 %v245, %v273
      %v285 = vmul.f32 %v246, %v273
      %v286 = vmul.f32 %v247, %v273
      %v287 = vmul.f32 %v248, %v273
      %v288 = vmul.f32 %v249, %v273
      %v289 = vmul.f32 %v250, %v273
      %v290 = vmul.f32 %v251, %v273
      %v291 = vmul.f32 %v252, %v273
      %v292 = vmul.f32 %v253, %v273
      %v293 = vmul.f32 %v254, %v273
      %v294 = vmul.f32 %v255, %v273
      %v295 = vmul.f32 %v256, %v273
      %v296 = vmul.f32 %v257, %v273
      %v297 = vmul.f32 %v258, %v273
      %v298 = vmul.f32 %v259, %v273
      %v299 = vmul.f32 %v260, %v273
      %v300 = vmul.f32 %v261, %v273
      %v301 = vmul.f32 %v262, %v273
      %v302 = vmul.f32 %v263, %v273
      %v303 = vmul.f32 %v264, %v273
      %v304 = vmul.f32 %v265, %v273
      %v305 = vmul.f32 %v266, %v273
      %v306 = vmul.f32 %v267, %v273
      %v307 = vld [vmem:[%s2] sm:$0x1]
      %v309 = vlaneseq
      %v310 = vshrl.u32 %v309, 7
      %v311 = vsub.s32 0, %v310
      %v312 = vrot.slane %v307, %v311
      %v314 = vadd.f32 %v275, %v312
      %v315 = vadd.f32 %v276, %v312
      %v316 = vadd.f32 %v277, %v312
      %v317 = vadd.f32 %v278, %v312
      %v318 = vadd.f32 %v279, %v312
      %v319 = vadd.f32 %v280, %v312
      %v320 = vadd.f32 %v281, %v312
      %v321 = vadd.f32 %v282, %v312
      %v322 = vadd.f32 %v283, %v312
      %v323 = vadd.f32 %v284, %v312
      %v324 = vadd.f32 %v285, %v312
      %v325 = vadd.f32 %v286, %v312
      %v326 = vadd.f32 %v287, %v312
      %v327 = vadd.f32 %v288, %v312
      %v328 = vadd.f32 %v289, %v312
      %v329 = vadd.f32 %v290, %v312
      %v330 = vadd.f32 %v291, %v312
      %v331 = vadd.f32 %v292, %v312
      %v332 = vadd.f32 %v293, %v312
      %v333 = vadd.f32 %v294, %v312
      %v334 = vadd.f32 %v295, %v312
      %v335 = vadd.f32 %v296, %v312
      %v336 = vadd.f32 %v297, %v312
      %v337 = vadd.f32 %v298, %v312
      %v338 = vadd.f32 %v299, %v312
      %v339 = vadd.f32 %v300, %v312
      %v340 = vadd.f32 %v301, %v312
      %v341 = vadd.f32 %v302, %v312
      %v342 = vadd.f32 %v303, %v312
      %v343 = vadd.f32 %v304, %v312
      %v344 = vadd.f32 %v305, %v312
      %v345 = vadd.f32 %v306, %v312
      %v346 = vmax.f32 %v314, 0.0
      %v347 = vmax.f32 %v315, 0.0
      %v348 = vmax.f32 %v316, 0.0
      %v349 = vmax.f32 %v317, 0.0
      %v350 = vmax.f32 %v318, 0.0
      %v351 = vmax.f32 %v319, 0.0
      %v352 = vmax.f32 %v320, 0.0
      %v353 = vmax.f32 %v321, 0.0
      %v354 = vmax.f32 %v322, 0.0
      %v355 = vmax.f32 %v323, 0.0
      %v356 = vmax.f32 %v324, 0.0
      %v357 = vmax.f32 %v325, 0.0
      %v358 = vmax.f32 %v326, 0.0
      %v359 = vmax.f32 %v327, 0.0
      %v360 = vmax.f32 %v328, 0.0
      %v361 = vmax.f32 %v329, 0.0
      %v362 = vmax.f32 %v330, 0.0
      %v363 = vmax.f32 %v331, 0.0
      %v364 = vmax.f32 %v332, 0.0
      %v365 = vmax.f32 %v333, 0.0
      %v366 = vmax.f32 %v334, 0.0
      %v367 = vmax.f32 %v335, 0.0
      %v368 = vmax.f32 %v336, 0.0
      %v369 = vmax.f32 %v337, 0.0
      %v370 = vmax.f32 %v338, 0.0
      %v371 = vmax.f32 %v339, 0.0
      %v372 = vmax.f32 %v340, 0.0
      %v373 = vmax.f32 %v341, 0.0
      %v374 = vmax.f32 %v342, 0.0
      %v375 = vmax.f32 %v343, 0.0
      %v376 = vmax.f32 %v344, 0.0
      %v377 = vmax.f32 %v345, 0.0
      %378 = vst [vmem:[#allocation2] sm:$0xff] 0.0
      %379 = vst [vmem:[#allocation2 + $0x8] sm:$0x1] 0.0
      %380 = vst [vmem:[#allocation2 + $0x10] sm:$0xff] 0.0
      %381 = vst [vmem:[#allocation2 + $0x18] sm:$0x1] 0.0
      %s382 = scalar_lea.vmem [#allocation2], 544
      %383 = vst [vmem:[%s382] sm:$0xff] 0.0
      %384 = vst [vmem:[%s382 + $0x8] sm:$0x1] 0.0
      %385 = vst [vmem:[%s382 + $0x10] sm:$0xff] 0.0
      %386 = vst [vmem:[%s382 + $0x18] sm:$0x1] 0.0
      %387 = vst [vmem:[#allocation2] sm:$0x1] 0.0
      %388 = vst [vmem:[#allocation2 + $0x20] sm:$0x1] 0.0
      %389 = vst [vmem:[#allocation2 + $0x40] sm:$0x1] 0.0
      %390 = vst [vmem:[#allocation2 + $0x60] sm:$0x1] 0.0
      %391 = vst [vmem:[#allocation2 + $0x80] sm:$0x1] 0.0
      %392 = vst [vmem:[#allocation2 + $0xa0] sm:$0x1] 0.0
      %393 = vst [vmem:[#allocation2 + $0xc0] sm:$0x1] 0.0
      %394 = vst [vmem:[#allocation2 + $0xe0] sm:$0x1] 0.0
      %395 = vst [vmem:[#allocation2 + $0x100] sm:$0x1] 0.0
      %396 = vst [vmem:[#allocation2 + $0x120] sm:$0x1] 0.0
      %397 = vst [vmem:[#allocation2 + $0x140] sm:$0x1] 0.0
      %398 = vst [vmem:[#allocation2 + $0x160] sm:$0x1] 0.0
      %399 = vst [vmem:[#allocation2 + $0x180] sm:$0x1] 0.0
      %400 = vst [vmem:[#allocation2 + $0x1a0] sm:$0x1] 0.0
      %401 = vst [vmem:[#allocation2 + $0x1c0] sm:$0x1] 0.0
      %402 = vst [vmem:[#allocation2 + $0x1e0] sm:$0x1] 0.0
      %403 = vst [vmem:[#allocation2 + $0x200] sm:$0x1] 0.0
      %404 = vst [vmem:[#allocation2 + $0x220] sm:$0x1] 0.0
      %s405 = scalar_lea.vmem [#allocation2], 16
      %406 = vst [vmem:[%s405 + $0x8] sm:$0x1] 0.0
      %407 = vst [vmem:[%s405 + $0x28] sm:$0x1] 0.0
      %408 = vst [vmem:[%s405 + $0x48] sm:$0x1] 0.0
      %409 = vst [vmem:[%s405 + $0x68] sm:$0x1] 0.0
      %410 = vst [vmem:[%s405 + $0x88] sm:$0x1] 0.0
      %411 = vst [vmem:[%s405 + $0xa8] sm:$0x1] 0.0
      %412 = vst [vmem:[%s405 + $0xc8] sm:$0x1] 0.0
      %413 = vst [vmem:[%s405 + $0xe8] sm:$0x1] 0.0
      %414 = vst [vmem:[%s405 + $0x108] sm:$0x1] 0.0
      %415 = vst [vmem:[%s405 + $0x128] sm:$0x1] 0.0
      %416 = vst [vmem:[%s405 + $0x148] sm:$0x1] 0.0
      %417 = vst [vmem:[%s405 + $0x168] sm:$0x1] 0.0
      %418 = vst [vmem:[%s405 + $0x188] sm:$0x1] 0.0
      %419 = vst [vmem:[%s405 + $0x1a8] sm:$0x1] 0.0
      %420 = vst [vmem:[%s405 + $0x1c8] sm:$0x1] 0.0
      %421 = vst [vmem:[%s405 + $0x1e8] sm:$0x1] 0.0
      %422 = vst [vmem:[%s405 + $0x208] sm:$0x1] 0.0
      %423 = vst [vmem:[%s405 + $0x228] sm:$0x1] 0.0
      %424 = vst [vmem:[#allocation4] sm:$0xff] %v346
      %425 = vst [vmem:[#allocation4 + $0x8] sm:$0xff] %v347
      %426 = vst [vmem:[#allocation4 + $0x10] sm:$0xff] %v348
      %427 = vst [vmem:[#allocation4 + $0x18] sm:$0xff] %v349
      %428 = vst [vmem:[#allocation4 + $0x20] sm:$0xff] %v350
      %429 = vst [vmem:[#allocation4 + $0x28] sm:$0xff] %v351
      %430 = vst [vmem:[#allocation4 + $0x30] sm:$0xff] %v352
      %431 = vst [vmem:[#allocation4 + $0x38] sm:$0xff] %v353
      %432 = vst [vmem:[#allocation4 + $0x40] sm:$0xff] %v354
      %433 = vst [vmem:[#allocation4 + $0x48] sm:$0xff] %v355
      %434 = vst [vmem:[#allocation4 + $0x50] sm:$0xff] %v356
      %435 = vst [vmem:[#allocation4 + $0x58] sm:$0xff] %v357
      %436 = vst [vmem:[#allocation4 + $0x60] sm:$0xff] %v358
      %437 = vst [vmem:[#allocation4 + $0x68] sm:$0xff] %v359
      %438 = vst [vmem:[#allocation4 + $0x70] sm:$0xff] %v360
      %439 = vst [vmem:[#allocation4 + $0x78] sm:$0xff] %v361
      %440 = vst [vmem:[#allocation4 + $0x80] sm:$0xff] %v362
      %441 = vst [vmem:[#allocation4 + $0x88] sm:$0xff] %v363
      %442 = vst [vmem:[#allocation4 + $0x90] sm:$0xff] %v364
      %443 = vst [vmem:[#allocation4 + $0x98] sm:$0xff] %v365
      %444 = vst [vmem:[#allocation4 + $0xa0] sm:$0xff] %v366
      %445 = vst [vmem:[#allocation4 + $0xa8] sm:$0xff] %v367
      %446 = vst [vmem:[#allocation4 + $0xb0] sm:$0xff] %v368
      %447 = vst [vmem:[#allocation4 + $0xb8] sm:$0xff] %v369
      %448 = vst [vmem:[#allocation4 + $0xc0] sm:$0xff] %v370
      %449 = vst [vmem:[#allocation4 + $0xc8] sm:$0xff] %v371
      %450 = vst [vmem:[#allocation4 + $0xd0] sm:$0xff] %v372
      %451 = vst [vmem:[#allocation4 + $0xd8] sm:$0xff] %v373
      %452 = vst [vmem:[#allocation4 + $0xe0] sm:$0xff] %v374
      %453 = vst [vmem:[#allocation4 + $0xe8] sm:$0xff] %v375
      %454 = vst [vmem:[#allocation4 + $0xf0] sm:$0xff] %v376
      %455 = vst [vmem:[#allocation4 + $0xf8] sm:$0xff] %v377
      %s456 = scalar_lea.vmem [#allocation4], 1
      %v457 = vld [vmem:[%s456] ss:$2 sm:$0xff]
      %s458 = scalar_lea.vmem [#allocation4], 17
      %v459 = vld [vmem:[%s458] ss:$2 sm:$0xff]
      %s460 = scalar_lea.vmem [#allocation4], 33
      %v461 = vld [vmem:[%s460] ss:$2 sm:$0xff]
      %s462 = scalar_lea.vmem [#allocation4], 49
      %v463 = vld [vmem:[%s462] ss:$2 sm:$0xff]
      %s464 = scalar_lea.vmem [#allocation4], 65
      %v465 = vld [vmem:[%s464] ss:$2 sm:$0xff]
      %s466 = scalar_lea.vmem [#allocation4], 81
      %v467 = vld [vmem:[%s466] ss:$2 sm:$0xff]
      %s468 = scalar_lea.vmem [#allocation4], 97
      %v469 = vld [vmem:[%s468] ss:$2 sm:$0xff]
      %s470 = scalar_lea.vmem [#allocation4], 113
      %v471 = vld [vmem:[%s470] ss:$2 sm:$0xff]
      %s472 = scalar_lea.vmem [#allocation4], 129
      %v473 = vld [vmem:[%s472] ss:$2 sm:$0xff]
      %s474 = scalar_lea.vmem [#allocation4], 145
      %v475 = vld [vmem:[%s474] ss:$2 sm:$0xff]
      %s476 = scalar_lea.vmem [#allocation4], 161
      %v477 = vld [vmem:[%s476] ss:$2 sm:$0xff]
      %s478 = scalar_lea.vmem [#allocation4], 177
      %v479 = vld [vmem:[%s478] ss:$2 sm:$0xff]
      %s480 = scalar_lea.vmem [#allocation4], 193
      %v481 = vld [vmem:[%s480] ss:$2 sm:$0xff]
      %s482 = scalar_lea.vmem [#allocation4], 209
      %v483 = vld [vmem:[%s482] ss:$2 sm:$0xff]
      %s484 = scalar_lea.vmem [#allocation4], 225
      %v485 = vld [vmem:[%s484] ss:$2 sm:$0xff]
      %s486 = scalar_lea.vmem [#allocation4], 241
      %v487 = vld [vmem:[%s486] ss:$2 sm:$0xff]
      %s488 = scalar_lea.vmem [#allocation2], 32
      %489 = vst [vmem:[%s488 + $0x1] sm:$0xff] %v457
      %490 = vst [vmem:[%s488 + $0x21] sm:$0xff] %v459
      %491 = vst [vmem:[%s488 + $0x41] sm:$0xff] %v461
      %492 = vst [vmem:[%s488 + $0x61] sm:$0xff] %v463
      %493 = vst [vmem:[%s488 + $0x81] sm:$0xff] %v465
      %494 = vst [vmem:[%s488 + $0xa1] sm:$0xff] %v467
      %495 = vst [vmem:[%s488 + $0xc1] sm:$0xff] %v469
      %496 = vst [vmem:[%s488 + $0xe1] sm:$0xff] %v471
      %497 = vst [vmem:[%s488 + $0x101] sm:$0xff] %v473
      %498 = vst [vmem:[%s488 + $0x121] sm:$0xff] %v475
      %499 = vst [vmem:[%s488 + $0x141] sm:$0xff] %v477
      %500 = vst [vmem:[%s488 + $0x161] sm:$0xff] %v479
      %501 = vst [vmem:[%s488 + $0x181] sm:$0xff] %v481
      %502 = vst [vmem:[%s488 + $0x1a1] sm:$0xff] %v483
      %503 = vst [vmem:[%s488 + $0x1c1] sm:$0xff] %v485
      %504 = vst [vmem:[%s488 + $0x1e1] sm:$0xff] %v487
      %v505 = vld [vmem:[#allocation4] ss:$2 sm:$0xff]
      %s506 = scalar_lea.vmem [#allocation4], 16
      %v507 = vld [vmem:[%s506] ss:$2 sm:$0xff]
      %s508 = scalar_lea.vmem [#allocation4], 32
      %v509 = vld [vmem:[%s508] ss:$2 sm:$0xff]
      %s510 = scalar_lea.vmem [#allocation4], 48
      %v511 = vld [vmem:[%s510] ss:$2 sm:$0xff]
      %s512 = scalar_lea.vmem [#allocation4], 64
      %v513 = vld [vmem:[%s512] ss:$2 sm:$0xff]
      %s514 = scalar_lea.vmem [#allocation4], 80
      %v515 = vld [vmem:[%s514] ss:$2 sm:$0xff]
      %s516 = scalar_lea.vmem [#allocation4], 96
      %v517 = vld [vmem:[%s516] ss:$2 sm:$0xff]
      %s518 = scalar_lea.vmem [#allocation4], 112
      %v519 = vld [vmem:[%s518] ss:$2 sm:$0xff]
      %s520 = scalar_lea.vmem [#allocation4], 128
      %v521 = vld [vmem:[%s520] ss:$2 sm:$0xff]
      %s522 = scalar_lea.vmem [#allocation4], 144
      %v523 = vld [vmem:[%s522] ss:$2 sm:$0xff]
      %s524 = scalar_lea.vmem [#allocation4], 160
      %v525 = vld [vmem:[%s524] ss:$2 sm:$0xff]
      %s526 = scalar_lea.vmem [#allocation4], 176
      %v527 = vld [vmem:[%s526] ss:$2 sm:$0xff]
      %s528 = scalar_lea.vmem [#allocation4], 192
      %v529 = vld [vmem:[%s528] ss:$2 sm:$0xff]
      %s530 = scalar_lea.vmem [#allocation4], 208
      %v531 = vld [vmem:[%s530] ss:$2 sm:$0xff]
      %s532 = scalar_lea.vmem [#allocation4], 224
      %v533 = vld [vmem:[%s532] ss:$2 sm:$0xff]
      %s534 = scalar_lea.vmem [#allocation4], 240
      %v535 = vld [vmem:[%s534] ss:$2 sm:$0xff]
      %s536 = scalar_lea.vmem [#allocation2], 48
      %537 = vst [vmem:[%s536] sm:$0xff] %v505
      %538 = vst [vmem:[%s536 + $0x20] sm:$0xff] %v507
      %539 = vst [vmem:[%s536 + $0x40] sm:$0xff] %v509
      %540 = vst [vmem:[%s536 + $0x60] sm:$0xff] %v511
      %541 = vst [vmem:[%s536 + $0x80] sm:$0xff] %v513
      %542 = vst [vmem:[%s536 + $0xa0] sm:$0xff] %v515
      %543 = vst [vmem:[%s536 + $0xc0] sm:$0xff] %v517
      %544 = vst [vmem:[%s536 + $0xe0] sm:$0xff] %v519
      %545 = vst [vmem:[%s536 + $0x100] sm:$0xff] %v521
      %546 = vst [vmem:[%s536 + $0x120] sm:$0xff] %v523
      %547 = vst [vmem:[%s536 + $0x140] sm:$0xff] %v525
      %548 = vst [vmem:[%s536 + $0x160] sm:$0xff] %v527
      %549 = vst [vmem:[%s536 + $0x180] sm:$0xff] %v529
      %550 = vst [vmem:[%s536 + $0x1a0] sm:$0xff] %v531
      %551 = vst [vmem:[%s536 + $0x1c0] sm:$0xff] %v533
      %552 = vst [vmem:[%s536 + $0x1e0] sm:$0xff] %v535
      %v553 = vld [vmem:[#allocation2] sm:$0xff]
      %v554 = vld [vmem:[#allocation2 + $0x40] sm:$0xff]
      %v555 = vld [vmem:[#allocation2 + $0x80] sm:$0xff]
      %v556 = vld [vmem:[#allocation2 + $0xc0] sm:$0xff]
      %v557 = vld [vmem:[#allocation2 + $0x100] sm:$0xff]
      %v558 = vld [vmem:[#allocation2 + $0x140] sm:$0xff]
      %v559 = vld [vmem:[#allocation2 + $0x180] sm:$0xff]
      %v560 = vld [vmem:[#allocation2 + $0x1c0] sm:$0xff]
      %561 = vst [vmem:[#allocation3] sm:$0xff] %v553
      %562 = vst [vmem:[#allocation3 + $0x48] sm:$0xff] %v554
      %563 = vst [vmem:[#allocation3 + $0x90] sm:$0xff] %v555
      %564 = vst [vmem:[#allocation3 + $0xd8] sm:$0xff] %v556
      %565 = vst [vmem:[#allocation3 + $0x120] sm:$0xff] %v557
      %566 = vst [vmem:[#allocation3 + $0x168] sm:$0xff] %v558
      %567 = vst [vmem:[#allocation3 + $0x1b0] sm:$0xff] %v559
      %568 = vst [vmem:[#allocation3 + $0x1f8] sm:$0xff] %v560
      %v569 = vld [vmem:[%s405] sm:$0xff]
      %v570 = vld [vmem:[%s405 + $0x40] sm:$0xff]
      %v571 = vld [vmem:[%s405 + $0x80] sm:$0xff]
      %v572 = vld [vmem:[%s405 + $0xc0] sm:$0xff]
      %v573 = vld [vmem:[%s405 + $0x100] sm:$0xff]
      %v574 = vld [vmem:[%s405 + $0x140] sm:$0xff]
      %v575 = vld [vmem:[%s405 + $0x180] sm:$0xff]
      %v576 = vld [vmem:[%s405 + $0x1c0] sm:$0xff]
      %577 = vst [vmem:[#allocation3 + $0x8] sm:$0xff] %v569
      %578 = vst [vmem:[#allocation3 + $0x50] sm:$0xff] %v570
      %579 = vst [vmem:[#allocation3 + $0x98] sm:$0xff] %v571
      %580 = vst [vmem:[#allocation3 + $0xe0] sm:$0xff] %v572
      %581 = vst [vmem:[#allocation3 + $0x128] sm:$0xff] %v573
      %582 = vst [vmem:[#allocation3 + $0x170] sm:$0xff] %v574
      %583 = vst [vmem:[#allocation3 + $0x1b8] sm:$0xff] %v575
      %584 = vst [vmem:[#allocation3 + $0x200] sm:$0xff] %v576
      %v585 = vld [vmem:[#allocation2 + $0x1] sm:$0xff]
      %v586 = vld [vmem:[#allocation2 + $0x41] sm:$0xff]
      %v587 = vld [vmem:[#allocation2 + $0x81] sm:$0xff]
      %v588 = vld [vmem:[#allocation2 + $0xc1] sm:$0xff]
      %v589 = vld [vmem:[#allocation2 + $0x101] sm:$0xff]
      %v590 = vld [vmem:[#allocation2 + $0x141] sm:$0xff]
      %v591 = vld [vmem:[#allocation2 + $0x181] sm:$0xff]
      %v592 = vld [vmem:[#allocation2 + $0x1c1] sm:$0xff]
      %593 = vst [vmem:[#allocation3 + $0x10] sm:$0xff] %v585
      %594 = vst [vmem:[#allocation3 + $0x58] sm:$0xff] %v586
      %595 = vst [vmem:[#allocation3 + $0xa0] sm:$0xff] %v587
      %596 = vst [vmem:[#allocation3 + $0xe8] sm:$0xff] %v588
      %597 = vst [vmem:[#allocation3 + $0x130] sm:$0xff] %v589
      %598 = vst [vmem:[#allocation3 + $0x178] sm:$0xff] %v590
      %599 = vst [vmem:[#allocation3 + $0x1c0] sm:$0xff] %v591
      %600 = vst [vmem:[#allocation3 + $0x208] sm:$0xff] %v592
      %v601 = vld [vmem:[%s488] sm:$0xff]
      %v602 = vld [vmem:[%s488 + $0x40] sm:$0xff]
      %v603 = vld [vmem:[%s488 + $0x80] sm:$0xff]
      %v604 = vld [vmem:[%s488 + $0xc0] sm:$0xff]
      %v605 = vld [vmem:[%s488 + $0x100] sm:$0xff]
      %v606 = vld [vmem:[%s488 + $0x140] sm:$0xff]
      %v607 = vld [vmem:[%s488 + $0x180] sm:$0xff]
      %v608 = vld [vmem:[%s488 + $0x1c0] sm:$0xff]
      %609 = vst [vmem:[#allocation3 + $0x18] sm:$0xff] %v601
      %610 = vst [vmem:[#allocation3 + $0x60] sm:$0xff] %v602
      %611 = vst [vmem:[#allocation3 + $0xa8] sm:$0xff] %v603
      %612 = vst [vmem:[#allocation3 + $0xf0] sm:$0xff] %v604
      %613 = vst [vmem:[#allocation3 + $0x138] sm:$0xff] %v605
      %614 = vst [vmem:[#allocation3 + $0x180] sm:$0xff] %v606
      %615 = vst [vmem:[#allocation3 + $0x1c8] sm:$0xff] %v607
      %616 = vst [vmem:[#allocation3 + $0x210] sm:$0xff] %v608
      %v617 = vld [vmem:[%s536] sm:$0xff]
      %v618 = vld [vmem:[%s536 + $0x40] sm:$0xff]
      %v619 = vld [vmem:[%s536 + $0x80] sm:$0xff]
      %v620 = vld [vmem:[%s536 + $0xc0] sm:$0xff]
      %v621 = vld [vmem:[%s536 + $0x100] sm:$0xff]
      %v622 = vld [vmem:[%s536 + $0x140] sm:$0xff]
      %v623 = vld [vmem:[%s536 + $0x180] sm:$0xff]
      %v624 = vld [vmem:[%s536 + $0x1c0] sm:$0xff]
      %625 = vst [vmem:[#allocation3 + $0x20] sm:$0xff] %v617
      %626 = vst [vmem:[#allocation3 + $0x68] sm:$0xff] %v618
      %627 = vst [vmem:[#allocation3 + $0xb0] sm:$0xff] %v619
      %628 = vst [vmem:[#allocation3 + $0xf8] sm:$0xff] %v620
      %629 = vst [vmem:[#allocation3 + $0x140] sm:$0xff] %v621
      %630 = vst [vmem:[#allocation3 + $0x188] sm:$0xff] %v622
      %631 = vst [vmem:[#allocation3 + $0x1d0] sm:$0xff] %v623
      %632 = vst [vmem:[#allocation3 + $0x218] sm:$0xff] %v624
      %v633 = vld [vmem:[%s488 + $0x1] sm:$0xff]
      %v634 = vld [vmem:[%s488 + $0x41] sm:$0xff]
      %v635 = vld [vmem:[%s488 + $0x81] sm:$0xff]
      %v636 = vld [vmem:[%s488 + $0xc1] sm:$0xff]
      %v637 = vld [vmem:[%s488 + $0x101] sm:$0xff]
      %v638 = vld [vmem:[%s488 + $0x141] sm:$0xff]
      %v639 = vld [vmem:[%s488 + $0x181] sm:$0xff]
      %v640 = vld [vmem:[%s488 + $0x1c1] sm:$0xff]
      %641 = vst [vmem:[#allocation3 + $0x28] sm:$0xff] %v633
      %642 = vst [vmem:[#allocation3 + $0x70] sm:$0xff] %v634
      %643 = vst [vmem:[#allocation3 + $0xb8] sm:$0xff] %v635
      %644 = vst [vmem:[#allocation3 + $0x100] sm:$0xff] %v636
      %645 = vst [vmem:[#allocation3 + $0x148] sm:$0xff] %v637
      %646 = vst [vmem:[#allocation3 + $0x190] sm:$0xff] %v638
      %647 = vst [vmem:[#allocation3 + $0x1d8] sm:$0xff] %v639
      %648 = vst [vmem:[#allocation3 + $0x220] sm:$0xff] %v640
      %s649 = scalar_lea.vmem [#allocation2], 64
      %v650 = vld [vmem:[%s649] sm:$0xff]
      %v651 = vld [vmem:[%s649 + $0x40] sm:$0xff]
      %v652 = vld [vmem:[%s649 + $0x80] sm:$0xff]
      %v653 = vld [vmem:[%s649 + $0xc0] sm:$0xff]
      %v654 = vld [vmem:[%s649 + $0x100] sm:$0xff]
      %v655 = vld [vmem:[%s649 + $0x140] sm:$0xff]
      %v656 = vld [vmem:[%s649 + $0x180] sm:$0xff]
      %v657 = vld [vmem:[%s649 + $0x1c0] sm:$0xff]
      %658 = vst [vmem:[#allocation3 + $0x30] sm:$0xff] %v650
      %659 = vst [vmem:[#allocation3 + $0x78] sm:$0xff] %v651
      %660 = vst [vmem:[#allocation3 + $0xc0] sm:$0xff] %v652
      %661 = vst [vmem:[#allocation3 + $0x108] sm:$0xff] %v653
      %662 = vst [vmem:[#allocation3 + $0x150] sm:$0xff] %v654
      %663 = vst [vmem:[#allocation3 + $0x198] sm:$0xff] %v655
      %664 = vst [vmem:[#allocation3 + $0x1e0] sm:$0xff] %v656
      %665 = vst [vmem:[#allocation3 + $0x228] sm:$0xff] %v657
      %s666 = scalar_lea.vmem [#allocation2], 80
      %v667 = vld [vmem:[%s666] sm:$0xff]
      %v668 = vld [vmem:[%s666 + $0x40] sm:$0xff]
      %v669 = vld [vmem:[%s666 + $0x80] sm:$0xff]
      %v670 = vld [vmem:[%s666 + $0xc0] sm:$0xff]
      %v671 = vld [vmem:[%s666 + $0x100] sm:$0xff]
      %v672 = vld [vmem:[%s666 + $0x140] sm:$0xff]
      %v673 = vld [vmem:[%s666 + $0x180] sm:$0xff]
      %v674 = vld [vmem:[%s666 + $0x1c0] sm:$0xff]
      %675 = vst [vmem:[#allocation3 + $0x38] sm:$0xff] %v667
      %676 = vst [vmem:[#allocation3 + $0x80] sm:$0xff] %v668
      %677 = vst [vmem:[#allocation3 + $0xc8] sm:$0xff] %v669
      %678 = vst [vmem:[#allocation3 + $0x110] sm:$0xff] %v670
      %679 = vst [vmem:[#allocation3 + $0x158] sm:$0xff] %v671
      %680 = vst [vmem:[#allocation3 + $0x1a0] sm:$0xff] %v672
      %681 = vst [vmem:[#allocation3 + $0x1e8] sm:$0xff] %v673
      %682 = vst [vmem:[#allocation3 + $0x230] sm:$0xff] %v674
      %v683 = vld [vmem:[%s649 + $0x1] sm:$0xff]
      %v684 = vld [vmem:[%s649 + $0x41] sm:$0xff]
      %v685 = vld [vmem:[%s649 + $0x81] sm:$0xff]
      %v686 = vld [vmem:[%s649 + $0xc1] sm:$0xff]
      %v687 = vld [vmem:[%s649 + $0x101] sm:$0xff]
      %v688 = vld [vmem:[%s649 + $0x141] sm:$0xff]
      %v689 = vld [vmem:[%s649 + $0x181] sm:$0xff]
      %v690 = vld [vmem:[%s649 + $0x1c1] sm:$0xff]
      %691 = vst [vmem:[#allocation3 + $0x40] sm:$0xff] %v683
      %692 = vst [vmem:[#allocation3 + $0x88] sm:$0xff] %v684
      %693 = vst [vmem:[#allocation3 + $0xd0] sm:$0xff] %v685
      %694 = vst [vmem:[#allocation3 + $0x118] sm:$0xff] %v686
      %695 = vst [vmem:[#allocation3 + $0x160] sm:$0xff] %v687
      %696 = vst [vmem:[#allocation3 + $0x1a8] sm:$0xff] %v688
      %697 = vst [vmem:[#allocation3 + $0x1f0] sm:$0xff] %v689
      %698 = vst [vmem:[#allocation3 + $0x238] sm:$0xff] %v690
      %v699 = vld [vmem:[#allocation3] sm:$0xff]
      %v700 = vld [vmem:[#allocation3 + $0x8] sm:$0xff]
      %v701 = vld [vmem:[#allocation3 + $0x10] sm:$0xff]
      %v702 = vld [vmem:[#allocation3 + $0x18] sm:$0xff]
      %v703 = vld [vmem:[#allocation3 + $0x20] sm:$0xff]
      %v704 = vld [vmem:[#allocation3 + $0x28] sm:$0xff]
      %v705 = vld [vmem:[#allocation3 + $0x30] sm:$0xff]
      %v706 = vld [vmem:[#allocation3 + $0x38] sm:$0xff]
      %v707 = vld [vmem:[#allocation3 + $0x40] sm:$0xff]
      %v708 = vld [vmem:[#allocation3 + $0x48] sm:$0xff]
      %v709 = vld [vmem:[#allocation3 + $0x50] sm:$0xff]
      %v710 = vld [vmem:[#allocation3 + $0x58] sm:$0xff]
      %v711 = vld [vmem:[#allocation3 + $0x60] sm:$0xff]
      %v712 = vld [vmem:[#allocation3 + $0x68] sm:$0xff]
      %v713 = vld [vmem:[#allocation3 + $0x70] sm:$0xff]
      %v714 = vld [vmem:[#allocation3 + $0x78] sm:$0xff]
      %v715 = vld [vmem:[#allocation3 + $0x80] sm:$0xff]
      %v716 = vld [vmem:[#allocation3 + $0x88] sm:$0xff]
      %v717 = vld [vmem:[#allocation3 + $0x90] sm:$0xff]
      %v718 = vld [vmem:[#allocation3 + $0x98] sm:$0xff]
      %v719 = vld [vmem:[#allocation3 + $0xa0] sm:$0xff]
      %v720 = vld [vmem:[#allocation3 + $0xa8] sm:$0xff]
      %v721 = vld [vmem:[#allocation3 + $0xb0] sm:$0xff]
      %v722 = vld [vmem:[#allocation3 + $0xb8] sm:$0xff]
      %v723 = vld [vmem:[#allocation3 + $0xc0] sm:$0xff]
      %v724 = vld [vmem:[#allocation3 + $0xc8] sm:$0xff]
      %v725 = vld [vmem:[#allocation3 + $0xd0] sm:$0xff]
      %v726 = vld [vmem:[#allocation3 + $0xd8] sm:$0xff]
      %v727 = vld [vmem:[#allocation3 + $0xe0] sm:$0xff]
      %v728 = vld [vmem:[#allocation3 + $0xe8] sm:$0xff]
      %v729 = vld [vmem:[#allocation3 + $0xf0] sm:$0xff]
      %v730 = vld [vmem:[#allocation3 + $0xf8] sm:$0xff]
      %v731 = vld [vmem:[#allocation3 + $0x100] sm:$0xff]
      %v732 = vld [vmem:[#allocation3 + $0x108] sm:$0xff]
      %v733 = vld [vmem:[#allocation3 + $0x110] sm:$0xff]
      %v734 = vld [vmem:[#allocation3 + $0x118] sm:$0xff]
      %v735 = vld [vmem:[#allocation3 + $0x120] sm:$0xff]
      %v736 = vld [vmem:[#allocation3 + $0x128] sm:$0xff]
      %v737 = vld [vmem:[#allocation3 + $0x130] sm:$0xff]
      %v738 = vld [vmem:[#allocation3 + $0x138] sm:$0xff]
      %v739 = vld [vmem:[#allocation3 + $0x140] sm:$0xff]
      %v740 = vld [vmem:[#allocation3 + $0x148] sm:$0xff]
      %v741 = vld [vmem:[#allocation3 + $0x150] sm:$0xff]
      %v742 = vld [vmem:[#allocation3 + $0x158] sm:$0xff]
      %v743 = vld [vmem:[#allocation3 + $0x160] sm:$0xff]
      %v744 = vld [vmem:[#allocation3 + $0x168] sm:$0xff]
      %v745 = vld [vmem:[#allocation3 + $0x170] sm:$0xff]
      %v746 = vld [vmem:[#allocation3 + $0x178] sm:$0xff]
      %v747 = vld [vmem:[#allocation3 + $0x180] sm:$0xff]
      %v748 = vld [vmem:[#allocation3 + $0x188] sm:$0xff]
      %v749 = vld [vmem:[#allocation3 + $0x190] sm:$0xff]
      %v750 = vld [vmem:[#allocation3 + $0x198] sm:$0xff]
      %v751 = vld [vmem:[#allocation3 + $0x1a0] sm:$0xff]
      %v752 = vld [vmem:[#allocation3 + $0x1a8] sm:$0xff]
      %v753 = vld [vmem:[#allocation3 + $0x1b0] sm:$0xff]
      %v754 = vld [vmem:[#allocation3 + $0x1b8] sm:$0xff]
      %v755 = vld [vmem:[#allocation3 + $0x1c0] sm:$0xff]
      %v756 = vld [vmem:[#allocation3 + $0x1c8] sm:$0xff]
      %v757 = vld [vmem:[#allocation3 + $0x1d0] sm:$0xff]
      %v758 = vld [vmem:[#allocation3 + $0x1d8] sm:$0xff]
      %v759 = vld [vmem:[#allocation3 + $0x1e0] sm:$0xff]
      %v760 = vld [vmem:[#allocation3 + $0x1e8] sm:$0xff]
      %v761 = vld [vmem:[#allocation3 + $0x1f0] sm:$0xff]
      %v762 = vld [vmem:[#allocation3 + $0x1f8] sm:$0xff]
      %v763 = vld [vmem:[#allocation3 + $0x200] sm:$0xff]
      %v764 = vld [vmem:[#allocation3 + $0x208] sm:$0xff]
      %v765 = vld [vmem:[#allocation3 + $0x210] sm:$0xff]
      %v766 = vld [vmem:[#allocation3 + $0x218] sm:$0xff]
      %v767 = vld [vmem:[#allocation3 + $0x220] sm:$0xff]
      %v768 = vld [vmem:[#allocation3 + $0x228] sm:$0xff]
      %v769 = vld [vmem:[#allocation3 + $0x230] sm:$0xff]
      %v770 = vld [vmem:[#allocation3 + $0x238] sm:$0xff]
      %v771 = vld [vmem:[%s3] sm:$0xff]
      %v772 = vld [vmem:[%s3 + $0x8] sm:$0xff]
      %v773 = vld [vmem:[%s3 + $0x10] sm:$0xff]
      %v774 = vld [vmem:[%s3 + $0x18] sm:$0xff]
      %v775 = vld [vmem:[%s3 + $0x20] sm:$0xff]
      %v776 = vld [vmem:[%s3 + $0x28] sm:$0xff]
      %v777 = vld [vmem:[%s3 + $0x30] sm:$0xff]
      %v778 = vld [vmem:[%s3 + $0x38] sm:$0xff]
      %v779 = vld [vmem:[%s3 + $0x40] sm:$0xff]
      %v780 = vld [vmem:[%s3 + $0x48] sm:$0xff]
      %v781 = vld [vmem:[%s3 + $0x50] sm:$0xff]
      %v782 = vld [vmem:[%s3 + $0x58] sm:$0xff]
      %v783 = vld [vmem:[%s3 + $0x60] sm:$0xff]
      %v784 = vld [vmem:[%s3 + $0x68] sm:$0xff]
      %v785 = vld [vmem:[%s3 + $0x70] sm:$0xff]
      %v786 = vld [vmem:[%s3 + $0x78] sm:$0xff]
      %v787 = vld [vmem:[%s3 + $0x80] sm:$0xff]
      %v788 = vld [vmem:[%s3 + $0x88] sm:$0xff]
      %v789 = vld [vmem:[%s3 + $0x90] sm:$0xff]
      %v790 = vld [vmem:[%s3 + $0x98] sm:$0xff]
      %v791 = vld [vmem:[%s3 + $0xa0] sm:$0xff]
      %v792 = vld [vmem:[%s3 + $0xa8] sm:$0xff]
      %v793 = vld [vmem:[%s3 + $0xb0] sm:$0xff]
      %v794 = vld [vmem:[%s3 + $0xb8] sm:$0xff]
      %v795 = vld [vmem:[%s3 + $0xc0] sm:$0xff]
      %v796 = vld [vmem:[%s3 + $0xc8] sm:$0xff]
      %v797 = vld [vmem:[%s3 + $0xd0] sm:$0xff]
      %v798 = vld [vmem:[%s3 + $0xd8] sm:$0xff]
      %v799 = vld [vmem:[%s3 + $0xe0] sm:$0xff]
      %v800 = vld [vmem:[%s3 + $0xe8] sm:$0xff]
      %v801 = vld [vmem:[%s3 + $0xf0] sm:$0xff]
      %v802 = vld [vmem:[%s3 + $0xf8] sm:$0xff]
      %v803 = vld [vmem:[%s3 + $0x100] sm:$0xff]
      %v804 = vld [vmem:[%s3 + $0x108] sm:$0xff]
      %v805 = vld [vmem:[%s3 + $0x110] sm:$0xff]
      %v806 = vld [vmem:[%s3 + $0x118] sm:$0xff]
      %v807 = vld [vmem:[%s3 + $0x120] sm:$0xff]
      %v808 = vld [vmem:[%s3 + $0x128] sm:$0xff]
      %v809 = vld [vmem:[%s3 + $0x130] sm:$0xff]
      %v810 = vld [vmem:[%s3 + $0x138] sm:$0xff]
      %v811 = vld [vmem:[%s3 + $0x140] sm:$0xff]
      %v812 = vld [vmem:[%s3 + $0x148] sm:$0xff]
      %v813 = vld [vmem:[%s3 + $0x150] sm:$0xff]
      %v814 = vld [vmem:[%s3 + $0x158] sm:$0xff]
      %v815 = vld [vmem:[%s3 + $0x160] sm:$0xff]
      %v816 = vld [vmem:[%s3 + $0x168] sm:$0xff]
      %v817 = vld [vmem:[%s3 + $0x170] sm:$0xff]
      %v818 = vld [vmem:[%s3 + $0x178] sm:$0xff]
      %v819 = vld [vmem:[%s3 + $0x180] sm:$0xff]
      %v820 = vld [vmem:[%s3 + $0x188] sm:$0xff]
      %v821 = vld [vmem:[%s3 + $0x190] sm:$0xff]
      %v822 = vld [vmem:[%s3 + $0x198] sm:$0xff]
      %v823 = vld [vmem:[%s3 + $0x1a0] sm:$0xff]
      %v824 = vld [vmem:[%s3 + $0x1a8] sm:$0xff]
      %v825 = vld [vmem:[%s3 + $0x1b0] sm:$0xff]
      %v826 = vld [vmem:[%s3 + $0x1b8] sm:$0xff]
      %v827 = vld [vmem:[%s3 + $0x1c0] sm:$0xff]
      %v828 = vld [vmem:[%s3 + $0x1c8] sm:$0xff]
      %v829 = vld [vmem:[%s3 + $0x1d0] sm:$0xff]
      %v830 = vld [vmem:[%s3 + $0x1d8] sm:$0xff]
      %v831 = vld [vmem:[%s3 + $0x1e0] sm:$0xff]
      %v832 = vld [vmem:[%s3 + $0x1e8] sm:$0xff]
      %v833 = vld [vmem:[%s3 + $0x1f0] sm:$0xff]
      %v834 = vld [vmem:[%s3 + $0x1f8] sm:$0xff]
      %v835 = vld [vmem:[%s3 + $0x200] sm:$0xff]
      %v836 = vld [vmem:[%s3 + $0x208] sm:$0xff]
      %v837 = vld [vmem:[%s3 + $0x210] sm:$0xff]
      %v838 = vld [vmem:[%s3 + $0x218] sm:$0xff]
      %v839 = vld [vmem:[%s3 + $0x220] sm:$0xff]
      %v840 = vld [vmem:[%s3 + $0x228] sm:$0xff]
      %v841 = vld [vmem:[%s3 + $0x230] sm:$0xff]
      %v842 = vld [vmem:[%s3 + $0x238] sm:$0xff]
      %v843 = vld [vmem:[%s3 + $0x240] sm:$0xff]
      %v844 = vld [vmem:[%s3 + $0x248] sm:$0xff]
      %v845 = vld [vmem:[%s3 + $0x250] sm:$0xff]
      %v846 = vld [vmem:[%s3 + $0x258] sm:$0xff]
      %v847 = vld [vmem:[%s3 + $0x260] sm:$0xff]
      %v848 = vld [vmem:[%s3 + $0x268] sm:$0xff]
      %v849 = vld [vmem:[%s3 + $0x270] sm:$0xff]
      %v850 = vld [vmem:[%s3 + $0x278] sm:$0xff]
      %v851 = vld [vmem:[%s3 + $0x280] sm:$0xff]
      %v852 = vld [vmem:[%s3 + $0x288] sm:$0xff]
      %v853 = vld [vmem:[%s3 + $0x290] sm:$0xff]
      %v854 = vld [vmem:[%s3 + $0x298] sm:$0xff]
      %v855 = vld [vmem:[%s3 + $0x2a0] sm:$0xff]
      %v856 = vld [vmem:[%s3 + $0x2a8] sm:$0xff]
      %v857 = vld [vmem:[%s3 + $0x2b0] sm:$0xff]
      %v858 = vld [vmem:[%s3 + $0x2b8] sm:$0xff]
      %v859 = vld [vmem:[%s3 + $0x2c0] sm:$0xff]
      %v860 = vld [vmem:[%s3 + $0x2c8] sm:$0xff]
      %v861 = vld [vmem:[%s3 + $0x2d0] sm:$0xff]
      %v862 = vld [vmem:[%s3 + $0x2d8] sm:$0xff]
      %v863 = vld [vmem:[%s3 + $0x2e0] sm:$0xff]
      %v864 = vld [vmem:[%s3 + $0x2e8] sm:$0xff]
      %v865 = vld [vmem:[%s3 + $0x2f0] sm:$0xff]
      %v866 = vld [vmem:[%s3 + $0x2f8] sm:$0xff]
      %v867 = vld [vmem:[%s3 + $0x300] sm:$0xff]
      %v868 = vld [vmem:[%s3 + $0x308] sm:$0xff]
      %v869 = vld [vmem:[%s3 + $0x310] sm:$0xff]
      %v870 = vld [vmem:[%s3 + $0x318] sm:$0xff]
      %v871 = vld [vmem:[%s3 + $0x320] sm:$0xff]
      %v872 = vld [vmem:[%s3 + $0x328] sm:$0xff]
      %v873 = vld [vmem:[%s3 + $0x330] sm:$0xff]
      %v874 = vld [vmem:[%s3 + $0x338] sm:$0xff]
      %v875 = vld [vmem:[%s3 + $0x340] sm:$0xff]
      %v876 = vld [vmem:[%s3 + $0x348] sm:$0xff]
      %v877 = vld [vmem:[%s3 + $0x350] sm:$0xff]
      %v878 = vld [vmem:[%s3 + $0x358] sm:$0xff]
      %v879 = vld [vmem:[%s3 + $0x360] sm:$0xff]
      %v880 = vld [vmem:[%s3 + $0x368] sm:$0xff]
      %v881 = vld [vmem:[%s3 + $0x370] sm:$0xff]
      %v882 = vld [vmem:[%s3 + $0x378] sm:$0xff]
      %v883 = vld [vmem:[%s3 + $0x380] sm:$0xff]
      %v884 = vld [vmem:[%s3 + $0x388] sm:$0xff]
      %v885 = vld [vmem:[%s3 + $0x390] sm:$0xff]
      %v886 = vld [vmem:[%s3 + $0x398] sm:$0xff]
      %v887 = vld [vmem:[%s3 + $0x3a0] sm:$0xff]
      %v888 = vld [vmem:[%s3 + $0x3a8] sm:$0xff]
      %v889 = vld [vmem:[%s3 + $0x3b0] sm:$0xff]
      %v890 = vld [vmem:[%s3 + $0x3b8] sm:$0xff]
      %v891 = vld [vmem:[%s3 + $0x3c0] sm:$0xff]
      %v892 = vld [vmem:[%s3 + $0x3c8] sm:$0xff]
      %v893 = vld [vmem:[%s3 + $0x3d0] sm:$0xff]
      %v894 = vld [vmem:[%s3 + $0x3d8] sm:$0xff]
      %v895 = vld [vmem:[%s3 + $0x3e0] sm:$0xff]
      %v896 = vld [vmem:[%s3 + $0x3e8] sm:$0xff]
      %v897 = vld [vmem:[%s3 + $0x3f0] sm:$0xff]
      %v898 = vld [vmem:[%s3 + $0x3f8] sm:$0xff]
      %v899 = vld [vmem:[%s3 + $0x400] sm:$0xff]
      %v900 = vld [vmem:[%s3 + $0x408] sm:$0xff]
      %v901 = vld [vmem:[%s3 + $0x410] sm:$0xff]
      %v902 = vld [vmem:[%s3 + $0x418] sm:$0xff]
      %v903 = vld [vmem:[%s3 + $0x420] sm:$0xff]
      %v904 = vld [vmem:[%s3 + $0x428] sm:$0xff]
      %v905 = vld [vmem:[%s3 + $0x430] sm:$0xff]
      %v906 = vld [vmem:[%s3 + $0x438] sm:$0xff]
      %v907 = vld [vmem:[%s3 + $0x440] sm:$0xff]
      %v908 = vld [vmem:[%s3 + $0x448] sm:$0xff]
      %v909 = vld [vmem:[%s3 + $0x450] sm:$0xff]
      %v910 = vld [vmem:[%s3 + $0x458] sm:$0xff]
      %v911 = vld [vmem:[%s3 + $0x460] sm:$0xff]
      %v912 = vld [vmem:[%s3 + $0x468] sm:$0xff]
      %v913 = vld [vmem:[%s3 + $0x470] sm:$0xff]
      %v914 = vld [vmem:[%s3 + $0x478] sm:$0xff]
      %915 = vmatprep.subr.mxu0 0.0
      %916 = vmatpush1.msra.mxu0 %v771
      %917 = vmatprep.subr.mxu0 0.0
      %918 = vmatpush1.msra.mxu0 %v772
      %919 = vmatprep.subr.mxu0 0.0
      %920 = vmatpush1.msra.mxu0 %v773
      %921 = vmatprep.subr.mxu0 0.0
      %922 = vmatpush1.msra.mxu0 %v774
      %923 = vmatprep.subr.mxu0 0.0
      %924 = vmatpush1.msra.mxu0 %v775
      %925 = vmatprep.subr.mxu0 0.0
      %926 = vmatpush1.msra.mxu0 %v776
      %927 = vmatprep.subr.mxu0 0.0
      %928 = vmatpush1.msra.mxu0 %v777
      %929 = vmatprep.subr.mxu0 0.0
      %930 = vmatpush1.msra.mxu0 %v778
      %931 = vmatprep.subr.mxu0 0.0
      %932 = vmatpush1.msra.mxu0 %v779
      %933 = vmatprep.subr.mxu0 0.0
      %934 = vmatpush1.msra.mxu0 %v780
      %935 = vmatprep.subr.mxu0 0.0
      %936 = vmatpush1.msra.mxu0 %v781
      %937 = vmatprep.subr.mxu0 0.0
      %938 = vmatpush1.msra.mxu0 %v782
      %939 = vmatprep.subr.mxu0 0.0
      %940 = vmatpush1.msra.mxu0 %v783
      %941 = vmatprep.subr.mxu0 0.0
      %942 = vmatpush1.msra.mxu0 %v784
      %943 = vmatprep.subr.mxu0 0.0
      %944 = vmatpush1.msra.mxu0 %v785
      %945 = vmatprep.subr.mxu0 0.0
      %946 = vmatpush1.msra.mxu0 %v786
      %947 = vmatprep.subr.mxu0 0.0
      %948 = vmatpush1.msra.mxu0 %v787
      %949 = vmatprep.subr.mxu0 0.0
      %950 = vmatpush1.msra.mxu0 %v788
      %951 = vmatprep.subr.mxu0 0.0
      %952 = vmatpush1.msra.mxu0 %v789
      %953 = vmatprep.subr.mxu0 0.0
      %954 = vmatpush1.msra.mxu0 %v790
      %955 = vmatprep.subr.mxu0 0.0
      %956 = vmatpush1.msra.mxu0 %v791
      %957 = vmatprep.subr.mxu0 0.0
      %958 = vmatpush1.msra.mxu0 %v792
      %959 = vmatprep.subr.mxu0 0.0
      %960 = vmatpush1.msra.mxu0 %v793
      %961 = vmatprep.subr.mxu0 0.0
      %962 = vmatpush1.msra.mxu0 %v794
      %963 = vmatprep.subr.mxu0 0.0
      %964 = vmatpush1.msra.mxu0 %v795
      %965 = vmatprep.subr.mxu0 0.0
      %966 = vmatpush1.msra.mxu0 %v796
      %967 = vmatprep.subr.mxu0 0.0
      %968 = vmatpush1.msra.mxu0 %v797
      %969 = vmatprep.subr.mxu0 0.0
      %970 = vmatpush1.msra.mxu0 %v798
      %971 = vmatprep.subr.mxu0 0.0
      %972 = vmatpush1.msra.mxu0 %v799
      %973 = vmatprep.subr.mxu0 0.0
      %974 = vmatpush1.msra.mxu0 %v800
      %975 = vmatprep.subr.mxu0 0.0
      %976 = vmatpush1.msra.mxu0 %v801
      %977 = vmatprep.subr.mxu0 0.0
      %978 = vmatpush1.msra.mxu0 %v802
      %979 = vmatprep.mubr.f32.mxu0 %v700
      %980 = vmatmul.mubr.f32.gmra.mrb[0].mxu0 %v699
      %v981 = vpop.f32.mrb[0].mxu0
      %v982 = vadd.f32 0.0, %v981
      %v983 = vpop.f32.mrb[0].mxu0
      %984 = vmatprep.mubr.f32.mxu0 %v709
      %985 = vmatmul.mubr.f32.gmra.mrb[0].mxu0 %v708
      %v986 = vpop.f32.mrb[0].mxu0
      %v987 = vadd.f32 0.0, %v986
      %v988 = vpop.f32.mrb[0].mxu0
      %989 = vmatprep.mubr.f32.mxu0 %v718
      %990 = vmatmul.mubr.f32.gmra.mrb[0].mxu0 %v717
      %v991 = vpop.f32.mrb[0].mxu0
      %v992 = vadd.f32 0.0, %v991
      %v993 = vpop.f32.mrb[0].mxu0
      %994 = vmatprep.mubr.f32.mxu0 %v727
      %995 = vmatmul.mubr.f32.gmra.mrb[0].mxu0 %v726
      %v996 = vpop.f32.mrb[0].mxu0
      %v997 = vadd.f32 0.0, %v996
      %v998 = vpop.f32.mrb[0].mxu0
      %999 = vmatprep.mubr.f32.mxu0 %v736
      %1000 = vmatmul.mubr.f32.gmra.mrb[0].mxu0 %v735
      %v1001 = vpop.f32.mrb[0].mxu0
      %v1002 = vadd.f32 0.0, %v1001
      %v1003 = vpop.f32.mrb[0].mxu0
      %1004 = vmatprep.mubr.f32.mxu0 %v745
      %1005 = vmatmul.mubr.f32.gmra.mrb[0].mxu0 %v744
      %v1006 = vpop.f32.mrb[0].mxu0
      %v1007 = vadd.f32 0.0, %v1006
      %v1008 = vpop.f32.mrb[0].mxu0
      %1009 = vmatprep.mubr.f32.mxu0 %v754
      %1010 = vmatmul.mubr.f32.gmra.mrb[0].mxu0 %v753
      %v1011 = vpop.f32.mrb[0].mxu0
      %v1012 = vadd.f32 0.0, %v1011
      %v1013 = vpop.f32.mrb[0].mxu0
      %1014 = vmatprep.mubr.f32.mxu0 %v763
      %1015 = vmatmul.mubr.f32.gmra.mrb[0].mxu0 %v762
      %v1016 = vpop.f32.mrb[0].mxu0
      %v1017 = vadd.f32 0.0, %v1016
      %v1018 = vpop.f32.mrb[0].mxu0
      %1019 = vdwg.mxu0
      %1020 = vmatprep.subr.mxu0 0.0
      %1021 = vmatpush1.msra.mxu0 %v803
      %1022 = vmatprep.subr.mxu0 0.0
      %1023 = vmatpush1.msra.mxu0 %v804
      %1024 = vmatprep.subr.mxu0 0.0
      %1025 = vmatpush1.msra.mxu0 %v805
      %1026 = vmatprep.subr.mxu0 0.0
      %1027 = vmatpush1.msra.mxu0 %v806
      %1028 = vmatprep.subr.mxu0 0.0
      %1029 = vmatpush1.msra.mxu0 %v807
      %1030 = vmatprep.subr.mxu0 0.0
      %1031 = vmatpush1.msra.mxu0 %v808
      %1032 = vmatprep.subr.mxu0 0.0
      %1033 = vmatpush1.msra.mxu0 %v809
      %1034 = vmatprep.subr.mxu0 0.0
      %1035 = vmatpush1.msra.mxu0 %v810
      %1036 = vmatprep.subr.mxu0 0.0
      %1037 = vmatpush1.msra.mxu0 %v811
      %1038 = vmatprep.subr.mxu0 0.0
      %1039 = vmatpush1.msra.mxu0 %v812
      %1040 = vmatprep.subr.mxu0 0.0
      %1041 = vmatpush1.msra.mxu0 %v813
      %1042 = vmatprep.subr.mxu0 0.0
      %1043 = vmatpush1.msra.mxu0 %v814
      %1044 = vmatprep.subr.mxu0 0.0
      %1045 = vmatpush1.msra.mxu0 %v815
      %1046 = vmatprep.subr.mxu0 0.0
      %1047 = vmatpush1.msra.mxu0 %v816
      %1048 = vmatprep.subr.mxu0 0.0
      %1049 = vmatpush1.msra.mxu0 %v817
      %1050 = vmatprep.subr.mxu0 0.0
      %1051 = vmatpush1.msra.mxu0 %v818
      %1052 = vmatprep.subr.mxu0 0.0
      %1053 = vmatpush1.msra.mxu0 %v819
      %1054 = vmatprep.subr.mxu0 0.0
      %1055 = vmatpush1.msra.mxu0 %v820
      %1056 = vmatprep.subr.mxu0 0.0
      %1057 = vmatpush1.msra.mxu0 %v821
      %1058 = vmatprep.subr.mxu0 0.0
      %1059 = vmatpush1.msra.mxu0 %v822
      %1060 = vmatprep.subr.mxu0 0.0
      %1061 = vmatpush1.msra.mxu0 %v823
      %1062 = vmatprep.subr.mxu0 0.0
      %1063 = vmatpush1.msra.mxu0 %v824
      %1064 = vmatprep.subr.mxu0 0.0
      %1065 = vmatpush1.msra.mxu0 %v825
      %1066 = vmatprep.subr.mxu0 0.0
      %1067 = vmatpush1.msra.mxu0 %v826
      %1068 = vmatprep.subr.mxu0 0.0
      %1069 = vmatpush1.msra.mxu0 %v827
      %1070 = vmatprep.subr.mxu0 0.0
      %1071 = vmatpush1.msra.mxu0 %v828
      %1072 = vmatprep.subr.mxu0 0.0
      %1073 = vmatpush1.msra.mxu0 %v829
      %1074 = vmatprep.subr.mxu0 0.0
      %1075 = vmatpush1.msra.mxu0 %v830
      %1076 = vmatprep.subr.mxu0 0.0
      %1077 = vmatpush1.msra.mxu0 %v831
      %1078 = vmatprep.subr.mxu0 0.0
      %1079 = vmatpush1.msra.mxu0 %v832
      %1080 = vmatprep.subr.mxu0 0.0
      %1081 = vmatpush1.msra.mxu0 %v833
      %1082 = vmatprep.subr.mxu0 0.0
      %1083 = vmatpush1.msra.mxu0 %v834
      %1084 = vmatprep.mubr.f32.mxu0 %v702
      %1085 = vmatmul.mubr.f32.gmra.mrb[0].mxu0 %v701
      %v1086 = vpop.f32.mrb[0].mxu0
      %v1087 = vadd.f32 %v982, %v1086
      %v1088 = vpop.f32.mrb[0].mxu0
      %1089 = vmatprep.mubr.f32.mxu0 %v711
      %1090 = vmatmul.mubr.f32.gmra.mrb[0].mxu0 %v710
      %v1091 = vpop.f32.mrb[0].mxu0
      %v1092 = vadd.f32 %v987, %v1091
      %v1093 = vpop.f32.mrb[0].mxu0
      %1094 = vmatprep.mubr.f32.mxu0 %v720
      %1095 = vmatmul.mubr.f32.gmra.mrb[0].mxu0 %v719
      %v1096 = vpop.f32.mrb[0].mxu0
      %v1097 = vadd.f32 %v992, %v1096
      %v1098 = vpop.f32.mrb[0].mxu0
      %1099 = vmatprep.mubr.f32.mxu0 %v729
      %1100 = vmatmul.mubr.f32.gmra.mrb[0].mxu0 %v728
      %v1101 = vpop.f32.mrb[0].mxu0
      %v1102 = vadd.f32 %v997, %v1101
      %v1103 = vpop.f32.mrb[0].mxu0
      %1104 = vmatprep.mubr.f32.mxu0 %v738
      %1105 = vmatmul.mubr.f32.gmra.mrb[0].mxu0 %v737
      %v1106 = vpop.f32.mrb[0].mxu0
      %v1107 = vadd.f32 %v1002, %v1106
      %v1108 = vpop.f32.mrb[0].mxu0
      %1109 = vmatprep.mubr.f32.mxu0 %v747
      %1110 = vmatmul.mubr.f32.gmra.mrb[0].mxu0 %v746
      %v1111 = vpop.f32.mrb[0].mxu0
      %v1112 = vadd.f32 %v1007, %v1111
      %v1113 = vpop.f32.mrb[0].mxu0
      %1114 = vmatprep.mubr.f32.mxu0 %v756
      %1115 = vmatmul.mubr.f32.gmra.mrb[0].mxu0 %v755
      %v1116 = vpop.f32.mrb[0].mxu0
      %v1117 = vadd.f32 %v1012, %v1116
      %v1118 = vpop.f32.mrb[0].mxu0
      %1119 = vmatprep.mubr.f32.mxu0 %v765
      %1120 = vmatmul.mubr.f32.gmra.mrb[0].mxu0 %v764
      %v1121 = vpop.f32.mrb[0].mxu0
      %v1122 = vadd.f32 %v1017, %v1121
      %v1123 = vpop.f32.mrb[0].mxu0
      %1124 = vdwg.mxu0
      %1125 = vmatprep.subr.mxu0 0.0
      %1126 = vmatpush1.msra.mxu0 %v835
      %1127 = vmatprep.subr.mxu0 0.0
      %1128 = vmatpush1.msra.mxu0 %v836
      %1129 = vmatprep.subr.mxu0 0.0
      %1130 = vmatpush1.msra.mxu0 %v837
      %1131 = vmatprep.subr.mxu0 0.0
      %1132 = vmatpush1.msra.mxu0 %v838
      %1133 = vmatprep.subr.mxu0 0.0
      %1134 = vmatpush1.msra.mxu0 %v839
      %1135 = vmatprep.subr.mxu0 0.0
      %1136 = vmatpush1.msra.mxu0 %v840
      %1137 = vmatprep.subr.mxu0 0.0
      %1138 = vmatpush1.msra.mxu0 %v841
      %1139 = vmatprep.subr.mxu0 0.0
      %1140 = vmatpush1.msra.mxu0 %v842
      %1141 = vmatprep.subr.mxu0 0.0
      %1142 = vmatpush1.msra.mxu0 %v843
      %1143 = vmatprep.subr.mxu0 0.0
      %1144 = vmatpush1.msra.mxu0 %v844
      %1145 = vmatprep.subr.mxu0 0.0
      %1146 = vmatpush1.msra.mxu0 %v845
      %1147 = vmatprep.subr.mxu0 0.0
      %1148 = vmatpush1.msra.mxu0 %v846
      %1149 = vmatprep.subr.mxu0 0.0
      %1150 = vmatpush1.msra.mxu0 %v847
      %1151 = vmatprep.subr.mxu0 0.0
      %1152 = vmatpush1.msra.mxu0 %v848
      %1153 = vmatprep.subr.mxu0 0.0
      %1154 = vmatpush1.msra.mxu0 %v849
      %1155 = vmatprep.subr.mxu0 0.0
      %1156 = vmatpush1.msra.mxu0 %v850
      %1157 = vmatprep.subr.mxu0 0.0
      %1158 = vmatpush1.msra.mxu0 %v851
      %1159 = vmatprep.subr.mxu0 0.0
      %1160 = vmatpush1.msra.mxu0 %v852
      %1161 = vmatprep.subr.mxu0 0.0
      %1162 = vmatpush1.msra.mxu0 %v853
      %1163 = vmatprep.subr.mxu0 0.0
      %1164 = vmatpush1.msra.mxu0 %v854
      %1165 = vmatprep.subr.mxu0 0.0
      %1166 = vmatpush1.msra.mxu0 %v855
      %1167 = vmatprep.subr.mxu0 0.0
      %1168 = vmatpush1.msra.mxu0 %v856
      %1169 = vmatprep.subr.mxu0 0.0
      %1170 = vmatpush1.msra.mxu0 %v857
      %1171 = vmatprep.subr.mxu0 0.0
      %1172 = vmatpush1.msra.mxu0 %v858
      %1173 = vmatprep.subr.mxu0 0.0
      %1174 = vmatpush1.msra.mxu0 %v859
      %1175 = vmatprep.subr.mxu0 0.0
      %1176 = vmatpush1.msra.mxu0 %v860
      %1177 = vmatprep.subr.mxu0 0.0
      %1178 = vmatpush1.msra.mxu0 %v861
      %1179 = vmatprep.subr.mxu0 0.0
      %1180 = vmatpush1.msra.mxu0 %v862
      %1181 = vmatprep.subr.mxu0 0.0
      %1182 = vmatpush1.msra.mxu0 %v863
      %1183 = vmatprep.subr.mxu0 0.0
      %1184 = vmatpush1.msra.mxu0 %v864
      %1185 = vmatprep.subr.mxu0 0.0
      %1186 = vmatpush1.msra.mxu0 %v865
      %1187 = vmatprep.subr.mxu0 0.0
      %1188 = vmatpush1.msra.mxu0 %v866
      %1189 = vmatprep.mubr.f32.mxu0 %v704
      %1190 = vmatmul.mubr.f32.gmra.mrb[0].mxu0 %v703
      %v1191 = vpop.f32.mrb[0].mxu0
      %v1192 = vadd.f32 %v1087, %v1191
      %v1193 = vpop.f32.mrb[0].mxu0
      %1194 = vmatprep.mubr.f32.mxu0 %v713
      %1195 = vmatmul.mubr.f32.gmra.mrb[0].mxu0 %v712
      %v1196 = vpop.f32.mrb[0].mxu0
      %v1197 = vadd.f32 %v1092, %v1196
      %v1198 = vpop.f32.mrb[0].mxu0
      %1199 = vmatprep.mubr.f32.mxu0 %v722
      %1200 = vmatmul.mubr.f32.gmra.mrb[0].mxu0 %v721
      %v1201 = vpop.f32.mrb[0].mxu0
      %v1202 = vadd.f32 %v1097, %v1201
      %v1203 = vpop.f32.mrb[0].mxu0
      %1204 = vmatprep.mubr.f32.mxu0 %v731
      %1205 = vmatmul.mubr.f32.gmra.mrb[0].mxu0 %v730
      %v1206 = vpop.f32.mrb[0].mxu0
      %v1207 = vadd.f32 %v1102, %v1206
      %v1208 = vpop.f32.mrb[0].mxu0
      %1209 = vmatprep.mubr.f32.mxu0 %v740
      %1210 = vmatmul.mubr.f32.gmra.mrb[0].mxu0 %v739
      %v1211 = vpop.f32.mrb[0].mxu0
      %v1212 = vadd.f32 %v1107, %v1211
      %v1213 = vpop.f32.mrb[0].mxu0
      %1214 = vmatprep.mubr.f32.mxu0 %v749
      %1215 = vmatmul.mubr.f32.gmra.mrb[0].mxu0 %v748
      %v1216 = vpop.f32.mrb[0].mxu0
      %v1217 = vadd.f32 %v1112, %v1216
      %v1218 = vpop.f32.mrb[0].mxu0
      %1219 = vmatprep.mubr.f32.mxu0 %v758
      %1220 = vmatmul.mubr.f32.gmra.mrb[0].mxu0 %v757
      %v1221 = vpop.f32.mrb[0].mxu0
      %v1222 = vadd.f32 %v1117, %v1221
      %v1223 = vpop.f32.mrb[0].mxu0
      %1224 = vmatprep.mubr.f32.mxu0 %v767
      %1225 = vmatmul.mubr.f32.gmra.mrb[0].mxu0 %v766
      %v1226 = vpop.f32.mrb[0].mxu0
      %v1227 = vadd.f32 %v1122, %v1226
      %v1228 = vpop.f32.mrb[0].mxu0
      %1229 = vdwg.mxu0
      %1230 = vmatprep.subr.mxu0 0.0
      %1231 = vmatpush1.msra.mxu0 %v867
      %1232 = vmatprep.subr.mxu0 0.0
      %1233 = vmatpush1.msra.mxu0 %v868
      %1234 = vmatprep.subr.mxu0 0.0
      %1235 = vmatpush1.msra.mxu0 %v869
      %1236 = vmatprep.subr.mxu0 0.0
      %1237 = vmatpush1.msra.mxu0 %v870
      %1238 = vmatprep.subr.mxu0 0.0
      %1239 = vmatpush1.msra.mxu0 %v871
      %1240 = vmatprep.subr.mxu0 0.0
      %1241 = vmatpush1.msra.mxu0 %v872
      %1242 = vmatprep.subr.mxu0 0.0
      %1243 = vmatpush1.msra.mxu0 %v873
      %1244 = vmatprep.subr.mxu0 0.0
      %1245 = vmatpush1.msra.mxu0 %v874
      %1246 = vmatprep.subr.mxu0 0.0
      %1247 = vmatpush1.msra.mxu0 %v875
      %1248 = vmatprep.subr.mxu0 0.0
      %1249 = vmatpush1.msra.mxu0 %v876
      %1250 = vmatprep.subr.mxu0 0.0
      %1251 = vmatpush1.msra.mxu0 %v877
      %1252 = vmatprep.subr.mxu0 0.0
      %1253 = vmatpush1.msra.mxu0 %v878
      %1254 = vmatprep.subr.mxu0 0.0
      %1255 = vmatpush1.msra.mxu0 %v879
      %1256 = vmatprep.subr.mxu0 0.0
      %1257 = vmatpush1.msra.mxu0 %v880
      %1258 = vmatprep.subr.mxu0 0.0
      %1259 = vmatpush1.msra.mxu0 %v881
      %1260 = vmatprep.subr.mxu0 0.0
      %1261 = vmatpush1.msra.mxu0 %v882
      %1262 = vmatprep.subr.mxu0 0.0
      %1263 = vmatpush1.msra.mxu0 %v883
      %1264 = vmatprep.subr.mxu0 0.0
      %1265 = vmatpush1.msra.mxu0 %v884
      %1266 = vmatprep.subr.mxu0 0.0
      %1267 = vmatpush1.msra.mxu0 %v885
      %1268 = vmatprep.subr.mxu0 0.0
      %1269 = vmatpush1.msra.mxu0 %v886
      %1270 = vmatprep.subr.mxu0 0.0
      %1271 = vmatpush1.msra.mxu0 %v887
      %1272 = vmatprep.subr.mxu0 0.0
      %1273 = vmatpush1.msra.mxu0 %v888
      %1274 = vmatprep.subr.mxu0 0.0
      %1275 = vmatpush1.msra.mxu0 %v889
      %1276 = vmatprep.subr.mxu0 0.0
      %1277 = vmatpush1.msra.mxu0 %v890
      %1278 = vmatprep.subr.mxu0 0.0
      %1279 = vmatpush1.msra.mxu0 %v891
      %1280 = vmatprep.subr.mxu0 0.0
      %1281 = vmatpush1.msra.mxu0 %v892
      %1282 = vmatprep.subr.mxu0 0.0
      %1283 = vmatpush1.msra.mxu0 %v893
      %1284 = vmatprep.subr.mxu0 0.0
      %1285 = vmatpush1.msra.mxu0 %v894
      %1286 = vmatprep.subr.mxu0 0.0
      %1287 = vmatpush1.msra.mxu0 %v895
      %1288 = vmatprep.subr.mxu0 0.0
      %1289 = vmatpush1.msra.mxu0 %v896
      %1290 = vmatprep.subr.mxu0 0.0
      %1291 = vmatpush1.msra.mxu0 %v897
      %1292 = vmatprep.subr.mxu0 0.0
      %1293 = vmatpush1.msra.mxu0 %v898
      %1294 = vmatprep.mubr.f32.mxu0 %v706
      %1295 = vmatmul.mubr.f32.gmra.mrb[0].mxu0 %v705
      %v1296 = vpop.f32.mrb[0].mxu0
      %v1297 = vadd.f32 %v1192, %v1296
      %v1298 = vpop.f32.mrb[0].mxu0
      %1299 = vmatprep.mubr.f32.mxu0 %v715
      %1300 = vmatmul.mubr.f32.gmra.mrb[0].mxu0 %v714
      %v1301 = vpop.f32.mrb[0].mxu0
      %v1302 = vadd.f32 %v1197, %v1301
      %v1303 = vpop.f32.mrb[0].mxu0
      %1304 = vmatprep.mubr.f32.mxu0 %v724
      %1305 = vmatmul.mubr.f32.gmra.mrb[0].mxu0 %v723
      %v1306 = vpop.f32.mrb[0].mxu0
      %v1307 = vadd.f32 %v1202, %v1306
      %v1308 = vpop.f32.mrb[0].mxu0
      %1309 = vmatprep.mubr.f32.mxu0 %v733
      %1310 = vmatmul.mubr.f32.gmra.mrb[0].mxu0 %v732
      %v1311 = vpop.f32.mrb[0].mxu0
      %v1312 = vadd.f32 %v1207, %v1311
      %v1313 = vpop.f32.mrb[0].mxu0
      %1314 = vmatprep.mubr.f32.mxu0 %v742
      %1315 = vmatmul.mubr.f32.gmra.mrb[0].mxu0 %v741
      %v1316 = vpop.f32.mrb[0].mxu0
      %v1317 = vadd.f32 %v1212, %v1316
      %v1318 = vpop.f32.mrb[0].mxu0
      %1319 = vmatprep.mubr.f32.mxu0 %v751
      %1320 = vmatmul.mubr.f32.gmra.mrb[0].mxu0 %v750
      %v1321 = vpop.f32.mrb[0].mxu0
      %v1322 = vadd.f32 %v1217, %v1321
      %v1323 = vpop.f32.mrb[0].mxu0
      %1324 = vmatprep.mubr.f32.mxu0 %v760
      %1325 = vmatmul.mubr.f32.gmra.mrb[0].mxu0 %v759
      %v1326 = vpop.f32.mrb[0].mxu0
      %v1327 = vadd.f32 %v1222, %v1326
      %v1328 = vpop.f32.mrb[0].mxu0
      %1329 = vmatprep.mubr.f32.mxu0 %v769
      %1330 = vmatmul.mubr.f32.gmra.mrb[0].mxu0 %v768
      %v1331 = vpop.f32.mrb[0].mxu0
      %v1332 = vadd.f32 %v1227, %v1331
      %v1333 = vpop.f32.mrb[0].mxu0
      %1334 = vdwg.mxu0
      %1335 = vmatprep.subr.mxu0 0.0
      %1336 = vmatpush1.msra.mxu0 %v899
      %1337 = vmatprep.subr.mxu0 0.0
      %1338 = vmatpush1.msra.mxu0 %v900
      %1339 = vmatprep.subr.mxu0 0.0
      %1340 = vmatpush1.msra.mxu0 %v901
      %1341 = vmatprep.subr.mxu0 0.0
      %1342 = vmatpush1.msra.mxu0 %v902
      %1343 = vmatprep.subr.mxu0 0.0
      %1344 = vmatpush1.msra.mxu0 %v903
      %1345 = vmatprep.subr.mxu0 0.0
      %1346 = vmatpush1.msra.mxu0 %v904
      %1347 = vmatprep.subr.mxu0 0.0
      %1348 = vmatpush1.msra.mxu0 %v905
      %1349 = vmatprep.subr.mxu0 0.0
      %1350 = vmatpush1.msra.mxu0 %v906
      %1351 = vmatprep.subr.mxu0 0.0
      %1352 = vmatpush1.msra.mxu0 %v907
      %1353 = vmatprep.subr.mxu0 0.0
      %1354 = vmatpush1.msra.mxu0 %v908
      %1355 = vmatprep.subr.mxu0 0.0
      %1356 = vmatpush1.msra.mxu0 %v909
      %1357 = vmatprep.subr.mxu0 0.0
      %1358 = vmatpush1.msra.mxu0 %v910
      %1359 = vmatprep.subr.mxu0 0.0
      %1360 = vmatpush1.msra.mxu0 %v911
      %1361 = vmatprep.subr.mxu0 0.0
      %1362 = vmatpush1.msra.mxu0 %v912
      %1363 = vmatprep.subr.mxu0 0.0
      %1364 = vmatpush1.msra.mxu0 %v913
      %1365 = vmatprep.subr.mxu0 0.0
      %1366 = vmatpush1.msra.mxu0 %v914
      %1367 = vmatprep.subr.mxu0 0.0
      %1368 = vmatpush1.msra.mxu0 0.0
      %1369 = vmatprep.subr.mxu0 0.0
      %1370 = vmatpush1.msra.mxu0 0.0
      %1371 = vmatprep.subr.mxu0 0.0
      %1372 = vmatpush1.msra.mxu0 0.0
      %1373 = vmatprep.subr.mxu0 0.0
      %1374 = vmatpush1.msra.mxu0 0.0
      %1375 = vmatprep.subr.mxu0 0.0
      %1376 = vmatpush1.msra.mxu0 0.0
      %1377 = vmatprep.subr.mxu0 0.0
      %1378 = vmatpush1.msra.mxu0 0.0
      %1379 = vmatprep.subr.mxu0 0.0
      %1380 = vmatpush1.msra.mxu0 0.0
      %1381 = vmatprep.subr.mxu0 0.0
      %1382 = vmatpush1.msra.mxu0 0.0
      %1383 = vmatprep.subr.mxu0 0.0
      %1384 = vmatpush1.msra.mxu0 0.0
      %1385 = vmatprep.subr.mxu0 0.0
      %1386 = vmatpush1.msra.mxu0 0.0
      %1387 = vmatprep.subr.mxu0 0.0
      %1388 = vmatpush1.msra.mxu0 0.0
      %1389 = vmatprep.subr.mxu0 0.0
      %1390 = vmatpush1.msra.mxu0 0.0
      %1391 = vmatprep.subr.mxu0 0.0
      %1392 = vmatpush1.msra.mxu0 0.0
      %1393 = vmatprep.subr.mxu0 0.0
      %1394 = vmatpush1.msra.mxu0 0.0
      %1395 = vmatprep.subr.mxu0 0.0
      %1396 = vmatpush1.msra.mxu0 0.0
      %1397 = vmatprep.subr.mxu0 0.0
      %1398 = vmatpush1.msra.mxu0 0.0
      %1399 = vmatprep.mubr.f32.mxu0 0.0
      %1400 = vmatmul.mubr.f32.gmra.mrb[0].mxu0 %v707
      %v1401 = vpop.f32.mrb[0].mxu0
      %v1402 = vadd.f32 %v1297, %v1401
      %v1403 = vpop.f32.mrb[0].mxu0
      %1404 = vmatprep.mubr.f32.mxu0 0.0
      %1405 = vmatmul.mubr.f32.gmra.mrb[0].mxu0 %v716
      %v1406 = vpop.f32.mrb[0].mxu0
      %v1407 = vadd.f32 %v1302, %v1406
      %v1408 = vpop.f32.mrb[0].mxu0
      %1409 = vmatprep.mubr.f32.mxu0 0.0
      %1410 = vmatmul.mubr.f32.gmra.mrb[0].mxu0 %v725
      %v1411 = vpop.f32.mrb[0].mxu0
      %v1412 = vadd.f32 %v1307, %v1411
      %v1413 = vpop.f32.mrb[0].mxu0
      %1414 = vmatprep.mubr.f32.mxu0 0.0
      %1415 = vmatmul.mubr.f32.gmra.mrb[0].mxu0 %v734
      %v1416 = vpop.f32.mrb[0].mxu0
      %v1417 = vadd.f32 %v1312, %v1416
      %v1418 = vpop.f32.mrb[0].mxu0
      %1419 = vmatprep.mubr.f32.mxu0 0.0
      %1420 = vmatmul.mubr.f32.gmra.mrb[0].mxu0 %v743
      %v1421 = vpop.f32.mrb[0].mxu0
      %v1422 = vadd.f32 %v1317, %v1421
      %v1423 = vpop.f32.mrb[0].mxu0
      %1424 = vmatprep.mubr.f32.mxu0 0.0
      %1425 = vmatmul.mubr.f32.gmra.mrb[0].mxu0 %v752
      %v1426 = vpop.f32.mrb[0].mxu0
      %v1427 = vadd.f32 %v1322, %v1426
      %v1428 = vpop.f32.mrb[0].mxu0
      %1429 = vmatprep.mubr.f32.mxu0 0.0
      %1430 = vmatmul.mubr.f32.gmra.mrb[0].mxu0 %v761
      %v1431 = vpop.f32.mrb[0].mxu0
      %v1432 = vadd.f32 %v1327, %v1431
      %v1433 = vpop.f32.mrb[0].mxu0
      %1434 = vmatprep.mubr.f32.mxu0 0.0
      %1435 = vmatmul.mubr.f32.gmra.mrb[0].mxu0 %v770
      %v1436 = vpop.f32.mrb[0].mxu0
      %v1437 = vadd.f32 %v1332, %v1436
      %v1438 = vpop.f32.mrb[0].mxu0
      %1439 = vdwg.mxu0
      %1440 = vst [vmem:[%s231] sm:$0xff] %v1402
      %1441 = vst [vmem:[%s231 + $0x8] sm:$0xff] %v1407
      %1442 = vst [vmem:[%s231 + $0x10] sm:$0xff] %v1412
      %1443 = vst [vmem:[%s231 + $0x18] sm:$0xff] %v1417
      %1444 = vst [vmem:[%s231 + $0x20] sm:$0xff] %v1422
      %1445 = vst [vmem:[%s231 + $0x28] sm:$0xff] %v1427
      %1446 = vst [vmem:[%s231 + $0x30] sm:$0xff] %v1432
      %1447 = vst [vmem:[%s231 + $0x38] sm:$0xff] %v1437
      %v1448 = vadd.f32 %v1402, %v1407
      %v1449 = vadd.f32 %v1448, %v1412
      %v1450 = vadd.f32 %v1449, %v1417
      %v1451 = vadd.f32 %v1450, %v1422
      %v1452 = vadd.f32 %v1451, %v1427
      %v1453 = vadd.f32 %v1452, %v1432
      %v1454 = vadd.f32 %v1453, %v1437
      %v1455 = vrot.slane %v1454, 4
      %v1456 = vadd.f32 %v1454, %v1455
      %v1457 = vrot.slane %v1456, 2
      %v1458 = vadd.f32 %v1456, %v1457
      %v1459 = vrot.slane %v1458, 1
      %v1460 = vadd.f32 %v1458, %v1459
      %v1461 = vmul.f32 %v1402, %v1402
      %v1462 = vmul.f32 %v1407, %v1407
      %v1463 = vmul.f32 %v1412, %v1412
      %v1464 = vmul.f32 %v1417, %v1417
      %v1465 = vmul.f32 %v1422, %v1422
      %v1466 = vmul.f32 %v1427, %v1427
      %v1467 = vmul.f32 %v1432, %v1432
      %v1468 = vmul.f32 %v1437, %v1437
      %v1469 = vadd.f32 %v1461, %v1462
      %v1470 = vadd.f32 %v1469, %v1463
      %v1471 = vadd.f32 %v1470, %v1464
      %v1472 = vadd.f32 %v1471, %v1465
      %v1473 = vadd.f32 %v1472, %v1466
      %v1474 = vadd.f32 %v1473, %v1467
      %v1475 = vadd.f32 %v1474, %v1468
      %v1476 = vrot.slane %v1475, 4
      %v1477 = vadd.f32 %v1475, %v1476
      %v1478 = vrot.slane %v1477, 2
      %v1479 = vadd.f32 %v1477, %v1478
      %v1480 = vrot.slane %v1479, 1
      %v1481 = vadd.f32 %v1479, %v1480
      %vm1482 = vcmask 1040384
      %v1483 = vsel %vm1482, %v1460, %v1481
      %1484 = vst [vmem:[%s235] sm:$0x3] %v1483
      %p1485 = scmp.lt.s32.totalorder %s17, 1
      %s1486 = scalar_select %p1485, %s17, 1
      %s1487 = smul.addr %s1486, 8
      %s1488 = smul.addr %s1487, 8
      %s1489 = scalar_lea.vmem %s4, %s1488
      %p1490 = scmp.lt.s32.totalorder %s17, 1
      %s1491 = scalar_select %p1490, %s17, 1
      %s1492 = smul.addr %s1491, 2
      %s1493 = scalar_lea.vmem %s5, %s1492
      // Predicated region
      $region37: #{bottleneck_forward.6} parent=35 // pred_check
        %p1494 = pneg %p124
      $region38: #{bottleneck_forward.6} parent=35 // pred_check_branch
        %1496 = sbr.rel (%p1494) target = $region40
      $region39: #{bottleneck_forward.6} parent=35 // pred_region
        _
      $region40: #{bottleneck_forward.6} parent=35 // pred_fallthru
        _
      // Predicated region
      $region41: #{bottleneck_forward.6} parent=35 // pred_check
        %p1497 = pneg %p150
      $region42: #{bottleneck_forward.6} parent=35 // pred_check_branch
        %1499 = sbr.rel (%p1497) target = $region44
      $region43: #{bottleneck_forward.6} parent=35 // pred_region
        _
      $region44: #{bottleneck_forward.6} parent=35 // pred_fallthru
        _
    $region36: #{bottleneck_forward.6} parent=5 // pred_fallthru
      _
    %p1500 = scmp.le.s32.totalorder 2, %s12
    // Predicated region
    $region45: #{bottleneck_forward.6} parent=5 // pred_check
      %p1501 = pneg %p1500
    $region46: #{bottleneck_forward.6} parent=5 // pred_check_branch
      %1503 = sbr.rel (%p1501) target = $region48
    $region47: #{bottleneck_forward.6} parent=5 // pred_region
      %s1504 = ssub.s32 %s12, 2
      // Predicated region
      $region49: #{bottleneck_forward.6} parent=47 // pred_check
        %p1505 = pneg %p130
      $region50: #{bottleneck_forward.6} parent=47 // pred_check_branch
        %1507 = sbr.rel (%p1505) target = $region52
      $region51: #{bottleneck_forward.6} parent=47 // pred_region
        %p1508 = scmp.lt.s32.totalorder %s18, 1
        %s1509 = scalar_select %p1508, %s18, 1
        %s1510 = smul.addr %s1509, 8
        %s1511 = smul.addr %s1510, 8
        %s1512 = scalar_lea.vmem %s4, %s1511
      $region52: #{bottleneck_forward.6} parent=47 // pred_fallthru
        _
      // Predicated region
      $region53: #{bottleneck_forward.6} parent=47 // pred_check
        %p1513 = pneg %p156
      $region54: #{bottleneck_forward.6} parent=47 // pred_check_branch
        %1515 = sbr.rel (%p1513) target = $region56
      $region55: #{bottleneck_forward.6} parent=47 // pred_region
        %p1516 = scmp.lt.s32.totalorder %s18, 1
        %s1517 = scalar_select %p1516, %s18, 1
        %s1518 = smul.addr %s1517, 2
        %s1519 = scalar_lea.vmem %s5, %s1518
      $region56: #{bottleneck_forward.6} parent=47 // pred_fallthru
        _
    $region48: #{bottleneck_forward.6} parent=5 // pred_fallthru
      _
  $region6: #{bottleneck_forward.6} parent=0 // loop_footer
    %s16 = sadd.s32 1, %s12
  $region7: #{bottleneck_forward.6} parent=0 // loop_footer_branch
    %11 = sbr.rel target = $region3
  $region8: #{bottleneck_forward.6} parent=0 // loop_exit
    _

</llo_original>
